<compile_context>
chip_gen: v5e
topology: v5e:2x2
jax: 0.10.0
libtpu: 0.0.40
codegen_flags: <defaults>
</compile_context>

<pallas_src>
import functools

import jax
import jax.numpy as jnp
from jax.experimental import pallas as pl
from jax.experimental.pallas import tpu as pltpu

BN_EPS = 1e-5
LANE = 128
TM_MAX = 1024                       # row-tile cap for flattened passes
VMEM_LIMIT = 48 * 1024 * 1024       # <= 64 MiB physical on v7x, safe on v5e/v6e


def _round_up(x, m):
    return ((x + m - 1) // m) * m


def _flat_tiles(m):
    """Pick a row tile for a flattened (M, C) pass and the padded row count."""
    mp8 = _round_up(m, 8)
    if mp8 <= TM_MAX:
        return mp8, mp8
    return TM_MAX, _round_up(m, TM_MAX)


# ---------------------------------------------------------------------------
# Pallas kernels
# ---------------------------------------------------------------------------
def _conv_1x1_kernel(x_ref, w_ref, y_ref, st_ref):
    """1x1 conv tile: matmul + per-tile partial (sum, sum-of-squares)."""
    y = jnp.dot(x_ref[...], w_ref[...], preferred_element_type=jnp.float32)
    y_ref[...] = y.astype(y_ref.dtype)
    s1 = jnp.sum(y, axis=0, keepdims=True)
    s2 = jnp.sum(y * y, axis=0, keepdims=True)
    st_ref[...] = jnp.concatenate([s1, s2], axis=0).reshape(st_ref.shape)


def _conv_kxk_kernel(ph_ref, w_ref, y_ref, st_ref, *, k, stride, Ho, Wo):
    """Direct k*k conv for one image (sum of shifted MXU matmuls) + stats.

    ph_ref: [s*s, PH, PW, Cpin] bf16 phase-decomposed, spatially padded input
    w_ref:  [k*k, Cpin, Cpout]  bf16 per-tap weights
    y_ref:  [1, Ho, Wo, Cpout]  bf16 conv output (pre-BN)
    st_ref: [1, 2, Cpout]       f32 per-image (sum, sum_sq)
    """
    s = stride
    cpo = w_ref.shape[-1]
    acc = jnp.zeros((Ho * Wo, cpo), jnp.float32)
    for i in range(k):
        for j in range(k):
            a, di = i % s, i // s
            b, dj = j % s, j // s
            patch = ph_ref[a * s + b, di:di + Ho, dj:dj + Wo, :]
            # NOTE: when Wo % 8 != 0 this reshape relayouts; the operand is
            # already bf16 (half the bytes of the previous f32+cast version).
            lhs = patch.reshape(Ho * Wo, patch.shape[-1])
            acc = acc + jnp.dot(lhs, w_ref[i * k + j],
                                preferred_element_type=jnp.float32)
    y_ref[...] = acc.reshape(y_ref.shape).astype(y_ref.dtype)
    s1 = jnp.sum(acc, axis=0, keepdims=True)
    s2 = jnp.sum(acc * acc, axis=0, keepdims=True)
    st_ref[...] = jnp.concatenate([s1, s2], axis=0).reshape(st_ref.shape)


def _bn_mish_kernel(y_ref, scale_ref, shift_ref, *rest, m_real, tm, masked):
    """Elementwise BN (folded scale/shift) + Mish (+ optional fused skip-add)."""
    out_ref = rest[-1]
    skip_ref = rest[0] if len(rest) == 2 else None
    y = y_ref[...].astype(jnp.float32)
    y = y * scale_ref[...] + shift_ref[...]
    # Mish = y * tanh(softplus(y)); tanh(log(1+e^y)) = 1 - 2/((1+e^y)^2 + 1)
    t = jnp.exp(jnp.minimum(y, 20.0))           # clamp: result is exactly 1 - 0
    u = (1.0 + t) * (1.0 + t)
    act = y * (1.0 - 2.0 * pl.reciprocal(u + 1.0, approx=True))
    if skip_ref is not None:
        act = act + skip_ref[...].astype(jnp.float32)
    if masked:
        # keep rows beyond the real row count exactly zero (next layer's stats)
        row = pl.program_id(0) * tm + jax.lax.broadcasted_iota(
            jnp.int32, act.shape, 0)
        act = jnp.where(row < m_real, act, 0.0)
    out_ref[...] = act.astype(out_ref.dtype)


# ---------------------------------------------------------------------------
# Conv passes (single conv evaluation each) — return (y_bf16, stats[2, Cpout])
# ---------------------------------------------------------------------------
def _conv_1x1_pass(x_flat, w, Cpout):
    """x_flat: [M, Cpin] bf16 (padded rows/channels exactly zero)."""
    M, Cpin = x_flat.shape
    Cout, Cin = w.shape[0], w.shape[1]
    tm, mp = _flat_tiles(M)
    if mp > M:
        x_flat = jnp.pad(x_flat, ((0, mp - M), (0, 0)))
    wt = jnp.transpose(w.reshape(Cout, Cin), (1, 0))
    w_packed = jnp.zeros((Cpin, Cpout), jnp.float32)
    w_packed = w_packed.at[:Cin, :Cout].set(wt).astype(jnp.bfloat16)

    grid = (mp // tm,)
    y, stats = pl.pallas_call(
        _conv_1x1_kernel,
        out_shape=(jax.ShapeDtypeStruct((mp, Cpout), jnp.bfloat16),
                   jax.ShapeDtypeStruct((grid[0], 2, Cpout), jnp.float32)),
        grid=grid,
        in_specs=[pl.BlockSpec((tm, Cpin), lambda g: (g, 0)),
                  pl.BlockSpec((Cpin, Cpout), lambda g: (0, 0))],
        out_specs=(pl.BlockSpec((tm, Cpout), lambda g: (g, 0)),
                   pl.BlockSpec((1, 2, Cpout), lambda g: (g, 0, 0))),
        compiler_params=pltpu.CompilerParams(
            dimension_semantics=("parallel",),
            vmem_limit_bytes=VMEM_LIMIT),
    )(x_flat, w_packed)
    return y, jnp.sum(stats, axis=0)


def _conv_kxk_pass(x, w, Cpout, *, k, stride):
    """x: [N, H, W, Cpin] bf16 (padded channels exactly zero)."""
    N, H, W, Cpin = x.shape
    Cout, Cin, _, _ = w.shape
    s = stride
    pad = k // 2
    Ho = (H + 2 * pad - k) // s + 1
    Wo = (W + 2 * pad - k) // s + 1
    PH = Ho + (k - 1) // s
    PW = Wo + (k - 1) // s
    Hext = max(s * PH, H + 2 * pad)
    Wext = max(s * PW, W + 2 * pad)

    xp = jnp.pad(x, ((0, 0), (pad, Hext - H - pad), (pad, Wext - W - pad), (0, 0)))
    if s == 1:
        phases = xp                                   # no phase-stack copy
    else:
        planes = [xp[:, a:a + s * PH:s, b:b + s * PW:s, :]
                  for a in range(s) for b in range(s)]
        phases = jnp.stack(planes, axis=1).reshape(N * s * s, PH, PW, Cpin)

    wt = jnp.transpose(w, (2, 3, 1, 0)).reshape(k * k, Cin, Cout)
    w_packed = jnp.zeros((k * k, Cpin, Cpout), jnp.float32)
    w_packed = w_packed.at[:, :Cin, :Cout].set(wt).astype(jnp.bfloat16)

    y, stats = pl.pallas_call(
        functools.partial(_conv_kxk_kernel, k=k, stride=s, Ho=Ho, Wo=Wo),
        out_shape=(jax.ShapeDtypeStruct((N, Ho, Wo, Cpout), jnp.bfloat16),
                   jax.ShapeDtypeStruct((N, 2, Cpout), jnp.float32)),
        grid=(N,),
        in_specs=[pl.BlockSpec((s * s, PH, PW, Cpin), lambda n: (n, 0, 0, 0)),
                  pl.BlockSpec((k * k, Cpin, Cpout), lambda n: (0, 0, 0))],
        out_specs=(pl.BlockSpec((1, Ho, Wo, Cpout), lambda n: (n, 0, 0, 0)),
                   pl.BlockSpec((1, 2, Cpout), lambda n: (n, 0, 0))),
        compiler_params=pltpu.CompilerParams(
            dimension_semantics=("parallel",),
            vmem_limit_bytes=VMEM_LIMIT),
    )(phases, w_packed)
    return y, jnp.sum(stats, axis=0)


def _bn_mish_pass(y_flat, scale, shift, skip_flat, m_real):
    """Elementwise BN+Mish(+skip) over a flattened [M, Cpout] bf16 tensor."""
    M0, Cp = y_flat.shape
    tm, mp = _flat_tiles(M0)
    if mp > M0:
        y_flat = jnp.pad(y_flat, ((0, mp - M0), (0, 0)))
        if skip_flat is not None:
            skip_flat = jnp.pad(skip_flat, ((0, mp - M0), (0, 0)))
    masked = mp > m_real

    in_arrays = [y_flat, scale, shift]
    in_specs = [pl.BlockSpec((tm, Cp), lambda g: (g, 0)),
                pl.BlockSpec((1, Cp), lambda g: (0, 0)),
                pl.BlockSpec((1, Cp), lambda g: (0, 0))]
    if skip_flat is not None:
        in_arrays.append(skip_flat)
        in_specs.append(pl.BlockSpec((tm, Cp), lambda g: (g, 0)))

    act = pl.pallas_call(
        functools.partial(_bn_mish_kernel, m_real=m_real, tm=tm, masked=masked),
        out_shape=jax.ShapeDtypeStruct((mp, Cp), jnp.bfloat16),
        grid=(mp // tm,),
        in_specs=in_specs,
        out_specs=pl.BlockSpec((tm, Cp), lambda g: (g, 0)),
        compiler_params=pltpu.CompilerParams(
            dimension_semantics=("parallel",),
            vmem_limit_bytes=VMEM_LIMIT),
    )(*in_arrays)
    return act[:m_real] if mp > m_real else act


# ---------------------------------------------------------------------------
# BasicConv: conv (once) -> BN fold (tiny glue) -> elementwise BN+Mish(+skip)
# ---------------------------------------------------------------------------
def _basic_conv(x, p, *, k, stride=1, skip=None):
    """x: [N,H,W,Cpin] bf16 (padded channels zero) -> [N,Ho,Wo,Cpout] bf16."""
    w, gamma, beta = p["w"], p["gamma"], p["beta"]
    N, H, W, Cpin = x.shape
    Cout = w.shape[0]
    Cpout = _round_up(Cout, LANE)

    if k == 1 and stride == 1:
        Ho, Wo = H, W
        y_flat, stats = _conv_1x1_pass(x.reshape(N * H * W, Cpin), w, Cpout)
    else:
        y, stats = _conv_kxk_pass(x, w, Cpout, k=k, stride=stride)
        _, Ho, Wo, _ = y.shape
        y_flat = y.reshape(N * Ho * Wo, Cpout)

    # ---- tiny [C]-sized glue: fold BN (batch stats) into scale / shift ----
    M = N * Ho * Wo
    count = jnp.float32(M)
    mean = stats[0] / count
    var = jnp.maximum(stats[1] / count - mean * mean, 0.0)   # biased (PyTorch)
    gamma_p = jnp.zeros((Cpout,), jnp.float32).at[:Cout].set(gamma)
    beta_p = jnp.zeros((Cpout,), jnp.float32).at[:Cout].set(beta)
    scale = gamma_p * jax.lax.rsqrt(var + BN_EPS)
    shift = beta_p - mean * scale

    skip_flat = None if skip is None else skip.reshape(M, Cpout)
    act = _bn_mish_pass(y_flat, scale.reshape(1, Cpout), shift.reshape(1, Cpout),
                        skip_flat, M)
    return act.reshape(N, Ho, Wo, Cpout)


# ---------------------------------------------------------------------------
# CSPX forward (NCHW in / NCHW out, like the PyTorch module)
# ---------------------------------------------------------------------------
def _pad_channels(x, cp):
    c = x.shape[-1]
    if c == cp:
        return x
    return jnp.pad(x, ((0, 0), (0, 0), (0, 0), (0, cp - c)))


@jax.jit
def cspx_forward(x_nchw, params):
    def bc(t, p, k, stride=1, skip=None):
        return _basic_conv(t, p, k=k, stride=stride, skip=skip)

    x = jnp.transpose(x_nchw, (0, 2, 3, 1))
    x = _pad_channels(x, _round_up(x.shape[-1], LANE)).astype(jnp.bfloat16)

    x = bc(x, params["downsample"], 3, stride=2)      # stride-2 3x3 downsample

    x_right = bc(x, params["CBMright"], 1)

    x_left = bc(x, params["CBMin"], 1)
    for rp in params["residual"]:                     # Resblock(s)
        h = bc(x_left, rp["conv1"], 1)
        x_left = bc(h, rp["conv2"], 3, skip=x_left)   # skip-add fused in pass 2
    x_left = bc(x_left, params["CBMout"], 1)

    # channel concat of the real channels, then re-pad to a lane multiple
    cl = params["CBMout"]["w"].shape[0]
    cr = params["CBMright"]["w"].shape[0]
    cat = jnp.concatenate([x_left[..., :cl], x_right[..., :cr]], axis=-1)
    cat = _pad_channels(cat, _round_up(cl + cr, LANE))

    x = bc(cat, params["concat_conv"], 1)

    c_final = params["concat_conv"]["w"].shape[0]
    return jnp.transpose(x[..., :c_final], (0, 3, 1, 2)).astype(jnp.float32)


# ---------------------------------------------------------------------------
# Deterministic parameter construction mirroring CSPX.__init__
# ---------------------------------------------------------------------------
def _init_basic_conv(key, cin, cout, k):
    key, kw = jax.random.split(key)
    fan_in = cin * k * k
    w = jax.random.normal(kw, (cout, cin, k, k), jnp.float32) / jnp.sqrt(fan_in)
    gamma = 1.0 + 0.05 * jnp.arange(cout, dtype=jnp.float32)
    beta = 0.02 * jnp.arange(cout, dtype=jnp.float32)
    return key, {"w": w, "gamma": gamma, "beta": beta}


def init_cspx_params(key, in_channels, out_channels, X, first):
    p = {}
    key, p["downsample"] = _init_basic_conv(key, in_channels, out_channels, 3)
    if first:
        key, p["CBMright"] = _init_basic_conv(key, out_channels, out_channels, 1)
        key, p["CBMin"] = _init_basic_conv(key, out_channels, out_channels, 1)
        hidden = out_channels // 2
        key, c1 = _init_basic_conv(key, out_channels, hidden, 1)
        key, c2 = _init_basic_conv(key, hidden, out_channels, 3)
        p["residual"] = [{"conv1": c1, "conv2": c2}]
        key, p["CBMout"] = _init_basic_conv(key, out_channels, out_channels, 1)
        key, p["concat_conv"] = _init_basic_conv(key, out_channels * 2, out_channels, 1)
    else:
        half = out_channels // 2
        key, p["CBMright"] = _init_basic_conv(key, out_channels, half, 1)
        key, p["CBMin"] = _init_basic_conv(key, out_channels, half, 1)
        blocks = []
        for _ in range(X):
            key, c1 = _init_basic_conv(key, half, half, 1)
            key, c2 = _init_basic_conv(key, half, half, 3)
            blocks.append({"conv1": c1, "conv2": c2})
        p["residual"] = blocks
        key, p["CBMout"] = _init_basic_conv(key, half, half, 1)
        key, p["concat_conv"] = _init_basic_conv(key, out_channels, out_channels, 1)
    return key, p


if __name__ == "__main__":
    # CSPX(in_channels=4, out_channels=8, X=2, first=False)
    in_channels, out_channels, X, first = 4, 8, 2, False
    N, H, W = 2, 16, 16

    key = jax.random.PRNGKey(0)
    key, params = init_cspx_params(key, in_channels, out_channels, X, first)
    key, kx = jax.random.split(key)
    x = jax.random.normal(kx, (N, in_channels, H, W), dtype=jnp.float32)

    out = cspx_forward(x, params)
    jax.block_until_ready(out)

    assert out.shape == (N, out_channels, H // 2, W // 2), out.shape
    assert bool(jnp.all(jnp.isfinite(out)))
    print("KERNEL_OK")
</pallas_src>

<mosaic_0001>
module attributes {stable_mosaic.version = 11 : i64} {
  func.func @_conv_kxk_kernel(%arg0: i32, %arg1: memref<4x9x9x128xbf16, #tpu.memory_space<vmem>>, %arg2: memref<9x128x128xbf16, #tpu.memory_space<vmem>>, %arg3: memref<1x8x8x128xbf16, #tpu.memory_space<vmem>>, %arg4: memref<1x2x128xf32, #tpu.memory_space<vmem>>) attributes {dimension_semantics = [#tpu.dimension_semantics<parallel>], iteration_bounds = array<i64: 2>, scalar_prefetch = 0 : i64, scratch_operands = 0 : i64, tpu.core_type = #tpu.core_type<tc>, window_params = [{transform_indices = @transform_0, window_bounds = array<i64: 4, 9, 9, 128>}, {pipeline_mode = #tpu.pipeline_mode<synchronous>, transform_indices = @transform_1, window_bounds = array<i64: 9, 128, 128>}, {transform_indices = @transform_2, window_bounds = array<i64: 1, 8, 8, 128>}, {transform_indices = @transform_3, window_bounds = array<i64: 1, 2, 128>}]} {
    %cst = arith.constant 0.000000e+00 : f32
    %0 = vector.broadcast %cst : f32 to vector<64x128xf32>
    %c0 = arith.constant 0 : index
    %c0_0 = arith.constant 0 : index
    %c0_1 = arith.constant 0 : index
    %c0_2 = arith.constant 0 : index
    %1 = vector.load %arg1[%c0, %c0_0, %c0_1, %c0_2] : memref<4x9x9x128xbf16, #tpu.memory_space<vmem>>, vector<1x8x8x128xbf16>
    %2 = vector.shape_cast %1 : vector<1x8x8x128xbf16> to vector<8x8x128xbf16>
    %3 = vector.shape_cast %2 : vector<8x8x128xbf16> to vector<64x128xbf16>
    %c0_3 = arith.constant 0 : index
    %c0_4 = arith.constant 0 : index
    %c0_5 = arith.constant 0 : index
    %4 = vector.load %arg2[%c0_3, %c0_4, %c0_5] : memref<9x128x128xbf16, #tpu.memory_space<vmem>>, vector<1x128x128xbf16>
    %5 = vector.shape_cast %4 : vector<1x128x128xbf16> to vector<128x128xbf16>
    %cst_6 = arith.constant dense<0.000000e+00> : vector<64x128xf32>
    %6 = tpu.matmul %3, %5, %cst_6 {dimension_numbers = #tpu.dot_dimension_numbers<[1], [0], [0], [1], [0, 0, 1, 1], [], []>} : vector<64x128xbf16>, vector<128x128xbf16>, vector<64x128xf32> -> vector<64x128xf32>
    %7 = arith.addf %0, %6 : vector<64x128xf32>
    %c1 = arith.constant 1 : index
    %c0_7 = arith.constant 0 : index
    %c0_8 = arith.constant 0 : index
    %c0_9 = arith.constant 0 : index
    %8 = vector.load %arg1[%c1, %c0_7, %c0_8, %c0_9] : memref<4x9x9x128xbf16, #tpu.memory_space<vmem>>, vector<1x8x8x128xbf16>
    %9 = vector.shape_cast %8 : vector<1x8x8x128xbf16> to vector<8x8x128xbf16>
    %10 = vector.shape_cast %9 : vector<8x8x128xbf16> to vector<64x128xbf16>
    %c1_10 = arith.constant 1 : index
    %c0_11 = arith.constant 0 : index
    %c0_12 = arith.constant 0 : index
    %11 = vector.load %arg2[%c1_10, %c0_11, %c0_12] : memref<9x128x128xbf16, #tpu.memory_space<vmem>>, vector<1x128x128xbf16>
    %12 = vector.shape_cast %11 : vector<1x128x128xbf16> to vector<128x128xbf16>
    %cst_13 = arith.constant dense<0.000000e+00> : vector<64x128xf32>
    %13 = tpu.matmul %10, %12, %cst_13 {dimension_numbers = #tpu.dot_dimension_numbers<[1], [0], [0], [1], [0, 0, 1, 1], [], []>} : vector<64x128xbf16>, vector<128x128xbf16>, vector<64x128xf32> -> vector<64x128xf32>
    %14 = arith.addf %7, %13 : vector<64x128xf32>
    %c0_14 = arith.constant 0 : index
    %c0_15 = arith.constant 0 : index
    %c1_16 = arith.constant 1 : index
    %c0_17 = arith.constant 0 : index
    %15 = vector.load %arg1[%c0_14, %c0_15, %c1_16, %c0_17] : memref<4x9x9x128xbf16, #tpu.memory_space<vmem>>, vector<1x8x8x128xbf16>
    %16 = vector.shape_cast %15 : vector<1x8x8x128xbf16> to vector<8x8x128xbf16>
    %17 = vector.shape_cast %16 : vector<8x8x128xbf16> to vector<64x128xbf16>
    %c2 = arith.constant 2 : index
    %c0_18 = arith.constant 0 : index
    %c0_19 = arith.constant 0 : index
    %18 = vector.load %arg2[%c2, %c0_18, %c0_19] : memref<9x128x128xbf16, #tpu.memory_space<vmem>>, vector<1x128x128xbf16>
    %19 = vector.shape_cast %18 : vector<1x128x128xbf16> to vector<128x128xbf16>
    %cst_20 = arith.constant dense<0.000000e+00> : vector<64x128xf32>
    %20 = tpu.matmul %17, %19, %cst_20 {dimension_numbers = #tpu.dot_dimension_numbers<[1], [0], [0], [1], [0, 0, 1, 1], [], []>} : vector<64x128xbf16>, vector<128x128xbf16>, vector<64x128xf32> -> vector<64x128xf32>
    %21 = arith.addf %14, %20 : vector<64x128xf32>
    %c2_21 = arith.constant 2 : index
    %c0_22 = arith.constant 0 : index
    %c0_23 = arith.constant 0 : index
    %c0_24 = arith.constant 0 : index
    %22 = vector.load %arg1[%c2_21, %c0_22, %c0_23, %c0_24] : memref<4x9x9x128xbf16, #tpu.memory_space<vmem>>, vector<1x8x8x128xbf16>
    %23 = vector.shape_cast %22 : vector<1x8x8x128xbf16> to vector<8x8x128xbf16>
    %24 = vector.shape_cast %23 : vector<8x8x128xbf16> to vector<64x128xbf16>
    %c3 = arith.constant 3 : index
    %c0_25 = arith.constant 0 : index
    %c0_26 = arith.constant 0 : index
    %25 = vector.load %arg2[%c3, %c0_25, %c0_26] : memref<9x128x128xbf16, #tpu.memory_space<vmem>>, vector<1x128x128xbf16>
    %26 = vector.shape_cast %25 : vector<1x128x128xbf16> to vector<128x128xbf16>
    %cst_27 = arith.constant dense<0.000000e+00> : vector<64x128xf32>
    %27 = tpu.matmul %24, %26, %cst_27 {dimension_numbers = #tpu.dot_dimension_numbers<[1], [0], [0], [1], [0, 0, 1, 1], [], []>} : vector<64x128xbf16>, vector<128x128xbf16>, vector<64x128xf32> -> vector<64x128xf32>
    %28 = arith.addf %21, %27 : vector<64x128xf32>
    %c3_28 = arith.constant 3 : index
    %c0_29 = arith.constant 0 : index
    %c0_30 = arith.constant 0 : index
    %c0_31 = arith.constant 0 : index
    %29 = vector.load %arg1[%c3_28, %c0_29, %c0_30, %c0_31] : memref<4x9x9x128xbf16, #tpu.memory_space<vmem>>, vector<1x8x8x128xbf16>
    %30 = vector.shape_cast %29 : vector<1x8x8x128xbf16> to vector<8x8x128xbf16>
    %31 = vector.shape_cast %30 : vector<8x8x128xbf16> to vector<64x128xbf16>
    %c4 = arith.constant 4 : index
    %c0_32 = arith.constant 0 : index
    %c0_33 = arith.constant 0 : index
    %32 = vector.load %arg2[%c4, %c0_32, %c0_33] : memref<9x128x128xbf16, #tpu.memory_space<vmem>>, vector<1x128x128xbf16>
    %33 = vector.shape_cast %32 : vector<1x128x128xbf16> to vector<128x128xbf16>
    %cst_34 = arith.constant dense<0.000000e+00> : vector<64x128xf32>
    %34 = tpu.matmul %31, %33, %cst_34 {dimension_numbers = #tpu.dot_dimension_numbers<[1], [0], [0], [1], [0, 0, 1, 1], [], []>} : vector<64x128xbf16>, vector<128x128xbf16>, vector<64x128xf32> -> vector<64x128xf32>
    %35 = arith.addf %28, %34 : vector<64x128xf32>
    %c2_35 = arith.constant 2 : index
    %c0_36 = arith.constant 0 : index
    %c1_37 = arith.constant 1 : index
    %c0_38 = arith.constant 0 : index
    %36 = vector.load %arg1[%c2_35, %c0_36, %c1_37, %c0_38] : memref<4x9x9x128xbf16, #tpu.memory_space<vmem>>, vector<1x8x8x128xbf16>
    %37 = vector.shape_cast %36 : vector<1x8x8x128xbf16> to vector<8x8x128xbf16>
    %38 = vector.shape_cast %37 : vector<8x8x128xbf16> to vector<64x128xbf16>
    %c5 = arith.constant 5 : index
    %c0_39 = arith.constant 0 : index
    %c0_40 = arith.constant 0 : index
    %39 = vector.load %arg2[%c5, %c0_39, %c0_40] : memref<9x128x128xbf16, #tpu.memory_space<vmem>>, vector<1x128x128xbf16>
    %40 = vector.shape_cast %39 : vector<1x128x128xbf16> to vector<128x128xbf16>
    %cst_41 = arith.constant dense<0.000000e+00> : vector<64x128xf32>
    %41 = tpu.matmul %38, %40, %cst_41 {dimension_numbers = #tpu.dot_dimension_numbers<[1], [0], [0], [1], [0, 0, 1, 1], [], []>} : vector<64x128xbf16>, vector<128x128xbf16>, vector<64x128xf32> -> vector<64x128xf32>
    %42 = arith.addf %35, %41 : vector<64x128xf32>
    %c0_42 = arith.constant 0 : index
    %c1_43 = arith.constant 1 : index
    %c0_44 = arith.constant 0 : index
    %c0_45 = arith.constant 0 : index
    %43 = vector.load %arg1[%c0_42, %c1_43, %c0_44, %c0_45] : memref<4x9x9x128xbf16, #tpu.memory_space<vmem>>, vector<1x8x8x128xbf16>
    %44 = vector.shape_cast %43 : vector<1x8x8x128xbf16> to vector<8x8x128xbf16>
    %45 = vector.shape_cast %44 : vector<8x8x128xbf16> to vector<64x128xbf16>
    %c6 = arith.constant 6 : index
    %c0_46 = arith.constant 0 : index
    %c0_47 = arith.constant 0 : index
    %46 = vector.load %arg2[%c6, %c0_46, %c0_47] : memref<9x128x128xbf16, #tpu.memory_space<vmem>>, vector<1x128x128xbf16>
    %47 = vector.shape_cast %46 : vector<1x128x128xbf16> to vector<128x128xbf16>
    %cst_48 = arith.constant dense<0.000000e+00> : vector<64x128xf32>
    %48 = tpu.matmul %45, %47, %cst_48 {dimension_numbers = #tpu.dot_dimension_numbers<[1], [0], [0], [1], [0, 0, 1, 1], [], []>} : vector<64x128xbf16>, vector<128x128xbf16>, vector<64x128xf32> -> vector<64x128xf32>
    %49 = arith.addf %42, %48 : vector<64x128xf32>
    %c1_49 = arith.constant 1 : index
    %c1_50 = arith.constant 1 : index
    %c0_51 = arith.constant 0 : index
    %c0_52 = arith.constant 0 : index
    %50 = vector.load %arg1[%c1_49, %c1_50, %c0_51, %c0_52] : memref<4x9x9x128xbf16, #tpu.memory_space<vmem>>, vector<1x8x8x128xbf16>
    %51 = vector.shape_cast %50 : vector<1x8x8x128xbf16> to vector<8x8x128xbf16>
    %52 = vector.shape_cast %51 : vector<8x8x128xbf16> to vector<64x128xbf16>
    %c7 = arith.constant 7 : index
    %c0_53 = arith.constant 0 : index
    %c0_54 = arith.constant 0 : index
    %53 = vector.load %arg2[%c7, %c0_53, %c0_54] : memref<9x128x128xbf16, #tpu.memory_space<vmem>>, vector<1x128x128xbf16>
    %54 = vector.shape_cast %53 : vector<1x128x128xbf16> to vector<128x128xbf16>
    %cst_55 = arith.constant dense<0.000000e+00> : vector<64x128xf32>
    %55 = tpu.matmul %52, %54, %cst_55 {dimension_numbers = #tpu.dot_dimension_numbers<[1], [0], [0], [1], [0, 0, 1, 1], [], []>} : vector<64x128xbf16>, vector<128x128xbf16>, vector<64x128xf32> -> vector<64x128xf32>
    %56 = arith.addf %49, %55 : vector<64x128xf32>
    %c0_56 = arith.constant 0 : index
    %c1_57 = arith.constant 1 : index
    %c1_58 = arith.constant 1 : index
    %c0_59 = arith.constant 0 : index
    %57 = vector.load %arg1[%c0_56, %c1_57, %c1_58, %c0_59] : memref<4x9x9x128xbf16, #tpu.memory_space<vmem>>, vector<1x8x8x128xbf16>
    %58 = vector.shape_cast %57 : vector<1x8x8x128xbf16> to vector<8x8x128xbf16>
    %59 = vector.shape_cast %58 : vector<8x8x128xbf16> to vector<64x128xbf16>
    %c8 = arith.constant 8 : index
    %c0_60 = arith.constant 0 : index
    %c0_61 = arith.constant 0 : index
    %60 = vector.load %arg2[%c8, %c0_60, %c0_61] : memref<9x128x128xbf16, #tpu.memory_space<vmem>>, vector<1x128x128xbf16>
    %61 = vector.shape_cast %60 : vector<1x128x128xbf16> to vector<128x128xbf16>
    %cst_62 = arith.constant dense<0.000000e+00> : vector<64x128xf32>
    %62 = tpu.matmul %59, %61, %cst_62 {dimension_numbers = #tpu.dot_dimension_numbers<[1], [0], [0], [1], [0, 0, 1, 1], [], []>} : vector<64x128xbf16>, vector<128x128xbf16>, vector<64x128xf32> -> vector<64x128xf32>
    %63 = arith.addf %56, %62 : vector<64x128xf32>
    %64 = vector.shape_cast %63 : vector<64x128xf32> to vector<1x8x8x128xf32>
    %65 = arith.truncf %64 : vector<1x8x8x128xf32> to vector<1x8x8x128xbf16>
    %c0_63 = arith.constant 0 : index
    %c0_64 = arith.constant 0 : index
    %c0_65 = arith.constant 0 : index
    %c0_66 = arith.constant 0 : index
    %66 = vector.load %arg3[%c0_63, %c0_64, %c0_65, %c0_66] : memref<1x8x8x128xbf16, #tpu.memory_space<vmem>>, vector<1x8x8x128xbf16>
    tpu.vector_store %arg3[%c0_63, %c0_64, %c0_65, %c0_66], %65 {strides = array<i32>} : memref<1x8x8x128xbf16, #tpu.memory_space<vmem>>, vector<1x8x8x128xbf16>,
    %cst_67 = arith.constant dense<0.000000e+00> : vector<128xf32>
    %67 = vector.multi_reduction <add>, %63, %cst_67 [0] : vector<64x128xf32> to vector<128xf32>
    %68 = vector.shape_cast %67 : vector<128xf32> to vector<1x128xf32>
    %69 = arith.mulf %63, %63 : vector<64x128xf32>
    %cst_68 = arith.constant dense<0.000000e+00> : vector<128xf32>
    %70 = vector.multi_reduction <add>, %69, %cst_68 [0] : vector<64x128xf32> to vector<128xf32>
    %71 = vector.shape_cast %70 : vector<128xf32> to vector<1x128xf32>
    %72 = tpu.concatenate %68, %71 in 0 : vector<1x128xf32>, vector<1x128xf32> -> vector<2x128xf32>
    %73 = vector.shape_cast %72 : vector<2x128xf32> to vector<1x2x128xf32>
    %c0_69 = arith.constant 0 : index
    %c0_70 = arith.constant 0 : index
    %c0_71 = arith.constant 0 : index
    %74 = vector.load %arg4[%c0_69, %c0_70, %c0_71] : memref<1x2x128xf32, #tpu.memory_space<vmem>>, vector<1x2x128xf32>
    tpu.vector_store %arg4[%c0_69, %c0_70, %c0_71], %73 {strides = array<i32>} : memref<1x2x128xf32, #tpu.memory_space<vmem>>, vector<1x2x128xf32>,
    return
  }
  func.func @transform_0(%arg0: i32) -> (i32, i32, i32, i32) {
    %c0_i32 = arith.constant 0 : i32
    %c0_i32_0 = arith.constant 0 : i32
    %c0_i32_1 = arith.constant 0 : i32
    %c0_i32_2 = arith.constant 0 : i32
    return %arg0, %c0_i32, %c0_i32_0, %c0_i32_1 : i32, i32, i32, i32
  }
  func.func @transform_1(%arg0: i32) -> (i32, i32, i32) {
    %c0_i32 = arith.constant 0 : i32
    %c0_i32_0 = arith.constant 0 : i32
    %c0_i32_1 = arith.constant 0 : i32
    %c0_i32_2 = arith.constant 0 : i32
    return %c0_i32, %c0_i32_0, %c0_i32_1 : i32, i32, i32
  }
  func.func @transform_2(%arg0: i32) -> (i32, i32, i32, i32) {
    %c0_i32 = arith.constant 0 : i32
    %c0_i32_0 = arith.constant 0 : i32
    %c0_i32_1 = arith.constant 0 : i32
    %c0_i32_2 = arith.constant 0 : i32
    return %arg0, %c0_i32, %c0_i32_0, %c0_i32_1 : i32, i32, i32, i32
  }
  func.func @transform_3(%arg0: i32) -> (i32, i32, i32) {
    %c0_i32 = arith.constant 0 : i32
    %c0_i32_0 = arith.constant 0 : i32
    %c0_i32_1 = arith.constant 0 : i32
    return %arg0, %c0_i32, %c0_i32_0 : i32, i32, i32
  }
}

module attributes {stable_mosaic.version = 11 : i64} {
  func.func @_bn_mish_kernel(%arg0: i32, %arg1: memref<128x128xbf16, #tpu.memory_space<vmem>>, %arg2: memref<1x128xf32, #tpu.memory_space<vmem>>, %arg3: memref<1x128xf32, #tpu.memory_space<vmem>>, %arg4: memref<128x128xbf16, #tpu.memory_space<vmem>>) attributes {dimension_semantics = [#tpu.dimension_semantics<parallel>], iteration_bounds = array<i64: 1>, scalar_prefetch = 0 : i64, scratch_operands = 0 : i64, tpu.core_type = #tpu.core_type<tc>, window_params = [{transform_indices = @transform_0, window_bounds = array<i64: 128, 128>}, {pipeline_mode = #tpu.pipeline_mode<synchronous>, transform_indices = @transform_1, window_bounds = array<i64: 1, 128>}, {pipeline_mode = #tpu.pipeline_mode<synchronous>, transform_indices = @transform_2, window_bounds = array<i64: 1, 128>}, {transform_indices = @transform_3, window_bounds = array<i64: 128, 128>}]} {
    %c0 = arith.constant 0 : index
    %c0_0 = arith.constant 0 : index
    %0 = vector.load %arg1[%c0, %c0_0] : memref<128x128xbf16, #tpu.memory_space<vmem>>, vector<128x128xbf16>
    %1 = arith.extf %0 : vector<128x128xbf16> to vector<128x128xf32>
    %c0_1 = arith.constant 0 : index
    %c0_2 = arith.constant 0 : index
    %2 = vector.load %arg2[%c0_1, %c0_2] : memref<1x128xf32, #tpu.memory_space<vmem>>, vector<1x128xf32>
    %3 = vector.broadcast %2 : vector<1x128xf32> to vector<128x128xf32>
    %4 = arith.mulf %1, %3 : vector<128x128xf32>
    %c0_3 = arith.constant 0 : index
    %c0_4 = arith.constant 0 : index
    %5 = vector.load %arg3[%c0_3, %c0_4] : memref<1x128xf32, #tpu.memory_space<vmem>>, vector<1x128xf32>
    %6 = vector.broadcast %5 : vector<1x128xf32> to vector<128x128xf32>
    %7 = arith.addf %4, %6 : vector<128x128xf32>
    %cst = arith.constant 2.000000e+01 : f32
    %8 = vector.broadcast %cst : f32 to vector<128x128xf32>
    %9 = arith.minimumf %7, %8 : vector<128x128xf32>
    %10 = math.exp %9 : vector<128x128xf32>
    %cst_5 = arith.constant 1.000000e+00 : f32
    %11 = vector.broadcast %cst_5 : f32 to vector<128x128xf32>
    %12 = arith.addf %11, %10 : vector<128x128xf32>
    %cst_6 = arith.constant 1.000000e+00 : f32
    %13 = vector.broadcast %cst_6 : f32 to vector<128x128xf32>
    %14 = arith.addf %13, %10 : vector<128x128xf32>
    %15 = arith.mulf %12, %14 : vector<128x128xf32>
    %cst_7 = arith.constant 1.000000e+00 : f32
    %16 = vector.broadcast %cst_7 : f32 to vector<128x128xf32>
    %17 = arith.addf %15, %16 : vector<128x128xf32>
    %18 = tpu.reciprocal %17 {approx = true} : vector<128x128xf32> -> vector<128x128xf32>
    %cst_8 = arith.constant 2.000000e+00 : f32
    %19 = vector.broadcast %cst_8 : f32 to vector<128x128xf32>
    %20 = arith.mulf %19, %18 : vector<128x128xf32>
    %cst_9 = arith.constant 1.000000e+00 : f32
    %21 = vector.broadcast %cst_9 : f32 to vector<128x128xf32>
    %22 = arith.subf %21, %20 : vector<128x128xf32>
    %23 = arith.mulf %7, %22 : vector<128x128xf32>
    %24 = arith.truncf %23 : vector<128x128xf32> to vector<128x128xbf16>
    %c0_10 = arith.constant 0 : index
    %c0_11 = arith.constant 0 : index
    %25 = vector.load %arg4[%c0_10, %c0_11] : memref<128x128xbf16, #tpu.memory_space<vmem>>, vector<128x128xbf16>
    tpu.vector_store %arg4[%c0_10, %c0_11], %24 {strides = array<i32>} : memref<128x128xbf16, #tpu.memory_space<vmem>>, vector<128x128xbf16>,
    return
  }
  func.func @transform_0(%arg0: i32) -> (i32, i32) {
    %c0_i32 = arith.constant 0 : i32
    %c0_i32_0 = arith.constant 0 : i32
    return %arg0, %c0_i32 : i32, i32
  }
  func.func @transform_1(%arg0: i32) -> (i32, i32) {
    %c0_i32 = arith.constant 0 : i32
    %c0_i32_0 = arith.constant 0 : i32
    %c0_i32_1 = arith.constant 0 : i32
    return %c0_i32, %c0_i32_0 : i32, i32
  }
  func.func @transform_2(%arg0: i32) -> (i32, i32) {
    %c0_i32 = arith.constant 0 : i32
    %c0_i32_0 = arith.constant 0 : i32
    %c0_i32_1 = arith.constant 0 : i32
    return %c0_i32, %c0_i32_0 : i32, i32
  }
  func.func @transform_3(%arg0: i32) -> (i32, i32) {
    %c0_i32 = arith.constant 0 : i32
    %c0_i32_0 = arith.constant 0 : i32
    return %arg0, %c0_i32 : i32, i32
  }
}

module attributes {stable_mosaic.version = 11 : i64} {
  func.func @_conv_1x1_kernel(%arg0: i32, %arg1: memref<128x128xbf16, #tpu.memory_space<vmem>>, %arg2: memref<128x128xbf16, #tpu.memory_space<vmem>>, %arg3: memref<128x128xbf16, #tpu.memory_space<vmem>>, %arg4: memref<1x2x128xf32, #tpu.memory_space<vmem>>) attributes {dimension_semantics = [#tpu.dimension_semantics<parallel>], iteration_bounds = array<i64: 1>, scalar_prefetch = 0 : i64, scratch_operands = 0 : i64, tpu.core_type = #tpu.core_type<tc>, window_params = [{transform_indices = @transform_0, window_bounds = array<i64: 128, 128>}, {pipeline_mode = #tpu.pipeline_mode<synchronous>, transform_indices = @transform_1, window_bounds = array<i64: 128, 128>}, {transform_indices = @transform_2, window_bounds = array<i64: 128, 128>}, {transform_indices = @transform_3, window_bounds = array<i64: 1, 2, 128>}]} {
    %c0 = arith.constant 0 : index
    %c0_0 = arith.constant 0 : index
    %0 = vector.load %arg1[%c0, %c0_0] : memref<128x128xbf16, #tpu.memory_space<vmem>>, vector<128x128xbf16>
    %c0_1 = arith.constant 0 : index
    %c0_2 = arith.constant 0 : index
    %1 = vector.load %arg2[%c0_1, %c0_2] : memref<128x128xbf16, #tpu.memory_space<vmem>>, vector<128x128xbf16>
    %cst = arith.constant dense<0.000000e+00> : vector<128x128xf32>
    %2 = tpu.matmul %0, %1, %cst {dimension_numbers = #tpu.dot_dimension_numbers<[1], [0], [0], [1], [0, 0, 1, 1], [], []>} : vector<128x128xbf16>, vector<128x128xbf16>, vector<128x128xf32> -> vector<128x128xf32>
    %3 = arith.truncf %2 : vector<128x128xf32> to vector<128x128xbf16>
    %c0_3 = arith.constant 0 : index
    %c0_4 = arith.constant 0 : index
    %4 = vector.load %arg3[%c0_3, %c0_4] : memref<128x128xbf16, #tpu.memory_space<vmem>>, vector<128x128xbf16>
    tpu.vector_store %arg3[%c0_3, %c0_4], %3 {strides = array<i32>} : memref<128x128xbf16, #tpu.memory_space<vmem>>, vector<128x128xbf16>,
    %cst_5 = arith.constant dense<0.000000e+00> : vector<128xf32>
    %5 = vector.multi_reduction <add>, %2, %cst_5 [0] : vector<128x128xf32> to vector<128xf32>
    %6 = vector.shape_cast %5 : vector<128xf32> to vector<1x128xf32>
    %7 = arith.mulf %2, %2 : vector<128x128xf32>
    %cst_6 = arith.constant dense<0.000000e+00> : vector<128xf32>
    %8 = vector.multi_reduction <add>, %7, %cst_6 [0] : vector<128x128xf32> to vector<128xf32>
    %9 = vector.shape_cast %8 : vector<128xf32> to vector<1x128xf32>
    %10 = tpu.concatenate %6, %9 in 0 : vector<1x128xf32>, vector<1x128xf32> -> vector<2x128xf32>
    %11 = vector.shape_cast %10 : vector<2x128xf32> to vector<1x2x128xf32>
    %c0_7 = arith.constant 0 : index
    %c0_8 = arith.constant 0 : index
    %c0_9 = arith.constant 0 : index
    %12 = vector.load %arg4[%c0_7, %c0_8, %c0_9] : memref<1x2x128xf32, #tpu.memory_space<vmem>>, vector<1x2x128xf32>
    tpu.vector_store %arg4[%c0_7, %c0_8, %c0_9], %11 {strides = array<i32>} : memref<1x2x128xf32, #tpu.memory_space<vmem>>, vector<1x2x128xf32>,
    return
  }
  func.func @transform_0(%arg0: i32) -> (i32, i32) {
    %c0_i32 = arith.constant 0 : i32
    %c0_i32_0 = arith.constant 0 : i32
    return %arg0, %c0_i32 : i32, i32
  }
  func.func @transform_1(%arg0: i32) -> (i32, i32) {
    %c0_i32 = arith.constant 0 : i32
    %c0_i32_0 = arith.constant 0 : i32
    %c0_i32_1 = arith.constant 0 : i32
    return %c0_i32, %c0_i32_0 : i32, i32
  }
  func.func @transform_2(%arg0: i32) -> (i32, i32) {
    %c0_i32 = arith.constant 0 : i32
    %c0_i32_0 = arith.constant 0 : i32
    return %arg0, %c0_i32 : i32, i32
  }
  func.func @transform_3(%arg0: i32) -> (i32, i32, i32) {
    %c0_i32 = arith.constant 0 : i32
    %c0_i32_0 = arith.constant 0 : i32
    %c0_i32_1 = arith.constant 0 : i32
    return %arg0, %c0_i32, %c0_i32_0 : i32, i32, i32
  }
}

module attributes {stable_mosaic.version = 11 : i64} {
  func.func @_bn_mish_kernel(%arg0: i32, %arg1: memref<128x128xbf16, #tpu.memory_space<vmem>>, %arg2: memref<1x128xf32, #tpu.memory_space<vmem>>, %arg3: memref<1x128xf32, #tpu.memory_space<vmem>>, %arg4: memref<128x128xbf16, #tpu.memory_space<vmem>>, %arg5: memref<128x128xbf16, #tpu.memory_space<vmem>>) attributes {dimension_semantics = [#tpu.dimension_semantics<parallel>], iteration_bounds = array<i64: 1>, scalar_prefetch = 0 : i64, scratch_operands = 0 : i64, tpu.core_type = #tpu.core_type<tc>, window_params = [{transform_indices = @transform_0, window_bounds = array<i64: 128, 128>}, {pipeline_mode = #tpu.pipeline_mode<synchronous>, transform_indices = @transform_1, window_bounds = array<i64: 1, 128>}, {pipeline_mode = #tpu.pipeline_mode<synchronous>, transform_indices = @transform_2, window_bounds = array<i64: 1, 128>}, {transform_indices = @transform_3, window_bounds = array<i64: 128, 128>}, {transform_indices = @transform_4, window_bounds = array<i64: 128, 128>}]} {
    %c0 = arith.constant 0 : index
    %c0_0 = arith.constant 0 : index
    %0 = vector.load %arg1[%c0, %c0_0] : memref<128x128xbf16, #tpu.memory_space<vmem>>, vector<128x128xbf16>
    %1 = arith.extf %0 : vector<128x128xbf16> to vector<128x128xf32>
    %c0_1 = arith.constant 0 : index
    %c0_2 = arith.constant 0 : index
    %2 = vector.load %arg2[%c0_1, %c0_2] : memref<1x128xf32, #tpu.memory_space<vmem>>, vector<1x128xf32>
    %3 = vector.broadcast %2 : vector<1x128xf32> to vector<128x128xf32>
    %4 = arith.mulf %1, %3 : vector<128x128xf32>
    %c0_3 = arith.constant 0 : index
    %c0_4 = arith.constant 0 : index
    %5 = vector.load %arg3[%c0_3, %c0_4] : memref<1x128xf32, #tpu.memory_space<vmem>>, vector<1x128xf32>
    %6 = vector.broadcast %5 : vector<1x128xf32> to vector<128x128xf32>
    %7 = arith.addf %4, %6 : vector<128x128xf32>
    %cst = arith.constant 2.000000e+01 : f32
    %8 = vector.broadcast %cst : f32 to vector<128x128xf32>
    %9 = arith.minimumf %7, %8 : vector<128x128xf32>
    %10 = math.exp %9 : vector<128x128xf32>
    %cst_5 = arith.constant 1.000000e+00 : f32
    %11 = vector.broadcast %cst_5 : f32 to vector<128x128xf32>
    %12 = arith.addf %11, %10 : vector<128x128xf32>
    %cst_6 = arith.constant 1.000000e+00 : f32
    %13 = vector.broadcast %cst_6 : f32 to vector<128x128xf32>
    %14 = arith.addf %13, %10 : vector<128x128xf32>
    %15 = arith.mulf %12, %14 : vector<128x128xf32>
    %cst_7 = arith.constant 1.000000e+00 : f32
    %16 = vector.broadcast %cst_7 : f32 to vector<128x128xf32>
    %17 = arith.addf %15, %16 : vector<128x128xf32>
    %18 = tpu.reciprocal %17 {approx = true} : vector<128x128xf32> -> vector<128x128xf32>
    %cst_8 = arith.constant 2.000000e+00 : f32
    %19 = vector.broadcast %cst_8 : f32 to vector<128x128xf32>
    %20 = arith.mulf %19, %18 : vector<128x128xf32>
    %cst_9 = arith.constant 1.000000e+00 : f32
    %21 = vector.broadcast %cst_9 : f32 to vector<128x128xf32>
    %22 = arith.subf %21, %20 : vector<128x128xf32>
    %23 = arith.mulf %7, %22 : vector<128x128xf32>
    %c0_10 = arith.constant 0 : index
    %c0_11 = arith.constant 0 : index
    %24 = vector.load %arg4[%c0_10, %c0_11] : memref<128x128xbf16, #tpu.memory_space<vmem>>, vector<128x128xbf16>
    %25 = arith.extf %24 : vector<128x128xbf16> to vector<128x128xf32>
    %26 = arith.addf %23, %25 : vector<128x128xf32>
    %27 = arith.truncf %26 : vector<128x128xf32> to vector<128x128xbf16>
    %c0_12 = arith.constant 0 : index
    %c0_13 = arith.constant 0 : index
    %28 = vector.load %arg5[%c0_12, %c0_13] : memref<128x128xbf16, #tpu.memory_space<vmem>>, vector<128x128xbf16>
    tpu.vector_store %arg5[%c0_12, %c0_13], %27 {strides = array<i32>} : memref<128x128xbf16, #tpu.memory_space<vmem>>, vector<128x128xbf16>,
    return
  }
  func.func @transform_0(%arg0: i32) -> (i32, i32) {
    %c0_i32 = arith.constant 0 : i32
    %c0_i32_0 = arith.constant 0 : i32
    return %arg0, %c0_i32 : i32, i32
  }
  func.func @transform_1(%arg0: i32) -> (i32, i32) {
    %c0_i32 = arith.constant 0 : i32
    %c0_i32_0 = arith.constant 0 : i32
    %c0_i32_1 = arith.constant 0 : i32
    return %c0_i32, %c0_i32_0 : i32, i32
  }
  func.func @transform_2(%arg0: i32) -> (i32, i32) {
    %c0_i32 = arith.constant 0 : i32
    %c0_i32_0 = arith.constant 0 : i32
    %c0_i32_1 = arith.constant 0 : i32
    return %c0_i32, %c0_i32_0 : i32, i32
  }
  func.func @transform_3(%arg0: i32) -> (i32, i32) {
    %c0_i32 = arith.constant 0 : i32
    %c0_i32_0 = arith.constant 0 : i32
    return %arg0, %c0_i32 : i32, i32
  }
  func.func @transform_4(%arg0: i32) -> (i32, i32) {
    %c0_i32 = arith.constant 0 : i32
    %c0_i32_0 = arith.constant 0 : i32
    return %arg0, %c0_i32 : i32, i32
  }
}

module attributes {stable_mosaic.version = 11 : i64} {
  func.func @_conv_kxk_kernel(%arg0: i32, %arg1: memref<1x10x10x128xbf16, #tpu.memory_space<vmem>>, %arg2: memref<9x128x128xbf16, #tpu.memory_space<vmem>>, %arg3: memref<1x8x8x128xbf16, #tpu.memory_space<vmem>>, %arg4: memref<1x2x128xf32, #tpu.memory_space<vmem>>) attributes {dimension_semantics = [#tpu.dimension_semantics<parallel>], iteration_bounds = array<i64: 2>, scalar_prefetch = 0 : i64, scratch_operands = 0 : i64, tpu.core_type = #tpu.core_type<tc>, window_params = [{transform_indices = @transform_0, window_bounds = array<i64: 1, 10, 10, 128>}, {pipeline_mode = #tpu.pipeline_mode<synchronous>, transform_indices = @transform_1, window_bounds = array<i64: 9, 128, 128>}, {transform_indices = @transform_2, window_bounds = array<i64: 1, 8, 8, 128>}, {transform_indices = @transform_3, window_bounds = array<i64: 1, 2, 128>}]} {
    %cst = arith.constant 0.000000e+00 : f32
    %0 = vector.broadcast %cst : f32 to vector<64x128xf32>
    %c0 = arith.constant 0 : index
    %c0_0 = arith.constant 0 : index
    %c0_1 = arith.constant 0 : index
    %c0_2 = arith.constant 0 : index
    %1 = vector.load %arg1[%c0, %c0_0, %c0_1, %c0_2] : memref<1x10x10x128xbf16, #tpu.memory_space<vmem>>, vector<1x8x8x128xbf16>
    %2 = vector.shape_cast %1 : vector<1x8x8x128xbf16> to vector<8x8x128xbf16>
    %3 = vector.shape_cast %2 : vector<8x8x128xbf16> to vector<64x128xbf16>
    %c0_3 = arith.constant 0 : index
    %c0_4 = arith.constant 0 : index
    %c0_5 = arith.constant 0 : index
    %4 = vector.load %arg2[%c0_3, %c0_4, %c0_5] : memref<9x128x128xbf16, #tpu.memory_space<vmem>>, vector<1x128x128xbf16>
    %5 = vector.shape_cast %4 : vector<1x128x128xbf16> to vector<128x128xbf16>
    %cst_6 = arith.constant dense<0.000000e+00> : vector<64x128xf32>
    %6 = tpu.matmul %3, %5, %cst_6 {dimension_numbers = #tpu.dot_dimension_numbers<[1], [0], [0], [1], [0, 0, 1, 1], [], []>} : vector<64x128xbf16>, vector<128x128xbf16>, vector<64x128xf32> -> vector<64x128xf32>
    %7 = arith.addf %0, %6 : vector<64x128xf32>
    %c0_7 = arith.constant 0 : index
    %c0_8 = arith.constant 0 : index
    %c1 = arith.constant 1 : index
    %c0_9 = arith.constant 0 : index
    %8 = vector.load %arg1[%c0_7, %c0_8, %c1, %c0_9] : memref<1x10x10x128xbf16, #tpu.memory_space<vmem>>, vector<1x8x8x128xbf16>
    %9 = vector.shape_cast %8 : vector<1x8x8x128xbf16> to vector<8x8x128xbf16>
    %10 = vector.shape_cast %9 : vector<8x8x128xbf16> to vector<64x128xbf16>
    %c1_10 = arith.constant 1 : index
    %c0_11 = arith.constant 0 : index
    %c0_12 = arith.constant 0 : index
    %11 = vector.load %arg2[%c1_10, %c0_11, %c0_12] : memref<9x128x128xbf16, #tpu.memory_space<vmem>>, vector<1x128x128xbf16>
    %12 = vector.shape_cast %11 : vector<1x128x128xbf16> to vector<128x128xbf16>
    %cst_13 = arith.constant dense<0.000000e+00> : vector<64x128xf32>
    %13 = tpu.matmul %10, %12, %cst_13 {dimension_numbers = #tpu.dot_dimension_numbers<[1], [0], [0], [1], [0, 0, 1, 1], [], []>} : vector<64x128xbf16>, vector<128x128xbf16>, vector<64x128xf32> -> vector<64x128xf32>
    %14 = arith.addf %7, %13 : vector<64x128xf32>
    %c0_14 = arith.constant 0 : index
    %c0_15 = arith.constant 0 : index
    %c2 = arith.constant 2 : index
    %c0_16 = arith.constant 0 : index
    %15 = vector.load %arg1[%c0_14, %c0_15, %c2, %c0_16] : memref<1x10x10x128xbf16, #tpu.memory_space<vmem>>, vector<1x8x8x128xbf16>
    %16 = vector.shape_cast %15 : vector<1x8x8x128xbf16> to vector<8x8x128xbf16>
    %17 = vector.shape_cast %16 : vector<8x8x128xbf16> to vector<64x128xbf16>
    %c2_17 = arith.constant 2 : index
    %c0_18 = arith.constant 0 : index
    %c0_19 = arith.constant 0 : index
    %18 = vector.load %arg2[%c2_17, %c0_18, %c0_19] : memref<9x128x128xbf16, #tpu.memory_space<vmem>>, vector<1x128x128xbf16>
    %19 = vector.shape_cast %18 : vector<1x128x128xbf16> to vector<128x128xbf16>
    %cst_20 = arith.constant dense<0.000000e+00> : vector<64x128xf32>
    %20 = tpu.matmul %17, %19, %cst_20 {dimension_numbers = #tpu.dot_dimension_numbers<[1], [0], [0], [1], [0, 0, 1, 1], [], []>} : vector<64x128xbf16>, vector<128x128xbf16>, vector<64x128xf32> -> vector<64x128xf32>
    %21 = arith.addf %14, %20 : vector<64x128xf32>
    %c0_21 = arith.constant 0 : index
    %c1_22 = arith.constant 1 : index
    %c0_23 = arith.constant 0 : index
    %c0_24 = arith.constant 0 : index
    %22 = vector.load %arg1[%c0_21, %c1_22, %c0_23, %c0_24] : memref<1x10x10x128xbf16, #tpu.memory_space<vmem>>, vector<1x8x8x128xbf16>
    %23 = vector.shape_cast %22 : vector<1x8x8x128xbf16> to vector<8x8x128xbf16>
    %24 = vector.shape_cast %23 : vector<8x8x128xbf16> to vector<64x128xbf16>
    %c3 = arith.constant 3 : index
    %c0_25 = arith.constant 0 : index
    %c0_26 = arith.constant 0 : index
    %25 = vector.load %arg2[%c3, %c0_25, %c0_26] : memref<9x128x128xbf16, #tpu.memory_space<vmem>>, vector<1x128x128xbf16>
    %26 = vector.shape_cast %25 : vector<1x128x128xbf16> to vector<128x128xbf16>
    %cst_27 = arith.constant dense<0.000000e+00> : vector<64x128xf32>
    %27 = tpu.matmul %24, %26, %cst_27 {dimension_numbers = #tpu.dot_dimension_numbers<[1], [0], [0], [1], [0, 0, 1, 1], [], []>} : vector<64x128xbf16>, vector<128x128xbf16>, vector<64x128xf32> -> vector<64x128xf32>
    %28 = arith.addf %21, %27 : vector<64x128xf32>
    %c0_28 = arith.constant 0 : index
    %c1_29 = arith.constant 1 : index
    %c1_30 = arith.constant 1 : index
    %c0_31 = arith.constant 0 : index
    %29 = vector.load %arg1[%c0_28, %c1_29, %c1_30, %c0_31] : memref<1x10x10x128xbf16, #tpu.memory_space<vmem>>, vector<1x8x8x128xbf16>
    %30 = vector.shape_cast %29 : vector<1x8x8x128xbf16> to vector<8x8x128xbf16>
    %31 = vector.shape_cast %30 : vector<8x8x128xbf16> to vector<64x128xbf16>
    %c4 = arith.constant 4 : index
    %c0_32 = arith.constant 0 : index
    %c0_33 = arith.constant 0 : index
    %32 = vector.load %arg2[%c4, %c0_32, %c0_33] : memref<9x128x128xbf16, #tpu.memory_space<vmem>>, vector<1x128x128xbf16>
    %33 = vector.shape_cast %32 : vector<1x128x128xbf16> to vector<128x128xbf16>
    %cst_34 = arith.constant dense<0.000000e+00> : vector<64x128xf32>
    %34 = tpu.matmul %31, %33, %cst_34 {dimension_numbers = #tpu.dot_dimension_numbers<[1], [0], [0], [1], [0, 0, 1, 1], [], []>} : vector<64x128xbf16>, vector<128x128xbf16>, vector<64x128xf32> -> vector<64x128xf32>
    %35 = arith.addf %28, %34 : vector<64x128xf32>
    %c0_35 = arith.constant 0 : index
    %c1_36 = arith.constant 1 : index
    %c2_37 = arith.constant 2 : index
    %c0_38 = arith.constant 0 : index
    %36 = vector.load %arg1[%c0_35, %c1_36, %c2_37, %c0_38] : memref<1x10x10x128xbf16, #tpu.memory_space<vmem>>, vector<1x8x8x128xbf16>
    %37 = vector.shape_cast %36 : vector<1x8x8x128xbf16> to vector<8x8x128xbf16>
    %38 = vector.shape_cast %37 : vector<8x8x128xbf16> to vector<64x128xbf16>
    %c5 = arith.constant 5 : index
    %c0_39 = arith.constant 0 : index
    %c0_40 = arith.constant 0 : index
    %39 = vector.load %arg2[%c5, %c0_39, %c0_40] : memref<9x128x128xbf16, #tpu.memory_space<vmem>>, vector<1x128x128xbf16>
    %40 = vector.shape_cast %39 : vector<1x128x128xbf16> to vector<128x128xbf16>
    %cst_41 = arith.constant dense<0.000000e+00> : vector<64x128xf32>
    %41 = tpu.matmul %38, %40, %cst_41 {dimension_numbers = #tpu.dot_dimension_numbers<[1], [0], [0], [1], [0, 0, 1, 1], [], []>} : vector<64x128xbf16>, vector<128x128xbf16>, vector<64x128xf32> -> vector<64x128xf32>
    %42 = arith.addf %35, %41 : vector<64x128xf32>
    %c0_42 = arith.constant 0 : index
    %c2_43 = arith.constant 2 : index
    %c0_44 = arith.constant 0 : index
    %c0_45 = arith.constant 0 : index
    %43 = vector.load %arg1[%c0_42, %c2_43, %c0_44, %c0_45] : memref<1x10x10x128xbf16, #tpu.memory_space<vmem>>, vector<1x8x8x128xbf16>
    %44 = vector.shape_cast %43 : vector<1x8x8x128xbf16> to vector<8x8x128xbf16>
    %45 = vector.shape_cast %44 : vector<8x8x128xbf16> to vector<64x128xbf16>
    %c6 = arith.constant 6 : index
    %c0_46 = arith.constant 0 : index
    %c0_47 = arith.constant 0 : index
    %46 = vector.load %arg2[%c6, %c0_46, %c0_47] : memref<9x128x128xbf16, #tpu.memory_space<vmem>>, vector<1x128x128xbf16>
    %47 = vector.shape_cast %46 : vector<1x128x128xbf16> to vector<128x128xbf16>
    %cst_48 = arith.constant dense<0.000000e+00> : vector<64x128xf32>
    %48 = tpu.matmul %45, %47, %cst_48 {dimension_numbers = #tpu.dot_dimension_numbers<[1], [0], [0], [1], [0, 0, 1, 1], [], []>} : vector<64x128xbf16>, vector<128x128xbf16>, vector<64x128xf32> -> vector<64x128xf32>
    %49 = arith.addf %42, %48 : vector<64x128xf32>
    %c0_49 = arith.constant 0 : index
    %c2_50 = arith.constant 2 : index
    %c1_51 = arith.constant 1 : index
    %c0_52 = arith.constant 0 : index
    %50 = vector.load %arg1[%c0_49, %c2_50, %c1_51, %c0_52] : memref<1x10x10x128xbf16, #tpu.memory_space<vmem>>, vector<1x8x8x128xbf16>
    %51 = vector.shape_cast %50 : vector<1x8x8x128xbf16> to vector<8x8x128xbf16>
    %52 = vector.shape_cast %51 : vector<8x8x128xbf16> to vector<64x128xbf16>
    %c7 = arith.constant 7 : index
    %c0_53 = arith.constant 0 : index
    %c0_54 = arith.constant 0 : index
    %53 = vector.load %arg2[%c7, %c0_53, %c0_54] : memref<9x128x128xbf16, #tpu.memory_space<vmem>>, vector<1x128x128xbf16>
    %54 = vector.shape_cast %53 : vector<1x128x128xbf16> to vector<128x128xbf16>
    %cst_55 = arith.constant dense<0.000000e+00> : vector<64x128xf32>
    %55 = tpu.matmul %52, %54, %cst_55 {dimension_numbers = #tpu.dot_dimension_numbers<[1], [0], [0], [1], [0, 0, 1, 1], [], []>} : vector<64x128xbf16>, vector<128x128xbf16>, vector<64x128xf32> -> vector<64x128xf32>
    %56 = arith.addf %49, %55 : vector<64x128xf32>
    %c0_56 = arith.constant 0 : index
    %c2_57 = arith.constant 2 : index
    %c2_58 = arith.constant 2 : index
    %c0_59 = arith.constant 0 : index
    %57 = vector.load %arg1[%c0_56, %c2_57, %c2_58, %c0_59] : memref<1x10x10x128xbf16, #tpu.memory_space<vmem>>, vector<1x8x8x128xbf16>
    %58 = vector.shape_cast %57 : vector<1x8x8x128xbf16> to vector<8x8x128xbf16>
    %59 = vector.shape_cast %58 : vector<8x8x128xbf16> to vector<64x128xbf16>
    %c8 = arith.constant 8 : index
    %c0_60 = arith.constant 0 : index
    %c0_61 = arith.constant 0 : index
    %60 = vector.load %arg2[%c8, %c0_60, %c0_61] : memref<9x128x128xbf16, #tpu.memory_space<vmem>>, vector<1x128x128xbf16>
    %61 = vector.shape_cast %60 : vector<1x128x128xbf16> to vector<128x128xbf16>
    %cst_62 = arith.constant dense<0.000000e+00> : vector<64x128xf32>
    %62 = tpu.matmul %59, %61, %cst_62 {dimension_numbers = #tpu.dot_dimension_numbers<[1], [0], [0], [1], [0, 0, 1, 1], [], []>} : vector<64x128xbf16>, vector<128x128xbf16>, vector<64x128xf32> -> vector<64x128xf32>
    %63 = arith.addf %56, %62 : vector<64x128xf32>
    %64 = vector.shape_cast %63 : vector<64x128xf32> to vector<1x8x8x128xf32>
    %65 = arith.truncf %64 : vector<1x8x8x128xf32> to vector<1x8x8x128xbf16>
    %c0_63 = arith.constant 0 : index
    %c0_64 = arith.constant 0 : index
    %c0_65 = arith.constant 0 : index
    %c0_66 = arith.constant 0 : index
    %66 = vector.load %arg3[%c0_63, %c0_64, %c0_65, %c0_66] : memref<1x8x8x128xbf16, #tpu.memory_space<vmem>>, vector<1x8x8x128xbf16>
    tpu.vector_store %arg3[%c0_63, %c0_64, %c0_65, %c0_66], %65 {strides = array<i32>} : memref<1x8x8x128xbf16, #tpu.memory_space<vmem>>, vector<1x8x8x128xbf16>,
    %cst_67 = arith.constant dense<0.000000e+00> : vector<128xf32>
    %67 = vector.multi_reduction <add>, %63, %cst_67 [0] : vector<64x128xf32> to vector<128xf32>
    %68 = vector.shape_cast %67 : vector<128xf32> to vector<1x128xf32>
    %69 = arith.mulf %63, %63 : vector<64x128xf32>
    %cst_68 = arith.constant dense<0.000000e+00> : vector<128xf32>
    %70 = vector.multi_reduction <add>, %69, %cst_68 [0] : vector<64x128xf32> to vector<128xf32>
    %71 = vector.shape_cast %70 : vector<128xf32> to vector<1x128xf32>
    %72 = tpu.concatenate %68, %71 in 0 : vector<1x128xf32>, vector<1x128xf32> -> vector<2x128xf32>
    %73 = vector.shape_cast %72 : vector<2x128xf32> to vector<1x2x128xf32>
    %c0_69 = arith.constant 0 : index
    %c0_70 = arith.constant 0 : index
    %c0_71 = arith.constant 0 : index
    %74 = vector.load %arg4[%c0_69, %c0_70, %c0_71] : memref<1x2x128xf32, #tpu.memory_space<vmem>>, vector<1x2x128xf32>
    tpu.vector_store %arg4[%c0_69, %c0_70, %c0_71], %73 {strides = array<i32>} : memref<1x2x128xf32, #tpu.memory_space<vmem>>, vector<1x2x128xf32>,
    return
  }
  func.func @transform_0(%arg0: i32) -> (i32, i32, i32, i32) {
    %c0_i32 = arith.constant 0 : i32
    %c0_i32_0 = arith.constant 0 : i32
    %c0_i32_1 = arith.constant 0 : i32
    %c0_i32_2 = arith.constant 0 : i32
    return %arg0, %c0_i32, %c0_i32_0, %c0_i32_1 : i32, i32, i32, i32
  }
  func.func @transform_1(%arg0: i32) -> (i32, i32, i32) {
    %c0_i32 = arith.constant 0 : i32
    %c0_i32_0 = arith.constant 0 : i32
    %c0_i32_1 = arith.constant 0 : i32
    %c0_i32_2 = arith.constant 0 : i32
    return %c0_i32, %c0_i32_0, %c0_i32_1 : i32, i32, i32
  }
  func.func @transform_2(%arg0: i32) -> (i32, i32, i32, i32) {
    %c0_i32 = arith.constant 0 : i32
    %c0_i32_0 = arith.constant 0 : i32
    %c0_i32_1 = arith.constant 0 : i32
    %c0_i32_2 = arith.constant 0 : i32
    return %arg0, %c0_i32, %c0_i32_0, %c0_i32_1 : i32, i32, i32, i32
  }
  func.func @transform_3(%arg0: i32) -> (i32, i32, i32) {
    %c0_i32 = arith.constant 0 : i32
    %c0_i32_0 = arith.constant 0 : i32
    %c0_i32_1 = arith.constant 0 : i32
    return %arg0, %c0_i32, %c0_i32_0 : i32, i32, i32
  }
}

</mosaic_0001>

<llo_original>
// kernel: cspx_forward.19
$region0: #{cspx_forward.19}
  #allocation0 [shape = 'u32[]', space=smem, size = 0x4, offset = 0x4, fixed_abs, tag = 'smem constant byte address 0x4 - core index']
  #allocation1 [shape = 'u32[72,128]{1,0:T(1,128)}', space=vmem, size = 0x9000, scoped, tag = 'internal scratch']
  %s0 = inlined_call_operand.vmem [shape: bf16[128,128], index: 0, kind: input, shape index: {}]
  %s1 = inlined_call_operand.vmem [shape: f32[1,128], index: 1, kind: input, shape index: {}]
  %s2 = inlined_call_operand.vmem [shape: f32[1,128], index: 2, kind: input, shape index: {}]
  %s3 = inlined_call_operand.vmem [shape: bf16[128,128], index: 3, kind: output, shape index: {}]
  %s4 = sld [smem:[#allocation0]]
  $region22: #{cspx_forward.19} parent=0
    _
  %s6 = ssub.s32 1, %s4
  %s7 = scalar_select 0, %s6, %s4
  // Predicated region
  $region2: #{cspx_forward.19} parent=0 // pred_check
    _
  $region3: #{cspx_forward.19} parent=0 // pred_check_branch
    %9 = sbr.rel (0) target = $region5
  $region4: #{cspx_forward.19} parent=0 // pred_region
    _
  $region5: #{cspx_forward.19} parent=0 // pred_fallthru
    _
  // Predicated region
  $region6: #{cspx_forward.19} parent=0 // pred_check
    _
  $region7: #{cspx_forward.19} parent=0 // pred_check_branch
    %11 = sbr.rel (0) target = $region9
  $region8: #{cspx_forward.19} parent=0 // pred_region
    _
  $region9: #{cspx_forward.19} parent=0 // pred_fallthru
    _
  // Predicated region
  $region10: #{cspx_forward.19} parent=0 // pred_check
    _
  $region11: #{cspx_forward.19} parent=0 // pred_check_branch
    %13 = sbr.rel (0) target = $region13
  $region12: #{cspx_forward.19} parent=0 // pred_region
    _
  $region13: #{cspx_forward.19} parent=0 // pred_fallthru
    _
  %v14 = vld [vmem:[%s0] sm:$0xf]
  %v15 = vld [vmem:[%s0 + $0x4] sm:$0xf]
  %v16 = vld [vmem:[%s0 + $0x8] sm:$0xf]
  %v17 = vld [vmem:[%s0 + $0xc] sm:$0xf]
  %v18 = vld [vmem:[%s0 + $0x10] sm:$0xf]
  %v19 = vld [vmem:[%s0 + $0x14] sm:$0xf]
  %v20 = vld [vmem:[%s0 + $0x18] sm:$0xf]
  %v21 = vld [vmem:[%s0 + $0x1c] sm:$0xf]
  %v22 = vld [vmem:[%s0 + $0x20] sm:$0xf]
  %v23 = vld [vmem:[%s0 + $0x24] sm:$0xf]
  %v24 = vld [vmem:[%s0 + $0x28] sm:$0xf]
  %v25 = vld [vmem:[%s0 + $0x2c] sm:$0xf]
  %v26 = vld [vmem:[%s0 + $0x30] sm:$0xf]
  %v27 = vld [vmem:[%s0 + $0x34] sm:$0xf]
  %v28 = vld [vmem:[%s0 + $0x38] sm:$0xf]
  %v29 = vld [vmem:[%s0 + $0x3c] sm:$0xf]
  %v30 = vunpack.c.l.bf16 %v14
  %v31 = vunpack.c.l.bf16 %v15
  %v32 = vunpack.c.l.bf16 %v16
  %v33 = vunpack.c.l.bf16 %v17
  %v34 = vunpack.c.l.bf16 %v18
  %v35 = vunpack.c.l.bf16 %v19
  %v36 = vunpack.c.l.bf16 %v20
  %v37 = vunpack.c.l.bf16 %v21
  %v38 = vunpack.c.l.bf16 %v22
  %v39 = vunpack.c.l.bf16 %v23
  %v40 = vunpack.c.l.bf16 %v24
  %v41 = vunpack.c.l.bf16 %v25
  %v42 = vunpack.c.l.bf16 %v26
  %v43 = vunpack.c.l.bf16 %v27
  %v44 = vunpack.c.l.bf16 %v28
  %v45 = vunpack.c.l.bf16 %v29
  %v46 = vld [vmem:[%s1] sm:$0x1]
  %v48 = vperm.slane %v46, 0
  %v50 = vmul.f32 %v30, %v48
  %v51 = vmul.f32 %v31, %v48
  %v52 = vmul.f32 %v32, %v48
  %v53 = vmul.f32 %v33, %v48
  %v54 = vmul.f32 %v34, %v48
  %v55 = vmul.f32 %v35, %v48
  %v56 = vmul.f32 %v36, %v48
  %v57 = vmul.f32 %v37, %v48
  %v58 = vmul.f32 %v38, %v48
  %v59 = vmul.f32 %v39, %v48
  %v60 = vmul.f32 %v40, %v48
  %v61 = vmul.f32 %v41, %v48
  %v62 = vmul.f32 %v42, %v48
  %v63 = vmul.f32 %v43, %v48
  %v64 = vmul.f32 %v44, %v48
  %v65 = vmul.f32 %v45, %v48
  %v66 = vld [vmem:[%s2] sm:$0x1]
  %v68 = vperm.slane %v66, 0
  %v70 = vadd.f32 %v50, %v68
  %v71 = vadd.f32 %v51, %v68
  %v72 = vadd.f32 %v52, %v68
  %v73 = vadd.f32 %v53, %v68
  %v74 = vadd.f32 %v54, %v68
  %v75 = vadd.f32 %v55, %v68
  %v76 = vadd.f32 %v56, %v68
  %v77 = vadd.f32 %v57, %v68
  %v78 = vadd.f32 %v58, %v68
  %v79 = vadd.f32 %v59, %v68
  %v80 = vadd.f32 %v60, %v68
  %v81 = vadd.f32 %v61, %v68
  %v82 = vadd.f32 %v62, %v68
  %v83 = vadd.f32 %v63, %v68
  %v84 = vadd.f32 %v64, %v68
  %v85 = vadd.f32 %v65, %v68
  %v86 = vmin.f32 %v70, 20.0
  %v87 = vmin.f32 %v71, 20.0
  %v88 = vmin.f32 %v72, 20.0
  %v89 = vmin.f32 %v73, 20.0
  %v90 = vmin.f32 %v74, 20.0
  %v91 = vmin.f32 %v75, 20.0
  %v92 = vmin.f32 %v76, 20.0
  %v93 = vmin.f32 %v77, 20.0
  %v94 = vmin.f32 %v78, 20.0
  %v95 = vmin.f32 %v79, 20.0
  %v96 = vmin.f32 %v80, 20.0
  %v97 = vmin.f32 %v81, 20.0
  %v98 = vmin.f32 %v82, 20.0
  %v99 = vmin.f32 %v83, 20.0
  %v100 = vmin.f32 %v84, 20.0
  %v101 = vmin.f32 %v85, 20.0
  %v102 = vmul.f32 %v86, 1.442695
  %v103 = vpow.pop %v102
  %v104 = vmul.f32 %v87, 1.442695
  %v105 = vpow.pop %v104
  %v106 = vmul.f32 %v88, 1.442695
  %v107 = vpow.pop %v106
  %v108 = vmul.f32 %v89, 1.442695
  %v109 = vpow.pop %v108
  %v110 = vmul.f32 %v90, 1.442695
  %v111 = vpow.pop %v110
  %v112 = vmul.f32 %v91, 1.442695
  %v113 = vpow.pop %v112
  %v114 = vmul.f32 %v92, 1.442695
  %v115 = vpow.pop %v114
  %v116 = vmul.f32 %v93, 1.442695
  %v117 = vpow.pop %v116
  %v118 = vmul.f32 %v94, 1.442695
  %v119 = vpow.pop %v118
  %v120 = vmul.f32 %v95, 1.442695
  %v121 = vpow.pop %v120
  %v122 = vmul.f32 %v96, 1.442695
  %v123 = vpow.pop %v122
  %v124 = vmul.f32 %v97, 1.442695
  %v125 = vpow.pop %v124
  %v126 = vmul.f32 %v98, 1.442695
  %v127 = vpow.pop %v126
  %v128 = vmul.f32 %v99, 1.442695
  %v129 = vpow.pop %v128
  %v130 = vmul.f32 %v100, 1.442695
  %v131 = vpow.pop %v130
  %v132 = vmul.f32 %v101, 1.442695
  %v133 = vpow.pop %v132
  %v134 = vadd.f32 %v103, 1.0
  %v135 = vadd.f32 %v105, 1.0
  %v136 = vadd.f32 %v107, 1.0
  %v137 = vadd.f32 %v109, 1.0
  %v138 = vadd.f32 %v111, 1.0
  %v139 = vadd.f32 %v113, 1.0
  %v140 = vadd.f32 %v115, 1.0
  %v141 = vadd.f32 %v117, 1.0
  %v142 = vadd.f32 %v119, 1.0
  %v143 = vadd.f32 %v121, 1.0
  %v144 = vadd.f32 %v123, 1.0
  %v145 = vadd.f32 %v125, 1.0
  %v146 = vadd.f32 %v127, 1.0
  %v147 = vadd.f32 %v129, 1.0
  %v148 = vadd.f32 %v131, 1.0
  %v149 = vadd.f32 %v133, 1.0
  %v150 = vmul.f32 %v134, %v134
  %v151 = vmul.f32 %v135, %v135
  %v152 = vmul.f32 %v136, %v136
  %v153 = vmul.f32 %v137, %v137
  %v154 = vmul.f32 %v138, %v138
  %v155 = vmul.f32 %v139, %v139
  %v156 = vmul.f32 %v140, %v140
  %v157 = vmul.f32 %v141, %v141
  %v158 = vmul.f32 %v142, %v142
  %v159 = vmul.f32 %v143, %v143
  %v160 = vmul.f32 %v144, %v144
  %v161 = vmul.f32 %v145, %v145
  %v162 = vmul.f32 %v146, %v146
  %v163 = vmul.f32 %v147, %v147
  %v164 = vmul.f32 %v148, %v148
  %v165 = vmul.f32 %v149, %v149
  %v166 = vadd.f32 %v150, 1.0
  %v167 = vadd.f32 %v151, 1.0
  %v168 = vadd.f32 %v152, 1.0
  %v169 = vadd.f32 %v153, 1.0
  %v170 = vadd.f32 %v154, 1.0
  %v171 = vadd.f32 %v155, 1.0
  %v172 = vadd.f32 %v156, 1.0
  %v173 = vadd.f32 %v157, 1.0
  %v174 = vadd.f32 %v158, 1.0
  %v175 = vadd.f32 %v159, 1.0
  %v176 = vadd.f32 %v160, 1.0
  %v177 = vadd.f32 %v161, 1.0
  %v178 = vadd.f32 %v162, 1.0
  %v179 = vadd.f32 %v163, 1.0
  %v180 = vadd.f32 %v164, 1.0
  %v181 = vadd.f32 %v165, 1.0
  %v182 = vrcp.pop %v166
  %v183 = vrcp.pop %v167
  %v184 = vrcp.pop %v168
  %v185 = vrcp.pop %v169
  %v186 = vrcp.pop %v170
  %v187 = vrcp.pop %v171
  %v188 = vrcp.pop %v172
  %v189 = vrcp.pop %v173
  %v190 = vrcp.pop %v174
  %v191 = vrcp.pop %v175
  %v192 = vrcp.pop %v176
  %v193 = vrcp.pop %v177
  %v194 = vrcp.pop %v178
  %v195 = vrcp.pop %v179
  %v196 = vrcp.pop %v180
  %v197 = vrcp.pop %v181
  %v198 = vmul.f32 %v182, 2.0
  %v199 = vmul.f32 %v183, 2.0
  %v200 = vmul.f32 %v184, 2.0
  %v201 = vmul.f32 %v185, 2.0
  %v202 = vmul.f32 %v186, 2.0
  %v203 = vmul.f32 %v187, 2.0
  %v204 = vmul.f32 %v188, 2.0
  %v205 = vmul.f32 %v189, 2.0
  %v206 = vmul.f32 %v190, 2.0
  %v207 = vmul.f32 %v191, 2.0
  %v208 = vmul.f32 %v192, 2.0
  %v209 = vmul.f32 %v193, 2.0
  %v210 = vmul.f32 %v194, 2.0
  %v211 = vmul.f32 %v195, 2.0
  %v212 = vmul.f32 %v196, 2.0
  %v213 = vmul.f32 %v197, 2.0
  %v214 = vsub.f32 1.0, %v198
  %v215 = vsub.f32 1.0, %v199
  %v216 = vsub.f32 1.0, %v200
  %v217 = vsub.f32 1.0, %v201
  %v218 = vsub.f32 1.0, %v202
  %v219 = vsub.f32 1.0, %v203
  %v220 = vsub.f32 1.0, %v204
  %v221 = vsub.f32 1.0, %v205
  %v222 = vsub.f32 1.0, %v206
  %v223 = vsub.f32 1.0, %v207
  %v224 = vsub.f32 1.0, %v208
  %v225 = vsub.f32 1.0, %v209
  %v226 = vsub.f32 1.0, %v210
  %v227 = vsub.f32 1.0, %v211
  %v228 = vsub.f32 1.0, %v212
  %v229 = vsub.f32 1.0, %v213
  %v230 = vmul.f32 %v70, %v214
  %v231 = vmul.f32 %v71, %v215
  %v232 = vmul.f32 %v72, %v216
  %v233 = vmul.f32 %v73, %v217
  %v234 = vmul.f32 %v74, %v218
  %v235 = vmul.f32 %v75, %v219
  %v236 = vmul.f32 %v76, %v220
  %v237 = vmul.f32 %v77, %v221
  %v238 = vmul.f32 %v78, %v222
  %v239 = vmul.f32 %v79, %v223
  %v240 = vmul.f32 %v80, %v224
  %v241 = vmul.f32 %v81, %v225
  %v242 = vmul.f32 %v82, %v226
  %v243 = vmul.f32 %v83, %v227
  %v244 = vmul.f32 %v84, %v228
  %v245 = vmul.f32 %v85, %v229
  %v246 = vpack.c.bf16 %v230, %v230
  %v247 = vpack.c.bf16 %v231, %v231
  %v248 = vpack.c.bf16 %v232, %v232
  %v249 = vpack.c.bf16 %v233, %v233
  %v250 = vpack.c.bf16 %v234, %v234
  %v251 = vpack.c.bf16 %v235, %v235
  %v252 = vpack.c.bf16 %v236, %v236
  %v253 = vpack.c.bf16 %v237, %v237
  %v254 = vpack.c.bf16 %v238, %v238
  %v255 = vpack.c.bf16 %v239, %v239
  %v256 = vpack.c.bf16 %v240, %v240
  %v257 = vpack.c.bf16 %v241, %v241
  %v258 = vpack.c.bf16 %v242, %v242
  %v259 = vpack.c.bf16 %v243, %v243
  %v260 = vpack.c.bf16 %v244, %v244
  %v261 = vpack.c.bf16 %v245, %v245
  %262 = vst [vmem:[%s3] sm:$0xf] %v246
  %263 = vst [vmem:[%s3 + $0x4] sm:$0xf] %v247
  %264 = vst [vmem:[%s3 + $0x8] sm:$0xf] %v248
  %265 = vst [vmem:[%s3 + $0xc] sm:$0xf] %v249
  %266 = vst [vmem:[%s3 + $0x10] sm:$0xf] %v250
  %267 = vst [vmem:[%s3 + $0x14] sm:$0xf] %v251
  %268 = vst [vmem:[%s3 + $0x18] sm:$0xf] %v252
  %269 = vst [vmem:[%s3 + $0x1c] sm:$0xf] %v253
  %270 = vst [vmem:[%s3 + $0x20] sm:$0xf] %v254
  %271 = vst [vmem:[%s3 + $0x24] sm:$0xf] %v255
  %272 = vst [vmem:[%s3 + $0x28] sm:$0xf] %v256
  %273 = vst [vmem:[%s3 + $0x2c] sm:$0xf] %v257
  %274 = vst [vmem:[%s3 + $0x30] sm:$0xf] %v258
  %275 = vst [vmem:[%s3 + $0x34] sm:$0xf] %v259
  %276 = vst [vmem:[%s3 + $0x38] sm:$0xf] %v260
  %277 = vst [vmem:[%s3 + $0x3c] sm:$0xf] %v261
  // Predicated region
  $region14: #{cspx_forward.19} parent=0 // pred_check
    _
  $region15: #{cspx_forward.19} parent=0 // pred_check_branch
    %279 = sbr.rel (0) target = $region17
  $region16: #{cspx_forward.19} parent=0 // pred_region
    _
  $region17: #{cspx_forward.19} parent=0 // pred_fallthru
    _
  // Predicated region
  $region18: #{cspx_forward.19} parent=0 // pred_check
    _
  $region19: #{cspx_forward.19} parent=0 // pred_check_branch
    %281 = sbr.rel (0) target = $region21
  $region20: #{cspx_forward.19} parent=0 // pred_region
    _
  $region21: #{cspx_forward.19} parent=0 // pred_fallthru
    _

// kernel: cspx_forward.18
$region0: #{cspx_forward.18}
  #allocation0 [shape = 'u32[]', space=smem, size = 0x4, offset = 0x4, fixed_abs, tag = 'smem constant byte address 0x4 - core index']
  #allocation1 [shape = 'u32[72,128]{1,0:T(1,128)}', space=vmem, size = 0x9000, scoped, tag = 'internal scratch']
  %s0 = inlined_call_operand.vmem [shape: bf16[8,9,9,128], index: 0, kind: input, shape index: {}]
  %s1 = inlined_call_operand.vmem [shape: bf16[9,128,128], index: 1, kind: input, shape index: {}]
  %s2 = inlined_call_operand.vmem [shape: bf16[2,8,8,128], index: 2, kind: output, shape index: {0}]
  %s3 = inlined_call_operand.vmem [shape: f32[2,2,128], index: 3, kind: output, shape index: {1}]
  %4 = xla_tuple %s2, %s3
  %s5 = sld [smem:[#allocation0]]
  $region49: #{cspx_forward.18} parent=0
    _
  %s7 = ssub.s32 1, %s5
  %s8 = scalar_select 0, %s7, %s5
  loop: start=0, step=1, limit=4
  $region2: #{cspx_forward.18} parent=0 // loop_pre_header
    _
  $region3: #{cspx_forward.18} parent=0 // loop_header
    %s10 = sphi 0, %s14
    %p11 = scmp.ge.s32.totalorder %s10, 4
    %s20 = sphi 0, %s22
    %s23 = sphi 0, %s20
    %s24 = sphi 0, %s23
    %s40 = sphi 0, %s24
    %s44 = sphi 0, %s44
    %s46 = sphi 0, %s44
    %s47 = sphi 0, %s46
    %s61 = sphi 0, %s47
    %s67 = sphi 0, %s69
    %s70 = sphi 0, %s67
    %s71 = sphi 0, %s70
    %s87 = sphi 0, %s71
    %s93 = sphi 0, %s95
    %s96 = sphi 0, %s93
    %s97 = sphi 0, %s96
    %s113 = sphi 0, %s97
  $region4: #{cspx_forward.18} parent=0 // loop_header_branch
    %13 = sbr.rel (%p11) target = $region8
  $region5: #{cspx_forward.18} parent=0 // loop_body
    %s15 = ssub.s32 %s10, 1
    %s16 = ssub.s32 %s10, 2
    %s17 = sadd.s32 %s10, 1
    %s18 = ssub.s32 %s10, %s17
    %p19 = scmp.eq.s32.totalorder %s18, 0
    %s21 = sadd.s32 %s20, 1
    %s22 = scalar_select %p19, %s20, %s21
    %p25 = pneg %p19
    %p26 = scmp.eq.s32.totalorder %s10, 1
    %p27 = por %p25, %p26
    %p28 = scmp.ne.s32.totalorder %s20, %s23
    %p29 = scmp.eq.s32.totalorder %s10, 0
    %p30 = por %p28, %p29
    %p31 = scmp.ne.s32.totalorder %s20, %s23
    %p32 = scmp.eq.s32.totalorder %s15, 1
    %p33 = por %p31, %p32
    %p34 = scmp.ne.s32.totalorder %s23, %s24
    %p35 = scmp.eq.s32.totalorder %s15, 0
    %p36 = por %p34, %p35
    %p37 = scmp.ne.s32.totalorder %s23, %s24
    %p38 = scmp.eq.s32.totalorder %s16, 1
    %p39 = por %p37, %p38
    %p41 = scmp.ne.s32.totalorder %s24, %s40
    %p42 = scmp.eq.s32.totalorder %s16, 0
    %p43 = por %p41, %p42
    %s45 = sadd.s32 %s44, 1
    %p48 = scmp.eq.s32.totalorder %s10, 1
    %p49 = scmp.ne.s32.totalorder %s44, %s46
    %p50 = scmp.eq.s32.totalorder %s10, 0
    %p51 = por %p49, %p50
    %p52 = scmp.ne.s32.totalorder %s44, %s46
    %p53 = scmp.eq.s32.totalorder %s15, 1
    %p54 = por %p52, %p53
    %p55 = scmp.ne.s32.totalorder %s46, %s47
    %p56 = scmp.eq.s32.totalorder %s15, 0
    %p57 = por %p55, %p56
    %p58 = scmp.ne.s32.totalorder %s46, %s47
    %p59 = scmp.eq.s32.totalorder %s16, 1
    %p60 = por %p58, %p59
    %p62 = scmp.ne.s32.totalorder %s47, %s61
    %p63 = scmp.eq.s32.totalorder %s16, 0
    %p64 = por %p62, %p63
    %s65 = ssub.s32 %s10, %s17
    %p66 = scmp.eq.s32.totalorder %s65, 0
    %s68 = sadd.s32 %s67, 1
    %s69 = scalar_select %p66, %s67, %s68
    %p72 = pneg %p66
    %p73 = scmp.eq.s32.totalorder %s10, 1
    %p74 = por %p72, %p73
    %p75 = scmp.ne.s32.totalorder %s67, %s70
    %p76 = scmp.eq.s32.totalorder %s10, 0
    %p77 = por %p75, %p76
    %p78 = scmp.ne.s32.totalorder %s67, %s70
    %p79 = scmp.eq.s32.totalorder %s15, 1
    %p80 = por %p78, %p79
    %p81 = scmp.ne.s32.totalorder %s70, %s71
    %p82 = scmp.eq.s32.totalorder %s15, 0
    %p83 = por %p81, %p82
    %p84 = scmp.ne.s32.totalorder %s70, %s71
    %p85 = scmp.eq.s32.totalorder %s16, 1
    %p86 = por %p84, %p85
    %p88 = scmp.ne.s32.totalorder %s71, %s87
    %p89 = scmp.eq.s32.totalorder %s16, 0
    %p90 = por %p88, %p89
    %s91 = ssub.s32 %s10, %s17
    %p92 = scmp.eq.s32.totalorder %s91, 0
    %s94 = sadd.s32 %s93, 1
    %s95 = scalar_select %p92, %s93, %s94
    %p98 = pneg %p92
    %p99 = scmp.eq.s32.totalorder %s10, 1
    %p100 = por %p98, %p99
    %p101 = scmp.ne.s32.totalorder %s93, %s96
    %p102 = scmp.eq.s32.totalorder %s10, 0
    %p103 = por %p101, %p102
    %p104 = scmp.ne.s32.totalorder %s93, %s96
    %p105 = scmp.eq.s32.totalorder %s15, 1
    %p106 = por %p104, %p105
    %p107 = scmp.ne.s32.totalorder %s96, %s97
    %p108 = scmp.eq.s32.totalorder %s15, 0
    %p109 = por %p107, %p108
    %p110 = scmp.ne.s32.totalorder %s96, %s97
    %p111 = scmp.eq.s32.totalorder %s16, 1
    %p112 = por %p110, %p111
    %p114 = scmp.ne.s32.totalorder %s97, %s113
    %p115 = scmp.eq.s32.totalorder %s16, 0
    %p116 = por %p114, %p115
    %p117 = scmp.le.s32.totalorder 1, %s10
    %p118 = scmp.lt.s32.totalorder %s10, 3
    %p119 = pnand %p117, %p118
    %p120 = pneg %p119
    // Predicated region
    $region9: #{cspx_forward.18} parent=5 // pred_check
      _
    $region10: #{cspx_forward.18} parent=5 // pred_check_branch
      %122 = sbr.rel (%p119) target = $region12
    $region11: #{cspx_forward.18} parent=5 // pred_region
      %s123 = ssub.s32 %s10, 1
      // Predicated region
      $region13: #{cspx_forward.18} parent=11 // pred_check
        %p124 = pneg %p57
      $region14: #{cspx_forward.18} parent=11 // pred_check_branch
        %126 = sbr.rel (%p124) target = $region16
      $region15: #{cspx_forward.18} parent=11 // pred_region
        _
      $region16: #{cspx_forward.18} parent=11 // pred_fallthru
        _
    $region12: #{cspx_forward.18} parent=5 // pred_fallthru
      _
    %p127 = scmp.lt.s32.totalorder %s10, 2
    // Predicated region
    $region17: #{cspx_forward.18} parent=5 // pred_check
      %p128 = pneg %p127
    $region18: #{cspx_forward.18} parent=5 // pred_check_branch
      %130 = sbr.rel (%p128) target = $region20
    $region19: #{cspx_forward.18} parent=5 // pred_region
      // Predicated region
      $region21: #{cspx_forward.18} parent=19 // pred_check
        %p131 = pneg %p30
      $region22: #{cspx_forward.18} parent=19 // pred_check_branch
        %133 = sbr.rel (%p131) target = $region24
      $region23: #{cspx_forward.18} parent=19 // pred_region
        %s134 = smul.u32 4, %s10
        %p135 = scmp.lt.s32.totalorder %s134, 7
        %s136 = scalar_select %p135, %s134, 7
        %s137 = smul.addr %s136, 18
        %s138 = smul.addr %s137, 4
        %s139 = scalar_lea.vmem %s0, %s138
        %s140 = smul.u32 4, %s10
      $region24: #{cspx_forward.18} parent=19 // pred_fallthru
        _
    $region20: #{cspx_forward.18} parent=5 // pred_fallthru
      _
    %p141 = scmp.le.s32.totalorder 1, %s10
    %p142 = scmp.lt.s32.totalorder %s10, 3
    %p143 = pnand %p141, %p142
    %p144 = pneg %p143
    // Predicated region
    $region25: #{cspx_forward.18} parent=5 // pred_check
      _
    $region26: #{cspx_forward.18} parent=5 // pred_check_branch
      %146 = sbr.rel (%p143) target = $region28
    $region27: #{cspx_forward.18} parent=5 // pred_region
      %s147 = ssub.s32 %s10, 1
      %s148 = smul.u32 4, %s15
      %p149 = scmp.lt.s32.totalorder %s148, 7
      %s150 = scalar_select %p149, %s148, 7
      %s151 = smul.addr %s150, 18
      %s152 = smul.addr %s151, 4
      %s153 = scalar_lea.vmem %s0, %s152
      %p154 = pneg %p36
      %p155 = pneg %p33
      %p156 = pneg %p57
      %p157 = pneg %p54
      %p158 = pneg %p83
      %p159 = pneg %p80
      %p160 = scmp.lt.s32.totalorder %s15, 1
      %s161 = scalar_select %p160, %s15, 1
      %s162 = smul.addr %s161, 8
      %s163 = smul.addr %s162, 4
      %s164 = scalar_lea.vmem %s2, %s163
      %p165 = pneg %p109
      %p166 = pneg %p106
      %p167 = scmp.lt.s32.totalorder %s15, 1
      %s168 = scalar_select %p167, %s15, 1
      %s169 = smul.addr %s168, 2
      %s170 = scalar_lea.vmem %s3, %s169
      %s171 = smul.u32 4, %s15
      %p172 = scmp.lt.s32.totalorder %s171, 7
      %s173 = scalar_select %p172, %s171, 7
      %s174 = smul.addr %s173, 18
      %s175 = smul.addr %s174, 4
      %s176 = scalar_lea.vmem %s0, %s175
      %s177 = smul.u32 4, %s15
      %p178 = scmp.lt.s32.totalorder %s15, 1
      %s179 = scalar_select %p178, %s15, 1
      %s180 = smul.addr %s179, 8
      %s181 = smul.addr %s180, 4
      %s182 = scalar_lea.vmem %s2, %s181
      %p183 = scmp.lt.s32.totalorder %s15, 1
      %s184 = scalar_select %p183, %s15, 1
      %s185 = smul.addr %s184, 2
      %s186 = scalar_lea.vmem %s3, %s185
      %v187 = vld [vmem:[%s176] sm:$0xf]
      %v188 = vld [vmem:[%s176 + $0x8] sm:$0xf]
      %v189 = vld [vmem:[%s176 + $0x10] sm:$0xf]
      %v190 = vld [vmem:[%s176 + $0x18] sm:$0xf]
      %v191 = vld [vmem:[%s176 + $0x20] sm:$0xf]
      %v192 = vld [vmem:[%s176 + $0x28] sm:$0xf]
      %v193 = vld [vmem:[%s176 + $0x30] sm:$0xf]
      %v194 = vld [vmem:[%s176 + $0x38] sm:$0xf]
      %v195 = vld [vmem:[%s1] sm:$0xf]
      %v196 = vld [vmem:[%s1 + $0x4] sm:$0xf]
      %v197 = vld [vmem:[%s1 + $0x8] sm:$0xf]
      %v198 = vld [vmem:[%s1 + $0xc] sm:$0xf]
      %v199 = vld [vmem:[%s1 + $0x10] sm:$0xf]
      %v200 = vld [vmem:[%s1 + $0x14] sm:$0xf]
      %v201 = vld [vmem:[%s1 + $0x18] sm:$0xf]
      %v202 = vld [vmem:[%s1 + $0x1c] sm:$0xf]
      %v203 = vld [vmem:[%s1 + $0x20] sm:$0xf]
      %v204 = vld [vmem:[%s1 + $0x24] sm:$0xf]
      %v205 = vld [vmem:[%s1 + $0x28] sm:$0xf]
      %v206 = vld [vmem:[%s1 + $0x2c] sm:$0xf]
      %v207 = vld [vmem:[%s1 + $0x30] sm:$0xf]
      %v208 = vld [vmem:[%s1 + $0x34] sm:$0xf]
      %v209 = vld [vmem:[%s1 + $0x38] sm:$0xf]
      %v210 = vld [vmem:[%s1 + $0x3c] sm:$0xf]
      %s211 = scalar_lea.vmem %s176, 72
      %v212 = vld [vmem:[%s211] sm:$0xf]
      %v213 = vld [vmem:[%s211 + $0x8] sm:$0xf]
      %v214 = vld [vmem:[%s211 + $0x10] sm:$0xf]
      %v215 = vld [vmem:[%s211 + $0x18] sm:$0xf]
      %v216 = vld [vmem:[%s211 + $0x20] sm:$0xf]
      %v217 = vld [vmem:[%s211 + $0x28] sm:$0xf]
      %v218 = vld [vmem:[%s211 + $0x30] sm:$0xf]
      %v219 = vld [vmem:[%s211 + $0x38] sm:$0xf]
      %s220 = scalar_lea.vmem %s1, 64
      %v221 = vld [vmem:[%s220] sm:$0xf]
      %v222 = vld [vmem:[%s220 + $0x4] sm:$0xf]
      %v223 = vld [vmem:[%s220 + $0x8] sm:$0xf]
      %v224 = vld [vmem:[%s220 + $0xc] sm:$0xf]
      %v225 = vld [vmem:[%s220 + $0x10] sm:$0xf]
      %v226 = vld [vmem:[%s220 + $0x14] sm:$0xf]
      %v227 = vld [vmem:[%s220 + $0x18] sm:$0xf]
      %v228 = vld [vmem:[%s220 + $0x1c] sm:$0xf]
      %v229 = vld [vmem:[%s220 + $0x20] sm:$0xf]
      %v230 = vld [vmem:[%s220 + $0x24] sm:$0xf]
      %v231 = vld [vmem:[%s220 + $0x28] sm:$0xf]
      %v232 = vld [vmem:[%s220 + $0x2c] sm:$0xf]
      %v233 = vld [vmem:[%s220 + $0x30] sm:$0xf]
      %v234 = vld [vmem:[%s220 + $0x34] sm:$0xf]
      %v235 = vld [vmem:[%s220 + $0x38] sm:$0xf]
      %v236 = vld [vmem:[%s220 + $0x3c] sm:$0xf]
      %v245 = vunpack.c.l.b16 %v212
      %v246 = vunpack.c.l.b16 %v213
      %v247 = vunpack.c.l.b16 %v214
      %v248 = vunpack.c.l.b16 %v215
      %v249 = vunpack.c.l.b16 %v216
      %v250 = vunpack.c.l.b16 %v217
      %v251 = vunpack.c.l.b16 %v218
      %v252 = vunpack.c.l.b16 %v219
      %v253 = vpack.c.b16 %v246, %v245
      %v254 = vpack.c.b16 %v248, %v247
      %v255 = vpack.c.b16 %v250, %v249
      %v256 = vpack.c.b16 %v252, %v251
      %v277 = vunpack.c.l.b16 %v221
      %v278 = vunpack.c.l.b16 %v222
      %v279 = vunpack.c.l.b16 %v223
      %v280 = vunpack.c.l.b16 %v224
      %v281 = vunpack.c.l.b16 %v225
      %v282 = vunpack.c.l.b16 %v226
      %v283 = vunpack.c.l.b16 %v227
      %v284 = vunpack.c.l.b16 %v228
      %v285 = vunpack.c.l.b16 %v229
      %v286 = vunpack.c.l.b16 %v230
      %v287 = vunpack.c.l.b16 %v231
      %v288 = vunpack.c.l.b16 %v232
      %v289 = vunpack.c.l.b16 %v233
      %v290 = vunpack.c.l.b16 %v234
      %v291 = vunpack.c.l.b16 %v235
      %v292 = vunpack.c.l.b16 %v236
      %v293 = vpack.c.b16 %v278, %v277
      %v294 = vpack.c.b16 %v280, %v279
      %v295 = vpack.c.b16 %v282, %v281
      %v296 = vpack.c.b16 %v284, %v283
      %v297 = vpack.c.b16 %v286, %v285
      %v298 = vpack.c.b16 %v288, %v287
      %v299 = vpack.c.b16 %v290, %v289
      %v300 = vpack.c.b16 %v292, %v291
      %309 = vmatpush.bf16.msra.mxu0 %v300
      %310 = vmatpush.bf16.msra.mxu0 %v299
      %311 = vmatpush.bf16.msra.mxu0 %v298
      %312 = vmatpush.bf16.msra.mxu0 %v297
      %313 = vmatpush.bf16.msra.mxu0 %v296
      %314 = vmatpush.bf16.msra.mxu0 %v295
      %315 = vmatpush.bf16.msra.mxu0 %v294
      %316 = vmatpush.bf16.msra.mxu0 %v293
      %317 = vmatmul.bf16.gmra.mxu0 %v253
      %v318 = vpop.f32.mrf.mxu0
      %v319 = vadd.f32 0.0, %v318
      %v320 = vpop.f32.mrf.mxu0
      %v321 = vadd.f32 0.0, %v320
      %322 = vmatmul.bf16.gmra.mxu0 %v254
      %v323 = vpop.f32.mrf.mxu0
      %v324 = vadd.f32 0.0, %v323
      %v325 = vpop.f32.mrf.mxu0
      %v326 = vadd.f32 0.0, %v325
      %327 = vmatmul.bf16.gmra.mxu0 %v255
      %v328 = vpop.f32.mrf.mxu0
      %v329 = vadd.f32 0.0, %v328
      %v330 = vpop.f32.mrf.mxu0
      %v331 = vadd.f32 0.0, %v330
      %332 = vmatmul.bf16.gmra.mxu0 %v256
      %v333 = vpop.f32.mrf.mxu0
      %v334 = vadd.f32 0.0, %v333
      %v335 = vpop.f32.mrf.mxu0
      %v336 = vadd.f32 0.0, %v335
      %337 = vdwg.mxu0
      %v346 = vunpack.c.l.b16 %v187
      %v347 = vunpack.c.l.b16 %v188
      %v348 = vunpack.c.l.b16 %v189
      %v349 = vunpack.c.l.b16 %v190
      %v350 = vunpack.c.l.b16 %v191
      %v351 = vunpack.c.l.b16 %v192
      %v352 = vunpack.c.l.b16 %v193
      %v353 = vunpack.c.l.b16 %v194
      %v354 = vpack.c.b16 %v347, %v346
      %v355 = vpack.c.b16 %v349, %v348
      %v356 = vpack.c.b16 %v351, %v350
      %v357 = vpack.c.b16 %v353, %v352
      %v378 = vunpack.c.l.b16 %v195
      %v379 = vunpack.c.l.b16 %v196
      %v380 = vunpack.c.l.b16 %v197
      %v381 = vunpack.c.l.b16 %v198
      %v382 = vunpack.c.l.b16 %v199
      %v383 = vunpack.c.l.b16 %v200
      %v384 = vunpack.c.l.b16 %v201
      %v385 = vunpack.c.l.b16 %v202
      %v386 = vunpack.c.l.b16 %v203
      %v387 = vunpack.c.l.b16 %v204
      %v388 = vunpack.c.l.b16 %v205
      %v389 = vunpack.c.l.b16 %v206
      %v390 = vunpack.c.l.b16 %v207
      %v391 = vunpack.c.l.b16 %v208
      %v392 = vunpack.c.l.b16 %v209
      %v393 = vunpack.c.l.b16 %v210
      %v394 = vpack.c.b16 %v379, %v378
      %v395 = vpack.c.b16 %v381, %v380
      %v396 = vpack.c.b16 %v383, %v382
      %v397 = vpack.c.b16 %v385, %v384
      %v398 = vpack.c.b16 %v387, %v386
      %v399 = vpack.c.b16 %v389, %v388
      %v400 = vpack.c.b16 %v391, %v390
      %v401 = vpack.c.b16 %v393, %v392
      %410 = vmatpush.bf16.msra.mxu0 %v401
      %411 = vmatpush.bf16.msra.mxu0 %v400
      %412 = vmatpush.bf16.msra.mxu0 %v399
      %413 = vmatpush.bf16.msra.mxu0 %v398
      %414 = vmatpush.bf16.msra.mxu0 %v397
      %415 = vmatpush.bf16.msra.mxu0 %v396
      %416 = vmatpush.bf16.msra.mxu0 %v395
      %417 = vmatpush.bf16.msra.mxu0 %v394
      %418 = vmatmul.bf16.gmra.mxu0 %v354
      %v419 = vpop.f32.mrf.mxu0
      %v420 = vadd.f32 %v319, %v419
      %v421 = vpop.f32.mrf.mxu0
      %v422 = vadd.f32 %v321, %v421
      %423 = vmatmul.bf16.gmra.mxu0 %v355
      %v424 = vpop.f32.mrf.mxu0
      %v425 = vadd.f32 %v324, %v424
      %v426 = vpop.f32.mrf.mxu0
      %v427 = vadd.f32 %v326, %v426
      %428 = vmatmul.bf16.gmra.mxu0 %v356
      %v429 = vpop.f32.mrf.mxu0
      %v430 = vadd.f32 %v329, %v429
      %v431 = vpop.f32.mrf.mxu0
      %v432 = vadd.f32 %v331, %v431
      %433 = vmatmul.bf16.gmra.mxu0 %v357
      %v434 = vpop.f32.mrf.mxu0
      %v435 = vadd.f32 %v334, %v434
      %v436 = vpop.f32.mrf.mxu0
      %v437 = vadd.f32 %v336, %v436
      %438 = vdwg.mxu0
      %v439 = vld [vmem:[%s176] sm:$0xf]
      %v440 = vld [vmem:[%s176 + $0x4] sm:$0x1]
      %v441 = vld [vmem:[%s176 + $0x8] sm:$0xf]
      %v442 = vld [vmem:[%s176 + $0xc] sm:$0x1]
      %v443 = vld [vmem:[%s176 + $0x10] sm:$0xf]
      %v444 = vld [vmem:[%s176 + $0x14] sm:$0x1]
      %v445 = vld [vmem:[%s176 + $0x18] sm:$0xf]
      %v446 = vld [vmem:[%s176 + $0x1c] sm:$0x1]
      %v447 = vld [vmem:[%s176 + $0x20] sm:$0xf]
      %v448 = vld [vmem:[%s176 + $0x24] sm:$0x1]
      %v449 = vld [vmem:[%s176 + $0x28] sm:$0xf]
      %v450 = vld [vmem:[%s176 + $0x2c] sm:$0x1]
      %v451 = vld [vmem:[%s176 + $0x30] sm:$0xf]
      %v452 = vld [vmem:[%s176 + $0x34] sm:$0x1]
      %v453 = vld [vmem:[%s176 + $0x38] sm:$0xf]
      %v454 = vld [vmem:[%s176 + $0x3c] sm:$0x1]
      %vm455 = vsmask.f32 3328
      %vm456 = vsmask.f32 7440
      %vm457 = vmor %vm455, %vm456
      %v459 = vshrl.u32 %v439, 16
      %v461 = vrot.slane %v459, 4
      %v462 = vshll.u32 %v439, 16
      %v464 = vrot.slane %v462, 5
      %v465 = vor.u32 %v461, %v464
      %v466 = vrot.slane %v465, 4
      %v468 = vshll.u32 %v440, 16
      %v470 = vrot.slane %v468, 5
      %v471 = vsel %vm457, %v466, %v470
      %v473 = vshrl.u32 %v441, 16
      %v475 = vrot.slane %v473, 4
      %v476 = vshll.u32 %v441, 16
      %v478 = vrot.slane %v476, 5
      %v479 = vor.u32 %v475, %v478
      %v480 = vrot.slane %v479, 4
      %v482 = vshll.u32 %v442, 16
      %v484 = vrot.slane %v482, 5
      %v485 = vsel %vm457, %v480, %v484
      %v487 = vshrl.u32 %v443, 16
      %v489 = vrot.slane %v487, 4
      %v490 = vshll.u32 %v443, 16
      %v492 = vrot.slane %v490, 5
      %v493 = vor.u32 %v489, %v492
      %v494 = vrot.slane %v493, 4
      %v496 = vshll.u32 %v444, 16
      %v498 = vrot.slane %v496, 5
      %v499 = vsel %vm457, %v494, %v498
      %v501 = vshrl.u32 %v445, 16
      %v503 = vrot.slane %v501, 4
      %v504 = vshll.u32 %v445, 16
      %v506 = vrot.slane %v504, 5
      %v507 = vor.u32 %v503, %v506
      %v508 = vrot.slane %v507, 4
      %v510 = vshll.u32 %v446, 16
      %v512 = vrot.slane %v510, 5
      %v513 = vsel %vm457, %v508, %v512
      %v515 = vshrl.u32 %v447, 16
      %v517 = vrot.slane %v515, 4
      %v518 = vshll.u32 %v447, 16
      %v520 = vrot.slane %v518, 5
      %v521 = vor.u32 %v517, %v520
      %v522 = vrot.slane %v521, 4
      %v524 = vshll.u32 %v448, 16
      %v526 = vrot.slane %v524, 5
      %v527 = vsel %vm457, %v522, %v526
      %v529 = vshrl.u32 %v449, 16
      %v531 = vrot.slane %v529, 4
      %v532 = vshll.u32 %v449, 16
      %v534 = vrot.slane %v532, 5
      %v535 = vor.u32 %v531, %v534
      %v536 = vrot.slane %v535, 4
      %v538 = vshll.u32 %v450, 16
      %v540 = vrot.slane %v538, 5
      %v541 = vsel %vm457, %v536, %v540
      %v543 = vshrl.u32 %v451, 16
      %v545 = vrot.slane %v543, 4
      %v546 = vshll.u32 %v451, 16
      %v548 = vrot.slane %v546, 5
      %v549 = vor.u32 %v545, %v548
      %v550 = vrot.slane %v549, 4
      %v552 = vshll.u32 %v452, 16
      %v554 = vrot.slane %v552, 5
      %v555 = vsel %vm457, %v550, %v554
      %v557 = vshrl.u32 %v453, 16
      %v559 = vrot.slane %v557, 4
      %v560 = vshll.u32 %v453, 16
      %v562 = vrot.slane %v560, 5
      %v563 = vor.u32 %v559, %v562
      %v564 = vrot.slane %v563, 4
      %v566 = vshll.u32 %v454, 16
      %v568 = vrot.slane %v566, 5
      %v569 = vsel %vm457, %v564, %v568
      %s570 = scalar_lea.vmem %s1, 128
      %v571 = vld [vmem:[%s570] sm:$0xf]
      %v572 = vld [vmem:[%s570 + $0x4] sm:$0xf]
      %v573 = vld [vmem:[%s570 + $0x8] sm:$0xf]
      %v574 = vld [vmem:[%s570 + $0xc] sm:$0xf]
      %v575 = vld [vmem:[%s570 + $0x10] sm:$0xf]
      %v576 = vld [vmem:[%s570 + $0x14] sm:$0xf]
      %v577 = vld [vmem:[%s570 + $0x18] sm:$0xf]
      %v578 = vld [vmem:[%s570 + $0x1c] sm:$0xf]
      %v579 = vld [vmem:[%s570 + $0x20] sm:$0xf]
      %v580 = vld [vmem:[%s570 + $0x24] sm:$0xf]
      %v581 = vld [vmem:[%s570 + $0x28] sm:$0xf]
      %v582 = vld [vmem:[%s570 + $0x2c] sm:$0xf]
      %v583 = vld [vmem:[%s570 + $0x30] sm:$0xf]
      %v584 = vld [vmem:[%s570 + $0x34] sm:$0xf]
      %v585 = vld [vmem:[%s570 + $0x38] sm:$0xf]
      %v586 = vld [vmem:[%s570 + $0x3c] sm:$0xf]
      %v587 = vunpack.c.l.b16 %v471
      %v588 = vunpack.c.l.b16 %v485
      %v589 = vunpack.c.l.b16 %v499
      %v590 = vunpack.c.l.b16 %v513
      %v591 = vunpack.c.l.b16 %v527
      %v592 = vunpack.c.l.b16 %v541
      %v593 = vunpack.c.l.b16 %v555
      %v594 = vunpack.c.l.b16 %v569
      %v595 = vpack.c.b16 %v588, %v587
      %v596 = vpack.c.b16 %v590, %v589
      %v597 = vpack.c.b16 %v592, %v591
      %v598 = vpack.c.b16 %v594, %v593
      %v619 = vunpack.c.l.b16 %v571
      %v620 = vunpack.c.l.b16 %v572
      %v621 = vunpack.c.l.b16 %v573
      %v622 = vunpack.c.l.b16 %v574
      %v623 = vunpack.c.l.b16 %v575
      %v624 = vunpack.c.l.b16 %v576
      %v625 = vunpack.c.l.b16 %v577
      %v626 = vunpack.c.l.b16 %v578
      %v627 = vunpack.c.l.b16 %v579
      %v628 = vunpack.c.l.b16 %v580
      %v629 = vunpack.c.l.b16 %v581
      %v630 = vunpack.c.l.b16 %v582
      %v631 = vunpack.c.l.b16 %v583
      %v632 = vunpack.c.l.b16 %v584
      %v633 = vunpack.c.l.b16 %v585
      %v634 = vunpack.c.l.b16 %v586
      %v635 = vpack.c.b16 %v620, %v619
      %v636 = vpack.c.b16 %v622, %v621
      %v637 = vpack.c.b16 %v624, %v623
      %v638 = vpack.c.b16 %v626, %v625
      %v639 = vpack.c.b16 %v628, %v627
      %v640 = vpack.c.b16 %v630, %v629
      %v641 = vpack.c.b16 %v632, %v631
      %v642 = vpack.c.b16 %v634, %v633
      %651 = vmatpush.bf16.msra.mxu0 %v642
      %652 = vmatpush.bf16.msra.mxu0 %v641
      %653 = vmatpush.bf16.msra.mxu0 %v640
      %654 = vmatpush.bf16.msra.mxu0 %v639
      %655 = vmatpush.bf16.msra.mxu0 %v638
      %656 = vmatpush.bf16.msra.mxu0 %v637
      %657 = vmatpush.bf16.msra.mxu0 %v636
      %658 = vmatpush.bf16.msra.mxu0 %v635
      %659 = vmatmul.bf16.gmra.mxu0 %v595
      %v660 = vpop.f32.mrf.mxu0
      %v661 = vadd.f32 0.0, %v660
      %v662 = vpop.f32.mrf.mxu0
      %v663 = vadd.f32 0.0, %v662
      %664 = vmatmul.bf16.gmra.mxu0 %v596
      %v665 = vpop.f32.mrf.mxu0
      %v666 = vadd.f32 0.0, %v665
      %v667 = vpop.f32.mrf.mxu0
      %v668 = vadd.f32 0.0, %v667
      %669 = vmatmul.bf16.gmra.mxu0 %v597
      %v670 = vpop.f32.mrf.mxu0
      %v671 = vadd.f32 0.0, %v670
      %v672 = vpop.f32.mrf.mxu0
      %v673 = vadd.f32 0.0, %v672
      %674 = vmatmul.bf16.gmra.mxu0 %v598
      %v675 = vpop.f32.mrf.mxu0
      %v676 = vadd.f32 0.0, %v675
      %v677 = vpop.f32.mrf.mxu0
      %v678 = vadd.f32 0.0, %v677
      %679 = vdwg.mxu0
      %v680 = vadd.f32 %v420, %v661
      %v681 = vadd.f32 %v422, %v663
      %v682 = vadd.f32 %v425, %v666
      %v683 = vadd.f32 %v427, %v668
      %v684 = vadd.f32 %v430, %v671
      %v685 = vadd.f32 %v432, %v673
      %v686 = vadd.f32 %v435, %v676
      %v687 = vadd.f32 %v437, %v678
      %s688 = scalar_lea.vmem %s176, 144
      %v689 = vld [vmem:[%s688] sm:$0xf]
      %v690 = vld [vmem:[%s688 + $0x8] sm:$0xf]
      %v691 = vld [vmem:[%s688 + $0x10] sm:$0xf]
      %v692 = vld [vmem:[%s688 + $0x18] sm:$0xf]
      %v693 = vld [vmem:[%s688 + $0x20] sm:$0xf]
      %v694 = vld [vmem:[%s688 + $0x28] sm:$0xf]
      %v695 = vld [vmem:[%s688 + $0x30] sm:$0xf]
      %v696 = vld [vmem:[%s688 + $0x38] sm:$0xf]
      %s697 = scalar_lea.vmem %s1, 192
      %v698 = vld [vmem:[%s697] sm:$0xf]
      %v699 = vld [vmem:[%s697 + $0x4] sm:$0xf]
      %v700 = vld [vmem:[%s697 + $0x8] sm:$0xf]
      %v701 = vld [vmem:[%s697 + $0xc] sm:$0xf]
      %v702 = vld [vmem:[%s697 + $0x10] sm:$0xf]
      %v703 = vld [vmem:[%s697 + $0x14] sm:$0xf]
      %v704 = vld [vmem:[%s697 + $0x18] sm:$0xf]
      %v705 = vld [vmem:[%s697 + $0x1c] sm:$0xf]
      %v706 = vld [vmem:[%s697 + $0x20] sm:$0xf]
      %v707 = vld [vmem:[%s697 + $0x24] sm:$0xf]
      %v708 = vld [vmem:[%s697 + $0x28] sm:$0xf]
      %v709 = vld [vmem:[%s697 + $0x2c] sm:$0xf]
      %v710 = vld [vmem:[%s697 + $0x30] sm:$0xf]
      %v711 = vld [vmem:[%s697 + $0x34] sm:$0xf]
      %v712 = vld [vmem:[%s697 + $0x38] sm:$0xf]
      %v713 = vld [vmem:[%s697 + $0x3c] sm:$0xf]
      %v722 = vunpack.c.l.b16 %v689
      %v723 = vunpack.c.l.b16 %v690
      %v724 = vunpack.c.l.b16 %v691
      %v725 = vunpack.c.l.b16 %v692
      %v726 = vunpack.c.l.b16 %v693
      %v727 = vunpack.c.l.b16 %v694
      %v728 = vunpack.c.l.b16 %v695
      %v729 = vunpack.c.l.b16 %v696
      %v730 = vpack.c.b16 %v723, %v722
      %v731 = vpack.c.b16 %v725, %v724
      %v732 = vpack.c.b16 %v727, %v726
      %v733 = vpack.c.b16 %v729, %v728
      %v754 = vunpack.c.l.b16 %v698
      %v755 = vunpack.c.l.b16 %v699
      %v756 = vunpack.c.l.b16 %v700
      %v757 = vunpack.c.l.b16 %v701
      %v758 = vunpack.c.l.b16 %v702
      %v759 = vunpack.c.l.b16 %v703
      %v760 = vunpack.c.l.b16 %v704
      %v761 = vunpack.c.l.b16 %v705
      %v762 = vunpack.c.l.b16 %v706
      %v763 = vunpack.c.l.b16 %v707
      %v764 = vunpack.c.l.b16 %v708
      %v765 = vunpack.c.l.b16 %v709
      %v766 = vunpack.c.l.b16 %v710
      %v767 = vunpack.c.l.b16 %v711
      %v768 = vunpack.c.l.b16 %v712
      %v769 = vunpack.c.l.b16 %v713
      %v770 = vpack.c.b16 %v755, %v754
      %v771 = vpack.c.b16 %v757, %v756
      %v772 = vpack.c.b16 %v759, %v758
      %v773 = vpack.c.b16 %v761, %v760
      %v774 = vpack.c.b16 %v763, %v762
      %v775 = vpack.c.b16 %v765, %v764
      %v776 = vpack.c.b16 %v767, %v766
      %v777 = vpack.c.b16 %v769, %v768
      %786 = vmatpush.bf16.msra.mxu0 %v777
      %787 = vmatpush.bf16.msra.mxu0 %v776
      %788 = vmatpush.bf16.msra.mxu0 %v775
      %789 = vmatpush.bf16.msra.mxu0 %v774
      %790 = vmatpush.bf16.msra.mxu0 %v773
      %791 = vmatpush.bf16.msra.mxu0 %v772
      %792 = vmatpush.bf16.msra.mxu0 %v771
      %793 = vmatpush.bf16.msra.mxu0 %v770
      %794 = vmatmul.bf16.gmra.mxu0 %v730
      %v795 = vpop.f32.mrf.mxu0
      %v796 = vadd.f32 0.0, %v795
      %v797 = vpop.f32.mrf.mxu0
      %v798 = vadd.f32 0.0, %v797
      %799 = vmatmul.bf16.gmra.mxu0 %v731
      %v800 = vpop.f32.mrf.mxu0
      %v801 = vadd.f32 0.0, %v800
      %v802 = vpop.f32.mrf.mxu0
      %v803 = vadd.f32 0.0, %v802
      %804 = vmatmul.bf16.gmra.mxu0 %v732
      %v805 = vpop.f32.mrf.mxu0
      %v806 = vadd.f32 0.0, %v805
      %v807 = vpop.f32.mrf.mxu0
      %v808 = vadd.f32 0.0, %v807
      %809 = vmatmul.bf16.gmra.mxu0 %v733
      %v810 = vpop.f32.mrf.mxu0
      %v811 = vadd.f32 0.0, %v810
      %v812 = vpop.f32.mrf.mxu0
      %v813 = vadd.f32 0.0, %v812
      %814 = vdwg.mxu0
      %v815 = vadd.f32 %v680, %v796
      %v816 = vadd.f32 %v681, %v798
      %v817 = vadd.f32 %v682, %v801
      %v818 = vadd.f32 %v683, %v803
      %v819 = vadd.f32 %v684, %v806
      %v820 = vadd.f32 %v685, %v808
      %v821 = vadd.f32 %v686, %v811
      %v822 = vadd.f32 %v687, %v813
      %s823 = scalar_lea.vmem %s176, 216
      %v824 = vld [vmem:[%s823] sm:$0xf]
      %v825 = vld [vmem:[%s823 + $0x8] sm:$0xf]
      %v826 = vld [vmem:[%s823 + $0x10] sm:$0xf]
      %v827 = vld [vmem:[%s823 + $0x18] sm:$0xf]
      %v828 = vld [vmem:[%s823 + $0x20] sm:$0xf]
      %v829 = vld [vmem:[%s823 + $0x28] sm:$0xf]
      %v830 = vld [vmem:[%s823 + $0x30] sm:$0xf]
      %v831 = vld [vmem:[%s823 + $0x38] sm:$0xf]
      %s832 = scalar_lea.vmem %s1, 256
      %v833 = vld [vmem:[%s832] sm:$0xf]
      %v834 = vld [vmem:[%s832 + $0x4] sm:$0xf]
      %v835 = vld [vmem:[%s832 + $0x8] sm:$0xf]
      %v836 = vld [vmem:[%s832 + $0xc] sm:$0xf]
      %v837 = vld [vmem:[%s832 + $0x10] sm:$0xf]
      %v838 = vld [vmem:[%s832 + $0x14] sm:$0xf]
      %v839 = vld [vmem:[%s832 + $0x18] sm:$0xf]
      %v840 = vld [vmem:[%s832 + $0x1c] sm:$0xf]
      %v841 = vld [vmem:[%s832 + $0x20] sm:$0xf]
      %v842 = vld [vmem:[%s832 + $0x24] sm:$0xf]
      %v843 = vld [vmem:[%s832 + $0x28] sm:$0xf]
      %v844 = vld [vmem:[%s832 + $0x2c] sm:$0xf]
      %v845 = vld [vmem:[%s832 + $0x30] sm:$0xf]
      %v846 = vld [vmem:[%s832 + $0x34] sm:$0xf]
      %v847 = vld [vmem:[%s832 + $0x38] sm:$0xf]
      %v848 = vld [vmem:[%s832 + $0x3c] sm:$0xf]
      %v857 = vunpack.c.l.b16 %v824
      %v858 = vunpack.c.l.b16 %v825
      %v859 = vunpack.c.l.b16 %v826
      %v860 = vunpack.c.l.b16 %v827
      %v861 = vunpack.c.l.b16 %v828
      %v862 = vunpack.c.l.b16 %v829
      %v863 = vunpack.c.l.b16 %v830
      %v864 = vunpack.c.l.b16 %v831
      %v865 = vpack.c.b16 %v858, %v857
      %v866 = vpack.c.b16 %v860, %v859
      %v867 = vpack.c.b16 %v862, %v861
      %v868 = vpack.c.b16 %v864, %v863
      %v889 = vunpack.c.l.b16 %v833
      %v890 = vunpack.c.l.b16 %v834
      %v891 = vunpack.c.l.b16 %v835
      %v892 = vunpack.c.l.b16 %v836
      %v893 = vunpack.c.l.b16 %v837
      %v894 = vunpack.c.l.b16 %v838
      %v895 = vunpack.c.l.b16 %v839
      %v896 = vunpack.c.l.b16 %v840
      %v897 = vunpack.c.l.b16 %v841
      %v898 = vunpack.c.l.b16 %v842
      %v899 = vunpack.c.l.b16 %v843
      %v900 = vunpack.c.l.b16 %v844
      %v901 = vunpack.c.l.b16 %v845
      %v902 = vunpack.c.l.b16 %v846
      %v903 = vunpack.c.l.b16 %v847
      %v904 = vunpack.c.l.b16 %v848
      %v905 = vpack.c.b16 %v890, %v889
      %v906 = vpack.c.b16 %v892, %v891
      %v907 = vpack.c.b16 %v894, %v893
      %v908 = vpack.c.b16 %v896, %v895
      %v909 = vpack.c.b16 %v898, %v897
      %v910 = vpack.c.b16 %v900, %v899
      %v911 = vpack.c.b16 %v902, %v901
      %v912 = vpack.c.b16 %v904, %v903
      %921 = vmatpush.bf16.msra.mxu0 %v912
      %922 = vmatpush.bf16.msra.mxu0 %v911
      %923 = vmatpush.bf16.msra.mxu0 %v910
      %924 = vmatpush.bf16.msra.mxu0 %v909
      %925 = vmatpush.bf16.msra.mxu0 %v908
      %926 = vmatpush.bf16.msra.mxu0 %v907
      %927 = vmatpush.bf16.msra.mxu0 %v906
      %928 = vmatpush.bf16.msra.mxu0 %v905
      %929 = vmatmul.bf16.gmra.mxu0 %v865
      %v930 = vpop.f32.mrf.mxu0
      %v931 = vadd.f32 0.0, %v930
      %v932 = vpop.f32.mrf.mxu0
      %v933 = vadd.f32 0.0, %v932
      %934 = vmatmul.bf16.gmra.mxu0 %v866
      %v935 = vpop.f32.mrf.mxu0
      %v936 = vadd.f32 0.0, %v935
      %v937 = vpop.f32.mrf.mxu0
      %v938 = vadd.f32 0.0, %v937
      %939 = vmatmul.bf16.gmra.mxu0 %v867
      %v940 = vpop.f32.mrf.mxu0
      %v941 = vadd.f32 0.0, %v940
      %v942 = vpop.f32.mrf.mxu0
      %v943 = vadd.f32 0.0, %v942
      %944 = vmatmul.bf16.gmra.mxu0 %v868
      %v945 = vpop.f32.mrf.mxu0
      %v946 = vadd.f32 0.0, %v945
      %v947 = vpop.f32.mrf.mxu0
      %v948 = vadd.f32 0.0, %v947
      %949 = vdwg.mxu0
      %v950 = vadd.f32 %v815, %v931
      %v951 = vadd.f32 %v816, %v933
      %v952 = vadd.f32 %v817, %v936
      %v953 = vadd.f32 %v818, %v938
      %v954 = vadd.f32 %v819, %v941
      %v955 = vadd.f32 %v820, %v943
      %v956 = vadd.f32 %v821, %v946
      %v957 = vadd.f32 %v822, %v948
      %v958 = vld [vmem:[%s688] sm:$0xf]
      %v959 = vld [vmem:[%s688 + $0x4] sm:$0x1]
      %v960 = vld [vmem:[%s688 + $0x8] sm:$0xf]
      %v961 = vld [vmem:[%s688 + $0xc] sm:$0x1]
      %v962 = vld [vmem:[%s688 + $0x10] sm:$0xf]
      %v963 = vld [vmem:[%s688 + $0x14] sm:$0x1]
      %v964 = vld [vmem:[%s688 + $0x18] sm:$0xf]
      %v965 = vld [vmem:[%s688 + $0x1c] sm:$0x1]
      %v966 = vld [vmem:[%s688 + $0x20] sm:$0xf]
      %v967 = vld [vmem:[%s688 + $0x24] sm:$0x1]
      %v968 = vld [vmem:[%s688 + $0x28] sm:$0xf]
      %v969 = vld [vmem:[%s688 + $0x2c] sm:$0x1]
      %v970 = vld [vmem:[%s688 + $0x30] sm:$0xf]
      %v971 = vld [vmem:[%s688 + $0x34] sm:$0x1]
      %v972 = vld [vmem:[%s688 + $0x38] sm:$0xf]
      %v973 = vld [vmem:[%s688 + $0x3c] sm:$0x1]
      %v975 = vshrl.u32 %v958, 16
      %v977 = vrot.slane %v975, 4
      %v978 = vshll.u32 %v958, 16
      %v980 = vrot.slane %v978, 5
      %v981 = vor.u32 %v977, %v980
      %v982 = vrot.slane %v981, 4
      %v984 = vshll.u32 %v959, 16
      %v986 = vrot.slane %v984, 5
      %v987 = vsel %vm457, %v982, %v986
      %v989 = vshrl.u32 %v960, 16
      %v991 = vrot.slane %v989, 4
      %v992 = vshll.u32 %v960, 16
      %v994 = vrot.slane %v992, 5
      %v995 = vor.u32 %v991, %v994
      %v996 = vrot.slane %v995, 4
      %v998 = vshll.u32 %v961, 16
      %v1000 = vrot.slane %v998, 5
      %v1001 = vsel %vm457, %v996, %v1000
      %v1003 = vshrl.u32 %v962, 16
      %v1005 = vrot.slane %v1003, 4
      %v1006 = vshll.u32 %v962, 16
      %v1008 = vrot.slane %v1006, 5
      %v1009 = vor.u32 %v1005, %v1008
      %v1010 = vrot.slane %v1009, 4
      %v1012 = vshll.u32 %v963, 16
      %v1014 = vrot.slane %v1012, 5
      %v1015 = vsel %vm457, %v1010, %v1014
      %v1017 = vshrl.u32 %v964, 16
      %v1019 = vrot.slane %v1017, 4
      %v1020 = vshll.u32 %v964, 16
      %v1022 = vrot.slane %v1020, 5
      %v1023 = vor.u32 %v1019, %v1022
      %v1024 = vrot.slane %v1023, 4
      %v1026 = vshll.u32 %v965, 16
      %v1028 = vrot.slane %v1026, 5
      %v1029 = vsel %vm457, %v1024, %v1028
      %v1031 = vshrl.u32 %v966, 16
      %v1033 = vrot.slane %v1031, 4
      %v1034 = vshll.u32 %v966, 16
      %v1036 = vrot.slane %v1034, 5
      %v1037 = vor.u32 %v1033, %v1036
      %v1038 = vrot.slane %v1037, 4
      %v1040 = vshll.u32 %v967, 16
      %v1042 = vrot.slane %v1040, 5
      %v1043 = vsel %vm457, %v1038, %v1042
      %v1045 = vshrl.u32 %v968, 16
      %v1047 = vrot.slane %v1045, 4
      %v1048 = vshll.u32 %v968, 16
      %v1050 = vrot.slane %v1048, 5
      %v1051 = vor.u32 %v1047, %v1050
      %v1052 = vrot.slane %v1051, 4
      %v1054 = vshll.u32 %v969, 16
      %v1056 = vrot.slane %v1054, 5
      %v1057 = vsel %vm457, %v1052, %v1056
      %v1059 = vshrl.u32 %v970, 16
      %v1061 = vrot.slane %v1059, 4
      %v1062 = vshll.u32 %v970, 16
      %v1064 = vrot.slane %v1062, 5
      %v1065 = vor.u32 %v1061, %v1064
      %v1066 = vrot.slane %v1065, 4
      %v1068 = vshll.u32 %v971, 16
      %v1070 = vrot.slane %v1068, 5
      %v1071 = vsel %vm457, %v1066, %v1070
      %v1073 = vshrl.u32 %v972, 16
      %v1075 = vrot.slane %v1073, 4
      %v1076 = vshll.u32 %v972, 16
      %v1078 = vrot.slane %v1076, 5
      %v1079 = vor.u32 %v1075, %v1078
      %v1080 = vrot.slane %v1079, 4
      %v1082 = vshll.u32 %v973, 16
      %v1084 = vrot.slane %v1082, 5
      %v1085 = vsel %vm457, %v1080, %v1084
      %s1086 = scalar_lea.vmem %s1, 320
      %v1087 = vld [vmem:[%s1086] sm:$0xf]
      %v1088 = vld [vmem:[%s1086 + $0x4] sm:$0xf]
      %v1089 = vld [vmem:[%s1086 + $0x8] sm:$0xf]
      %v1090 = vld [vmem:[%s1086 + $0xc] sm:$0xf]
      %v1091 = vld [vmem:[%s1086 + $0x10] sm:$0xf]
      %v1092 = vld [vmem:[%s1086 + $0x14] sm:$0xf]
      %v1093 = vld [vmem:[%s1086 + $0x18] sm:$0xf]
      %v1094 = vld [vmem:[%s1086 + $0x1c] sm:$0xf]
      %v1095 = vld [vmem:[%s1086 + $0x20] sm:$0xf]
      %v1096 = vld [vmem:[%s1086 + $0x24] sm:$0xf]
      %v1097 = vld [vmem:[%s1086 + $0x28] sm:$0xf]
      %v1098 = vld [vmem:[%s1086 + $0x2c] sm:$0xf]
      %v1099 = vld [vmem:[%s1086 + $0x30] sm:$0xf]
      %v1100 = vld [vmem:[%s1086 + $0x34] sm:$0xf]
      %v1101 = vld [vmem:[%s1086 + $0x38] sm:$0xf]
      %v1102 = vld [vmem:[%s1086 + $0x3c] sm:$0xf]
      %v1103 = vunpack.c.l.b16 %v987
      %v1104 = vunpack.c.l.b16 %v1001
      %v1105 = vunpack.c.l.b16 %v1015
      %v1106 = vunpack.c.l.b16 %v1029
      %v1107 = vunpack.c.l.b16 %v1043
      %v1108 = vunpack.c.l.b16 %v1057
      %v1109 = vunpack.c.l.b16 %v1071
      %v1110 = vunpack.c.l.b16 %v1085
      %v1111 = vpack.c.b16 %v1104, %v1103
      %v1112 = vpack.c.b16 %v1106, %v1105
      %v1113 = vpack.c.b16 %v1108, %v1107
      %v1114 = vpack.c.b16 %v1110, %v1109
      %v1135 = vunpack.c.l.b16 %v1087
      %v1136 = vunpack.c.l.b16 %v1088
      %v1137 = vunpack.c.l.b16 %v1089
      %v1138 = vunpack.c.l.b16 %v1090
      %v1139 = vunpack.c.l.b16 %v1091
      %v1140 = vunpack.c.l.b16 %v1092
      %v1141 = vunpack.c.l.b16 %v1093
      %v1142 = vunpack.c.l.b16 %v1094
      %v1143 = vunpack.c.l.b16 %v1095
      %v1144 = vunpack.c.l.b16 %v1096
      %v1145 = vunpack.c.l.b16 %v1097
      %v1146 = vunpack.c.l.b16 %v1098
      %v1147 = vunpack.c.l.b16 %v1099
      %v1148 = vunpack.c.l.b16 %v1100
      %v1149 = vunpack.c.l.b16 %v1101
      %v1150 = vunpack.c.l.b16 %v1102
      %v1151 = vpack.c.b16 %v1136, %v1135
      %v1152 = vpack.c.b16 %v1138, %v1137
      %v1153 = vpack.c.b16 %v1140, %v1139
      %v1154 = vpack.c.b16 %v1142, %v1141
      %v1155 = vpack.c.b16 %v1144, %v1143
      %v1156 = vpack.c.b16 %v1146, %v1145
      %v1157 = vpack.c.b16 %v1148, %v1147
      %v1158 = vpack.c.b16 %v1150, %v1149
      %1167 = vmatpush.bf16.msra.mxu0 %v1158
      %1168 = vmatpush.bf16.msra.mxu0 %v1157
      %1169 = vmatpush.bf16.msra.mxu0 %v1156
      %1170 = vmatpush.bf16.msra.mxu0 %v1155
      %1171 = vmatpush.bf16.msra.mxu0 %v1154
      %1172 = vmatpush.bf16.msra.mxu0 %v1153
      %1173 = vmatpush.bf16.msra.mxu0 %v1152
      %1174 = vmatpush.bf16.msra.mxu0 %v1151
      %1175 = vmatmul.bf16.gmra.mxu0 %v1111
      %v1176 = vpop.f32.mrf.mxu0
      %v1177 = vadd.f32 0.0, %v1176
      %v1178 = vpop.f32.mrf.mxu0
      %v1179 = vadd.f32 0.0, %v1178
      %1180 = vmatmul.bf16.gmra.mxu0 %v1112
      %v1181 = vpop.f32.mrf.mxu0
      %v1182 = vadd.f32 0.0, %v1181
      %v1183 = vpop.f32.mrf.mxu0
      %v1184 = vadd.f32 0.0, %v1183
      %1185 = vmatmul.bf16.gmra.mxu0 %v1113
      %v1186 = vpop.f32.mrf.mxu0
      %v1187 = vadd.f32 0.0, %v1186
      %v1188 = vpop.f32.mrf.mxu0
      %v1189 = vadd.f32 0.0, %v1188
      %1190 = vmatmul.bf16.gmra.mxu0 %v1114
      %v1191 = vpop.f32.mrf.mxu0
      %v1192 = vadd.f32 0.0, %v1191
      %v1193 = vpop.f32.mrf.mxu0
      %v1194 = vadd.f32 0.0, %v1193
      %1195 = vdwg.mxu0
      %v1196 = vadd.f32 %v950, %v1177
      %v1197 = vadd.f32 %v951, %v1179
      %v1198 = vadd.f32 %v952, %v1182
      %v1199 = vadd.f32 %v953, %v1184
      %v1200 = vadd.f32 %v954, %v1187
      %v1201 = vadd.f32 %v955, %v1189
      %v1202 = vadd.f32 %v956, %v1192
      %v1203 = vadd.f32 %v957, %v1194
      %s1204 = scalar_lea.vmem %s176, 8
      %v1205 = vld [vmem:[%s1204] sm:$0xf]
      %v1206 = vld [vmem:[%s1204 + $0x8] sm:$0xf]
      %v1207 = vld [vmem:[%s1204 + $0x10] sm:$0xf]
      %v1208 = vld [vmem:[%s1204 + $0x18] sm:$0xf]
      %v1209 = vld [vmem:[%s1204 + $0x20] sm:$0xf]
      %v1210 = vld [vmem:[%s1204 + $0x28] sm:$0xf]
      %v1211 = vld [vmem:[%s1204 + $0x30] sm:$0xf]
      %v1212 = vld [vmem:[%s1204 + $0x38] sm:$0xf]
      %s1213 = scalar_lea.vmem %s1, 384
      %v1214 = vld [vmem:[%s1213] sm:$0xf]
      %v1215 = vld [vmem:[%s1213 + $0x4] sm:$0xf]
      %v1216 = vld [vmem:[%s1213 + $0x8] sm:$0xf]
      %v1217 = vld [vmem:[%s1213 + $0xc] sm:$0xf]
      %v1218 = vld [vmem:[%s1213 + $0x10] sm:$0xf]
      %v1219 = vld [vmem:[%s1213 + $0x14] sm:$0xf]
      %v1220 = vld [vmem:[%s1213 + $0x18] sm:$0xf]
      %v1221 = vld [vmem:[%s1213 + $0x1c] sm:$0xf]
      %v1222 = vld [vmem:[%s1213 + $0x20] sm:$0xf]
      %v1223 = vld [vmem:[%s1213 + $0x24] sm:$0xf]
      %v1224 = vld [vmem:[%s1213 + $0x28] sm:$0xf]
      %v1225 = vld [vmem:[%s1213 + $0x2c] sm:$0xf]
      %v1226 = vld [vmem:[%s1213 + $0x30] sm:$0xf]
      %v1227 = vld [vmem:[%s1213 + $0x34] sm:$0xf]
      %v1228 = vld [vmem:[%s1213 + $0x38] sm:$0xf]
      %v1229 = vld [vmem:[%s1213 + $0x3c] sm:$0xf]
      %v1238 = vunpack.c.l.b16 %v1205
      %v1239 = vunpack.c.l.b16 %v1206
      %v1240 = vunpack.c.l.b16 %v1207
      %v1241 = vunpack.c.l.b16 %v1208
      %v1242 = vunpack.c.l.b16 %v1209
      %v1243 = vunpack.c.l.b16 %v1210
      %v1244 = vunpack.c.l.b16 %v1211
      %v1245 = vunpack.c.l.b16 %v1212
      %v1246 = vpack.c.b16 %v1239, %v1238
      %v1247 = vpack.c.b16 %v1241, %v1240
      %v1248 = vpack.c.b16 %v1243, %v1242
      %v1249 = vpack.c.b16 %v1245, %v1244
      %v1270 = vunpack.c.l.b16 %v1214
      %v1271 = vunpack.c.l.b16 %v1215
      %v1272 = vunpack.c.l.b16 %v1216
      %v1273 = vunpack.c.l.b16 %v1217
      %v1274 = vunpack.c.l.b16 %v1218
      %v1275 = vunpack.c.l.b16 %v1219
      %v1276 = vunpack.c.l.b16 %v1220
      %v1277 = vunpack.c.l.b16 %v1221
      %v1278 = vunpack.c.l.b16 %v1222
      %v1279 = vunpack.c.l.b16 %v1223
      %v1280 = vunpack.c.l.b16 %v1224
      %v1281 = vunpack.c.l.b16 %v1225
      %v1282 = vunpack.c.l.b16 %v1226
      %v1283 = vunpack.c.l.b16 %v1227
      %v1284 = vunpack.c.l.b16 %v1228
      %v1285 = vunpack.c.l.b16 %v1229
      %v1286 = vpack.c.b16 %v1271, %v1270
      %v1287 = vpack.c.b16 %v1273, %v1272
      %v1288 = vpack.c.b16 %v1275, %v1274
      %v1289 = vpack.c.b16 %v1277, %v1276
      %v1290 = vpack.c.b16 %v1279, %v1278
      %v1291 = vpack.c.b16 %v1281, %v1280
      %v1292 = vpack.c.b16 %v1283, %v1282
      %v1293 = vpack.c.b16 %v1285, %v1284
      %1302 = vmatpush.bf16.msra.mxu0 %v1293
      %1303 = vmatpush.bf16.msra.mxu0 %v1292
      %1304 = vmatpush.bf16.msra.mxu0 %v1291
      %1305 = vmatpush.bf16.msra.mxu0 %v1290
      %1306 = vmatpush.bf16.msra.mxu0 %v1289
      %1307 = vmatpush.bf16.msra.mxu0 %v1288
      %1308 = vmatpush.bf16.msra.mxu0 %v1287
      %1309 = vmatpush.bf16.msra.mxu0 %v1286
      %1310 = vmatmul.bf16.gmra.mxu0 %v1246
      %v1311 = vpop.f32.mrf.mxu0
      %v1312 = vadd.f32 0.0, %v1311
      %v1313 = vpop.f32.mrf.mxu0
      %v1314 = vadd.f32 0.0, %v1313
      %1315 = vmatmul.bf16.gmra.mxu0 %v1247
      %v1316 = vpop.f32.mrf.mxu0
      %v1317 = vadd.f32 0.0, %v1316
      %v1318 = vpop.f32.mrf.mxu0
      %v1319 = vadd.f32 0.0, %v1318
      %1320 = vmatmul.bf16.gmra.mxu0 %v1248
      %v1321 = vpop.f32.mrf.mxu0
      %v1322 = vadd.f32 0.0, %v1321
      %v1323 = vpop.f32.mrf.mxu0
      %v1324 = vadd.f32 0.0, %v1323
      %1325 = vmatmul.bf16.gmra.mxu0 %v1249
      %v1326 = vpop.f32.mrf.mxu0
      %v1327 = vadd.f32 0.0, %v1326
      %v1328 = vpop.f32.mrf.mxu0
      %v1329 = vadd.f32 0.0, %v1328
      %1330 = vdwg.mxu0
      %v1331 = vadd.f32 %v1196, %v1312
      %v1332 = vadd.f32 %v1197, %v1314
      %v1333 = vadd.f32 %v1198, %v1317
      %v1334 = vadd.f32 %v1199, %v1319
      %v1335 = vadd.f32 %v1200, %v1322
      %v1336 = vadd.f32 %v1201, %v1324
      %v1337 = vadd.f32 %v1202, %v1327
      %v1338 = vadd.f32 %v1203, %v1329
      %s1339 = scalar_lea.vmem %s176, 80
      %v1340 = vld [vmem:[%s1339] sm:$0xf]
      %v1341 = vld [vmem:[%s1339 + $0x8] sm:$0xf]
      %v1342 = vld [vmem:[%s1339 + $0x10] sm:$0xf]
      %v1343 = vld [vmem:[%s1339 + $0x18] sm:$0xf]
      %v1344 = vld [vmem:[%s1339 + $0x20] sm:$0xf]
      %v1345 = vld [vmem:[%s1339 + $0x28] sm:$0xf]
      %v1346 = vld [vmem:[%s1339 + $0x30] sm:$0xf]
      %v1347 = vld [vmem:[%s1339 + $0x38] sm:$0xf]
      %s1348 = scalar_lea.vmem %s1, 448
      %v1349 = vld [vmem:[%s1348] sm:$0xf]
      %v1350 = vld [vmem:[%s1348 + $0x4] sm:$0xf]
      %v1351 = vld [vmem:[%s1348 + $0x8] sm:$0xf]
      %v1352 = vld [vmem:[%s1348 + $0xc] sm:$0xf]
      %v1353 = vld [vmem:[%s1348 + $0x10] sm:$0xf]
      %v1354 = vld [vmem:[%s1348 + $0x14] sm:$0xf]
      %v1355 = vld [vmem:[%s1348 + $0x18] sm:$0xf]
      %v1356 = vld [vmem:[%s1348 + $0x1c] sm:$0xf]
      %v1357 = vld [vmem:[%s1348 + $0x20] sm:$0xf]
      %v1358 = vld [vmem:[%s1348 + $0x24] sm:$0xf]
      %v1359 = vld [vmem:[%s1348 + $0x28] sm:$0xf]
      %v1360 = vld [vmem:[%s1348 + $0x2c] sm:$0xf]
      %v1361 = vld [vmem:[%s1348 + $0x30] sm:$0xf]
      %v1362 = vld [vmem:[%s1348 + $0x34] sm:$0xf]
      %v1363 = vld [vmem:[%s1348 + $0x38] sm:$0xf]
      %v1364 = vld [vmem:[%s1348 + $0x3c] sm:$0xf]
      %v1373 = vunpack.c.l.b16 %v1340
      %v1374 = vunpack.c.l.b16 %v1341
      %v1375 = vunpack.c.l.b16 %v1342
      %v1376 = vunpack.c.l.b16 %v1343
      %v1377 = vunpack.c.l.b16 %v1344
      %v1378 = vunpack.c.l.b16 %v1345
      %v1379 = vunpack.c.l.b16 %v1346
      %v1380 = vunpack.c.l.b16 %v1347
      %v1381 = vpack.c.b16 %v1374, %v1373
      %v1382 = vpack.c.b16 %v1376, %v1375
      %v1383 = vpack.c.b16 %v1378, %v1377
      %v1384 = vpack.c.b16 %v1380, %v1379
      %v1405 = vunpack.c.l.b16 %v1349
      %v1406 = vunpack.c.l.b16 %v1350
      %v1407 = vunpack.c.l.b16 %v1351
      %v1408 = vunpack.c.l.b16 %v1352
      %v1409 = vunpack.c.l.b16 %v1353
      %v1410 = vunpack.c.l.b16 %v1354
      %v1411 = vunpack.c.l.b16 %v1355
      %v1412 = vunpack.c.l.b16 %v1356
      %v1413 = vunpack.c.l.b16 %v1357
      %v1414 = vunpack.c.l.b16 %v1358
      %v1415 = vunpack.c.l.b16 %v1359
      %v1416 = vunpack.c.l.b16 %v1360
      %v1417 = vunpack.c.l.b16 %v1361
      %v1418 = vunpack.c.l.b16 %v1362
      %v1419 = vunpack.c.l.b16 %v1363
      %v1420 = vunpack.c.l.b16 %v1364
      %v1421 = vpack.c.b16 %v1406, %v1405
      %v1422 = vpack.c.b16 %v1408, %v1407
      %v1423 = vpack.c.b16 %v1410, %v1409
      %v1424 = vpack.c.b16 %v1412, %v1411
      %v1425 = vpack.c.b16 %v1414, %v1413
      %v1426 = vpack.c.b16 %v1416, %v1415
      %v1427 = vpack.c.b16 %v1418, %v1417
      %v1428 = vpack.c.b16 %v1420, %v1419
      %1437 = vmatpush.bf16.msra.mxu0 %v1428
      %1438 = vmatpush.bf16.msra.mxu0 %v1427
      %1439 = vmatpush.bf16.msra.mxu0 %v1426
      %1440 = vmatpush.bf16.msra.mxu0 %v1425
      %1441 = vmatpush.bf16.msra.mxu0 %v1424
      %1442 = vmatpush.bf16.msra.mxu0 %v1423
      %1443 = vmatpush.bf16.msra.mxu0 %v1422
      %1444 = vmatpush.bf16.msra.mxu0 %v1421
      %1445 = vmatmul.bf16.gmra.mxu0 %v1381
      %v1446 = vpop.f32.mrf.mxu0
      %v1447 = vadd.f32 0.0, %v1446
      %v1448 = vpop.f32.mrf.mxu0
      %v1449 = vadd.f32 0.0, %v1448
      %1450 = vmatmul.bf16.gmra.mxu0 %v1382
      %v1451 = vpop.f32.mrf.mxu0
      %v1452 = vadd.f32 0.0, %v1451
      %v1453 = vpop.f32.mrf.mxu0
      %v1454 = vadd.f32 0.0, %v1453
      %1455 = vmatmul.bf16.gmra.mxu0 %v1383
      %v1456 = vpop.f32.mrf.mxu0
      %v1457 = vadd.f32 0.0, %v1456
      %v1458 = vpop.f32.mrf.mxu0
      %v1459 = vadd.f32 0.0, %v1458
      %1460 = vmatmul.bf16.gmra.mxu0 %v1384
      %v1461 = vpop.f32.mrf.mxu0
      %v1462 = vadd.f32 0.0, %v1461
      %v1463 = vpop.f32.mrf.mxu0
      %v1464 = vadd.f32 0.0, %v1463
      %1465 = vdwg.mxu0
      %v1466 = vadd.f32 %v1331, %v1447
      %v1467 = vadd.f32 %v1332, %v1449
      %v1468 = vadd.f32 %v1333, %v1452
      %v1469 = vadd.f32 %v1334, %v1454
      %v1470 = vadd.f32 %v1335, %v1457
      %v1471 = vadd.f32 %v1336, %v1459
      %v1472 = vadd.f32 %v1337, %v1462
      %v1473 = vadd.f32 %v1338, %v1464
      %v1474 = vld [vmem:[%s1204] sm:$0xf]
      %v1475 = vld [vmem:[%s1204 + $0x4] sm:$0x1]
      %v1476 = vld [vmem:[%s1204 + $0x8] sm:$0xf]
      %v1477 = vld [vmem:[%s1204 + $0xc] sm:$0x1]
      %v1478 = vld [vmem:[%s1204 + $0x10] sm:$0xf]
      %v1479 = vld [vmem:[%s1204 + $0x14] sm:$0x1]
      %v1480 = vld [vmem:[%s1204 + $0x18] sm:$0xf]
      %v1481 = vld [vmem:[%s1204 + $0x1c] sm:$0x1]
      %v1482 = vld [vmem:[%s1204 + $0x20] sm:$0xf]
      %v1483 = vld [vmem:[%s1204 + $0x24] sm:$0x1]
      %v1484 = vld [vmem:[%s1204 + $0x28] sm:$0xf]
      %v1485 = vld [vmem:[%s1204 + $0x2c] sm:$0x1]
      %v1486 = vld [vmem:[%s1204 + $0x30] sm:$0xf]
      %v1487 = vld [vmem:[%s1204 + $0x34] sm:$0x1]
      %v1488 = vld [vmem:[%s1204 + $0x38] sm:$0xf]
      %v1489 = vld [vmem:[%s1204 + $0x3c] sm:$0x1]
      %v1491 = vshrl.u32 %v1474, 16
      %v1493 = vrot.slane %v1491, 4
      %v1494 = vshll.u32 %v1474, 16
      %v1496 = vrot.slane %v1494, 5
      %v1497 = vor.u32 %v1493, %v1496
      %v1498 = vrot.slane %v1497, 4
      %v1500 = vshll.u32 %v1475, 16
      %v1502 = vrot.slane %v1500, 5
      %v1503 = vsel %vm457, %v1498, %v1502
      %v1505 = vshrl.u32 %v1476, 16
      %v1507 = vrot.slane %v1505, 4
      %v1508 = vshll.u32 %v1476, 16
      %v1510 = vrot.slane %v1508, 5
      %v1511 = vor.u32 %v1507, %v1510
      %v1512 = vrot.slane %v1511, 4
      %v1514 = vshll.u32 %v1477, 16
      %v1516 = vrot.slane %v1514, 5
      %v1517 = vsel %vm457, %v1512, %v1516
      %v1519 = vshrl.u32 %v1478, 16
      %v1521 = vrot.slane %v1519, 4
      %v1522 = vshll.u32 %v1478, 16
      %v1524 = vrot.slane %v1522, 5
      %v1525 = vor.u32 %v1521, %v1524
      %v1526 = vrot.slane %v1525, 4
      %v1528 = vshll.u32 %v1479, 16
      %v1530 = vrot.slane %v1528, 5
      %v1531 = vsel %vm457, %v1526, %v1530
      %v1533 = vshrl.u32 %v1480, 16
      %v1535 = vrot.slane %v1533, 4
      %v1536 = vshll.u32 %v1480, 16
      %v1538 = vrot.slane %v1536, 5
      %v1539 = vor.u32 %v1535, %v1538
      %v1540 = vrot.slane %v1539, 4
      %v1542 = vshll.u32 %v1481, 16
      %v1544 = vrot.slane %v1542, 5
      %v1545 = vsel %vm457, %v1540, %v1544
      %v1547 = vshrl.u32 %v1482, 16
      %v1549 = vrot.slane %v1547, 4
      %v1550 = vshll.u32 %v1482, 16
      %v1552 = vrot.slane %v1550, 5
      %v1553 = vor.u32 %v1549, %v1552
      %v1554 = vrot.slane %v1553, 4
      %v1556 = vshll.u32 %v1483, 16
      %v1558 = vrot.slane %v1556, 5
      %v1559 = vsel %vm457, %v1554, %v1558
      %v1561 = vshrl.u32 %v1484, 16
      %v1563 = vrot.slane %v1561, 4
      %v1564 = vshll.u32 %v1484, 16
      %v1566 = vrot.slane %v1564, 5
      %v1567 = vor.u32 %v1563, %v1566
      %v1568 = vrot.slane %v1567, 4
      %v1570 = vshll.u32 %v1485, 16
      %v1572 = vrot.slane %v1570, 5
      %v1573 = vsel %vm457, %v1568, %v1572
      %v1575 = vshrl.u32 %v1486, 16
      %v1577 = vrot.slane %v1575, 4
      %v1578 = vshll.u32 %v1486, 16
      %v1580 = vrot.slane %v1578, 5
      %v1581 = vor.u32 %v1577, %v1580
      %v1582 = vrot.slane %v1581, 4
      %v1584 = vshll.u32 %v1487, 16
      %v1586 = vrot.slane %v1584, 5
      %v1587 = vsel %vm457, %v1582, %v1586
      %v1589 = vshrl.u32 %v1488, 16
      %v1591 = vrot.slane %v1589, 4
      %v1592 = vshll.u32 %v1488, 16
      %v1594 = vrot.slane %v1592, 5
      %v1595 = vor.u32 %v1591, %v1594
      %v1596 = vrot.slane %v1595, 4
      %v1598 = vshll.u32 %v1489, 16
      %v1600 = vrot.slane %v1598, 5
      %v1601 = vsel %vm457, %v1596, %v1600
      %s1602 = scalar_lea.vmem %s1, 512
      %v1603 = vld [vmem:[%s1602] sm:$0xf]
      %v1604 = vld [vmem:[%s1602 + $0x4] sm:$0xf]
      %v1605 = vld [vmem:[%s1602 + $0x8] sm:$0xf]
      %v1606 = vld [vmem:[%s1602 + $0xc] sm:$0xf]
      %v1607 = vld [vmem:[%s1602 + $0x10] sm:$0xf]
      %v1608 = vld [vmem:[%s1602 + $0x14] sm:$0xf]
      %v1609 = vld [vmem:[%s1602 + $0x18] sm:$0xf]
      %v1610 = vld [vmem:[%s1602 + $0x1c] sm:$0xf]
      %v1611 = vld [vmem:[%s1602 + $0x20] sm:$0xf]
      %v1612 = vld [vmem:[%s1602 + $0x24] sm:$0xf]
      %v1613 = vld [vmem:[%s1602 + $0x28] sm:$0xf]
      %v1614 = vld [vmem:[%s1602 + $0x2c] sm:$0xf]
      %v1615 = vld [vmem:[%s1602 + $0x30] sm:$0xf]
      %v1616 = vld [vmem:[%s1602 + $0x34] sm:$0xf]
      %v1617 = vld [vmem:[%s1602 + $0x38] sm:$0xf]
      %v1618 = vld [vmem:[%s1602 + $0x3c] sm:$0xf]
      %v1619 = vunpack.c.l.b16 %v1503
      %v1620 = vunpack.c.l.b16 %v1517
      %v1621 = vunpack.c.l.b16 %v1531
      %v1622 = vunpack.c.l.b16 %v1545
      %v1623 = vunpack.c.l.b16 %v1559
      %v1624 = vunpack.c.l.b16 %v1573
      %v1625 = vunpack.c.l.b16 %v1587
      %v1626 = vunpack.c.l.b16 %v1601
      %v1627 = vpack.c.b16 %v1620, %v1619
      %v1628 = vpack.c.b16 %v1622, %v1621
      %v1629 = vpack.c.b16 %v1624, %v1623
      %v1630 = vpack.c.b16 %v1626, %v1625
      %v1651 = vunpack.c.l.b16 %v1603
      %v1652 = vunpack.c.l.b16 %v1604
      %v1653 = vunpack.c.l.b16 %v1605
      %v1654 = vunpack.c.l.b16 %v1606
      %v1655 = vunpack.c.l.b16 %v1607
      %v1656 = vunpack.c.l.b16 %v1608
      %v1657 = vunpack.c.l.b16 %v1609
      %v1658 = vunpack.c.l.b16 %v1610
      %v1659 = vunpack.c.l.b16 %v1611
      %v1660 = vunpack.c.l.b16 %v1612
      %v1661 = vunpack.c.l.b16 %v1613
      %v1662 = vunpack.c.l.b16 %v1614
      %v1663 = vunpack.c.l.b16 %v1615
      %v1664 = vunpack.c.l.b16 %v1616
      %v1665 = vunpack.c.l.b16 %v1617
      %v1666 = vunpack.c.l.b16 %v1618
      %v1667 = vpack.c.b16 %v1652, %v1651
      %v1668 = vpack.c.b16 %v1654, %v1653
      %v1669 = vpack.c.b16 %v1656, %v1655
      %v1670 = vpack.c.b16 %v1658, %v1657
      %v1671 = vpack.c.b16 %v1660, %v1659
      %v1672 = vpack.c.b16 %v1662, %v1661
      %v1673 = vpack.c.b16 %v1664, %v1663
      %v1674 = vpack.c.b16 %v1666, %v1665
      %1683 = vmatpush.bf16.msra.mxu0 %v1674
      %1684 = vmatpush.bf16.msra.mxu0 %v1673
      %1685 = vmatpush.bf16.msra.mxu0 %v1672
      %1686 = vmatpush.bf16.msra.mxu0 %v1671
      %1687 = vmatpush.bf16.msra.mxu0 %v1670
      %1688 = vmatpush.bf16.msra.mxu0 %v1669
      %1689 = vmatpush.bf16.msra.mxu0 %v1668
      %1690 = vmatpush.bf16.msra.mxu0 %v1667
      %1691 = vmatmul.bf16.gmra.mxu0 %v1627
      %v1692 = vpop.f32.mrf.mxu0
      %v1693 = vadd.f32 0.0, %v1692
      %v1694 = vpop.f32.mrf.mxu0
      %v1695 = vadd.f32 0.0, %v1694
      %1696 = vmatmul.bf16.gmra.mxu0 %v1628
      %v1697 = vpop.f32.mrf.mxu0
      %v1698 = vadd.f32 0.0, %v1697
      %v1699 = vpop.f32.mrf.mxu0
      %v1700 = vadd.f32 0.0, %v1699
      %1701 = vmatmul.bf16.gmra.mxu0 %v1629
      %v1702 = vpop.f32.mrf.mxu0
      %v1703 = vadd.f32 0.0, %v1702
      %v1704 = vpop.f32.mrf.mxu0
      %v1705 = vadd.f32 0.0, %v1704
      %1706 = vmatmul.bf16.gmra.mxu0 %v1630
      %v1707 = vpop.f32.mrf.mxu0
      %v1708 = vadd.f32 0.0, %v1707
      %v1709 = vpop.f32.mrf.mxu0
      %v1710 = vadd.f32 0.0, %v1709
      %1711 = vdwg.mxu0
      %v1712 = vadd.f32 %v1466, %v1693
      %v1713 = vadd.f32 %v1467, %v1695
      %v1714 = vadd.f32 %v1468, %v1698
      %v1715 = vadd.f32 %v1469, %v1700
      %v1716 = vadd.f32 %v1470, %v1703
      %v1717 = vadd.f32 %v1471, %v1705
      %v1718 = vadd.f32 %v1472, %v1708
      %v1719 = vadd.f32 %v1473, %v1710
      %v1720 = vpack.c.bf16 %v1712, %v1712
      %v1721 = vpack.c.bf16 %v1713, %v1713
      %v1722 = vpack.c.bf16 %v1714, %v1714
      %v1723 = vpack.c.bf16 %v1715, %v1715
      %v1724 = vpack.c.bf16 %v1716, %v1716
      %v1725 = vpack.c.bf16 %v1717, %v1717
      %v1726 = vpack.c.bf16 %v1718, %v1718
      %v1727 = vpack.c.bf16 %v1719, %v1719
      %1728 = vst [vmem:[%s182] sm:$0xf] %v1720
      %1729 = vst [vmem:[%s182 + $0x4] sm:$0xf] %v1721
      %1730 = vst [vmem:[%s182 + $0x8] sm:$0xf] %v1722
      %1731 = vst [vmem:[%s182 + $0xc] sm:$0xf] %v1723
      %1732 = vst [vmem:[%s182 + $0x10] sm:$0xf] %v1724
      %1733 = vst [vmem:[%s182 + $0x14] sm:$0xf] %v1725
      %1734 = vst [vmem:[%s182 + $0x18] sm:$0xf] %v1726
      %1735 = vst [vmem:[%s182 + $0x1c] sm:$0xf] %v1727
      %v1736 = vadd.f32 %v1712, %v1713
      %v1737 = vadd.f32 %v1736, %v1714
      %v1738 = vadd.f32 %v1737, %v1715
      %v1739 = vadd.f32 %v1738, %v1716
      %v1740 = vadd.f32 %v1739, %v1717
      %v1741 = vadd.f32 %v1740, %v1718
      %v1742 = vadd.f32 %v1741, %v1719
      %v1743 = vrot.slane %v1742, 4
      %v1744 = vadd.f32 %v1742, %v1743
      %v1745 = vrot.slane %v1744, 2
      %v1746 = vadd.f32 %v1744, %v1745
      %v1747 = vrot.slane %v1746, 1
      %v1748 = vadd.f32 %v1746, %v1747
      %v1749 = vmul.f32 %v1712, %v1712
      %v1750 = vmul.f32 %v1713, %v1713
      %v1751 = vmul.f32 %v1714, %v1714
      %v1752 = vmul.f32 %v1715, %v1715
      %v1753 = vmul.f32 %v1716, %v1716
      %v1754 = vmul.f32 %v1717, %v1717
      %v1755 = vmul.f32 %v1718, %v1718
      %v1756 = vmul.f32 %v1719, %v1719
      %v1757 = vadd.f32 %v1749, %v1750
      %v1758 = vadd.f32 %v1757, %v1751
      %v1759 = vadd.f32 %v1758, %v1752
      %v1760 = vadd.f32 %v1759, %v1753
      %v1761 = vadd.f32 %v1760, %v1754
      %v1762 = vadd.f32 %v1761, %v1755
      %v1763 = vadd.f32 %v1762, %v1756
      %v1764 = vrot.slane %v1763, 4
      %v1765 = vadd.f32 %v1763, %v1764
      %v1766 = vrot.slane %v1765, 2
      %v1767 = vadd.f32 %v1765, %v1766
      %v1768 = vrot.slane %v1767, 1
      %v1769 = vadd.f32 %v1767, %v1768
      %vm1770 = vcmask 1040384
      %v1771 = vsel %vm1770, %v1748, %v1769
      %1772 = vst [vmem:[%s186] sm:$0x3] %v1771
      %p1773 = scmp.lt.s32.totalorder %s15, 1
      %s1774 = scalar_select %p1773, %s15, 1
      %s1775 = smul.addr %s1774, 8
      %s1776 = smul.addr %s1775, 4
      %s1777 = scalar_lea.vmem %s2, %s1776
      %p1778 = scmp.lt.s32.totalorder %s15, 1
      %s1779 = scalar_select %p1778, %s15, 1
      %s1780 = smul.addr %s1779, 2
      %s1781 = scalar_lea.vmem %s3, %s1780
      // Predicated region
      $region29: #{cspx_forward.18} parent=27 // pred_check
        %p1782 = pneg %p80
      $region30: #{cspx_forward.18} parent=27 // pred_check_branch
        %1784 = sbr.rel (%p1782) target = $region32
      $region31: #{cspx_forward.18} parent=27 // pred_region
        _
      $region32: #{cspx_forward.18} parent=27 // pred_fallthru
        _
      // Predicated region
      $region33: #{cspx_forward.18} parent=27 // pred_check
        %p1785 = pneg %p106
      $region34: #{cspx_forward.18} parent=27 // pred_check_branch
        %1787 = sbr.rel (%p1785) target = $region36
      $region35: #{cspx_forward.18} parent=27 // pred_region
        _
      $region36: #{cspx_forward.18} parent=27 // pred_fallthru
        _
    $region28: #{cspx_forward.18} parent=5 // pred_fallthru
      _
    %p1788 = scmp.le.s32.totalorder 2, %s10
    // Predicated region
    $region37: #{cspx_forward.18} parent=5 // pred_check
      %p1789 = pneg %p1788
    $region38: #{cspx_forward.18} parent=5 // pred_check_branch
      %1791 = sbr.rel (%p1789) target = $region40
    $region39: #{cspx_forward.18} parent=5 // pred_region
      %s1792 = ssub.s32 %s10, 2
      // Predicated region
      $region41: #{cspx_forward.18} parent=39 // pred_check
        %p1793 = pneg %p86
      $region42: #{cspx_forward.18} parent=39 // pred_check_branch
        %1795 = sbr.rel (%p1793) target = $region44
      $region43: #{cspx_forward.18} parent=39 // pred_region
        %p1796 = scmp.lt.s32.totalorder %s16, 1
        %s1797 = scalar_select %p1796, %s16, 1
        %s1798 = smul.addr %s1797, 8
        %s1799 = smul.addr %s1798, 4
        %s1800 = scalar_lea.vmem %s2, %s1799
      $region44: #{cspx_forward.18} parent=39 // pred_fallthru
        _
      // Predicated region
      $region45: #{cspx_forward.18} parent=39 // pred_check
        %p1801 = pneg %p112
      $region46: #{cspx_forward.18} parent=39 // pred_check_branch
        %1803 = sbr.rel (%p1801) target = $region48
      $region47: #{cspx_forward.18} parent=39 // pred_region
        %p1804 = scmp.lt.s32.totalorder %s16, 1
        %s1805 = scalar_select %p1804, %s16, 1
        %s1806 = smul.addr %s1805, 2
        %s1807 = scalar_lea.vmem %s3, %s1806
      $region48: #{cspx_forward.18} parent=39 // pred_fallthru
        _
    $region40: #{cspx_forward.18} parent=5 // pred_fallthru
      _
  $region6: #{cspx_forward.18} parent=0 // loop_footer
    %s14 = sadd.s32 1, %s10
  $region7: #{cspx_forward.18} parent=0 // loop_footer_branch
    %9 = sbr.rel target = $region3
  $region8: #{cspx_forward.18} parent=0 // loop_exit
    _

// kernel: cspx_forward.22
$region0: #{cspx_forward.22}
  #allocation0 [shape = 'u32[]', space=smem, size = 0x4, offset = 0x4, fixed_abs, tag = 'smem constant byte address 0x4 - core index']
  #allocation1 [shape = 'u32[72,128]{1,0:T(1,128)}', space=vmem, size = 0x9000, scoped, tag = 'internal scratch']
  %s0 = inlined_call_operand.vmem [shape: bf16[128,128], index: 0, kind: input, shape index: {}]
  %s1 = inlined_call_operand.vmem [shape: bf16[128,128], index: 1, kind: input, shape index: {}]
  %s2 = inlined_call_operand.vmem [shape: bf16[128,128], index: 2, kind: output, shape index: {0}]
  %s3 = inlined_call_operand.vmem [shape: f32[1,2,128], index: 3, kind: output, shape index: {1}]
  %4 = xla_tuple %s2, %s3
  %s5 = sld [smem:[#allocation0]]
  $region26: #{cspx_forward.22} parent=0
    _
  %s7 = ssub.s32 1, %s5
  %s8 = scalar_select 0, %s7, %s5
  // Predicated region
  $region2: #{cspx_forward.22} parent=0 // pred_check
    _
  $region3: #{cspx_forward.22} parent=0 // pred_check_branch
    %10 = sbr.rel (0) target = $region5
  $region4: #{cspx_forward.22} parent=0 // pred_region
    _
  $region5: #{cspx_forward.22} parent=0 // pred_fallthru
    _
  // Predicated region
  $region6: #{cspx_forward.22} parent=0 // pred_check
    _
  $region7: #{cspx_forward.22} parent=0 // pred_check_branch
    %12 = sbr.rel (0) target = $region9
  $region8: #{cspx_forward.22} parent=0 // pred_region
    _
  $region9: #{cspx_forward.22} parent=0 // pred_fallthru
    _
  %v13 = vld [vmem:[%s0] sm:$0xf]
  %v14 = vld [vmem:[%s0 + $0x4] sm:$0xf]
  %v15 = vld [vmem:[%s0 + $0x8] sm:$0xf]
  %v16 = vld [vmem:[%s0 + $0xc] sm:$0xf]
  %v17 = vld [vmem:[%s0 + $0x10] sm:$0xf]
  %v18 = vld [vmem:[%s0 + $0x14] sm:$0xf]
  %v19 = vld [vmem:[%s0 + $0x18] sm:$0xf]
  %v20 = vld [vmem:[%s0 + $0x1c] sm:$0xf]
  %v21 = vld [vmem:[%s0 + $0x20] sm:$0xf]
  %v22 = vld [vmem:[%s0 + $0x24] sm:$0xf]
  %v23 = vld [vmem:[%s0 + $0x28] sm:$0xf]
  %v24 = vld [vmem:[%s0 + $0x2c] sm:$0xf]
  %v25 = vld [vmem:[%s0 + $0x30] sm:$0xf]
  %v26 = vld [vmem:[%s0 + $0x34] sm:$0xf]
  %v27 = vld [vmem:[%s0 + $0x38] sm:$0xf]
  %v28 = vld [vmem:[%s0 + $0x3c] sm:$0xf]
  %v29 = vld [vmem:[%s1] sm:$0xf]
  %v30 = vld [vmem:[%s1 + $0x4] sm:$0xf]
  %v31 = vld [vmem:[%s1 + $0x8] sm:$0xf]
  %v32 = vld [vmem:[%s1 + $0xc] sm:$0xf]
  %v33 = vld [vmem:[%s1 + $0x10] sm:$0xf]
  %v34 = vld [vmem:[%s1 + $0x14] sm:$0xf]
  %v35 = vld [vmem:[%s1 + $0x18] sm:$0xf]
  %v36 = vld [vmem:[%s1 + $0x1c] sm:$0xf]
  %v37 = vld [vmem:[%s1 + $0x20] sm:$0xf]
  %v38 = vld [vmem:[%s1 + $0x24] sm:$0xf]
  %v39 = vld [vmem:[%s1 + $0x28] sm:$0xf]
  %v40 = vld [vmem:[%s1 + $0x2c] sm:$0xf]
  %v41 = vld [vmem:[%s1 + $0x30] sm:$0xf]
  %v42 = vld [vmem:[%s1 + $0x34] sm:$0xf]
  %v43 = vld [vmem:[%s1 + $0x38] sm:$0xf]
  %v44 = vld [vmem:[%s1 + $0x3c] sm:$0xf]
  %v61 = vunpack.c.l.b16 %v13
  %v62 = vunpack.c.l.b16 %v14
  %v63 = vunpack.c.l.b16 %v15
  %v64 = vunpack.c.l.b16 %v16
  %v65 = vunpack.c.l.b16 %v17
  %v66 = vunpack.c.l.b16 %v18
  %v67 = vunpack.c.l.b16 %v19
  %v68 = vunpack.c.l.b16 %v20
  %v69 = vunpack.c.l.b16 %v21
  %v70 = vunpack.c.l.b16 %v22
  %v71 = vunpack.c.l.b16 %v23
  %v72 = vunpack.c.l.b16 %v24
  %v73 = vunpack.c.l.b16 %v25
  %v74 = vunpack.c.l.b16 %v26
  %v75 = vunpack.c.l.b16 %v27
  %v76 = vunpack.c.l.b16 %v28
  %v77 = vpack.c.b16 %v62, %v61
  %v78 = vpack.c.b16 %v64, %v63
  %v79 = vpack.c.b16 %v66, %v65
  %v80 = vpack.c.b16 %v68, %v67
  %v81 = vpack.c.b16 %v70, %v69
  %v82 = vpack.c.b16 %v72, %v71
  %v83 = vpack.c.b16 %v74, %v73
  %v84 = vpack.c.b16 %v76, %v75
  %v109 = vunpack.c.l.b16 %v29
  %v110 = vunpack.c.l.b16 %v30
  %v111 = vunpack.c.l.b16 %v31
  %v112 = vunpack.c.l.b16 %v32
  %v113 = vunpack.c.l.b16 %v33
  %v114 = vunpack.c.l.b16 %v34
  %v115 = vunpack.c.l.b16 %v35
  %v116 = vunpack.c.l.b16 %v36
  %v117 = vunpack.c.l.b16 %v37
  %v118 = vunpack.c.l.b16 %v38
  %v119 = vunpack.c.l.b16 %v39
  %v120 = vunpack.c.l.b16 %v40
  %v121 = vunpack.c.l.b16 %v41
  %v122 = vunpack.c.l.b16 %v42
  %v123 = vunpack.c.l.b16 %v43
  %v124 = vunpack.c.l.b16 %v44
  %v125 = vpack.c.b16 %v110, %v109
  %v126 = vpack.c.b16 %v112, %v111
  %v127 = vpack.c.b16 %v114, %v113
  %v128 = vpack.c.b16 %v116, %v115
  %v129 = vpack.c.b16 %v118, %v117
  %v130 = vpack.c.b16 %v120, %v119
  %v131 = vpack.c.b16 %v122, %v121
  %v132 = vpack.c.b16 %v124, %v123
  %141 = vmatpush.bf16.msra.mxu0 %v132
  %142 = vmatpush.bf16.msra.mxu0 %v131
  %143 = vmatpush.bf16.msra.mxu0 %v130
  %144 = vmatpush.bf16.msra.mxu0 %v129
  %145 = vmatpush.bf16.msra.mxu0 %v128
  %146 = vmatpush.bf16.msra.mxu0 %v127
  %147 = vmatpush.bf16.msra.mxu0 %v126
  %148 = vmatpush.bf16.msra.mxu0 %v125
  %149 = vmatmul.bf16.gmra.mxu0 %v77
  %v150 = vpop.f32.mrf.mxu0
  %v151 = vadd.f32 0.0, %v150
  %v152 = vpop.f32.mrf.mxu0
  %v153 = vadd.f32 0.0, %v152
  %154 = vmatmul.bf16.gmra.mxu0 %v78
  %v155 = vpop.f32.mrf.mxu0
  %v156 = vadd.f32 0.0, %v155
  %v157 = vpop.f32.mrf.mxu0
  %v158 = vadd.f32 0.0, %v157
  %159 = vmatmul.bf16.gmra.mxu0 %v79
  %v160 = vpop.f32.mrf.mxu0
  %v161 = vadd.f32 0.0, %v160
  %v162 = vpop.f32.mrf.mxu0
  %v163 = vadd.f32 0.0, %v162
  %164 = vmatmul.bf16.gmra.mxu0 %v80
  %v165 = vpop.f32.mrf.mxu0
  %v166 = vadd.f32 0.0, %v165
  %v167 = vpop.f32.mrf.mxu0
  %v168 = vadd.f32 0.0, %v167
  %169 = vmatmul.bf16.gmra.mxu0 %v81
  %v170 = vpop.f32.mrf.mxu0
  %v171 = vadd.f32 0.0, %v170
  %v172 = vpop.f32.mrf.mxu0
  %v173 = vadd.f32 0.0, %v172
  %174 = vmatmul.bf16.gmra.mxu0 %v82
  %v175 = vpop.f32.mrf.mxu0
  %v176 = vadd.f32 0.0, %v175
  %v177 = vpop.f32.mrf.mxu0
  %v178 = vadd.f32 0.0, %v177
  %179 = vmatmul.bf16.gmra.mxu0 %v83
  %v180 = vpop.f32.mrf.mxu0
  %v181 = vadd.f32 0.0, %v180
  %v182 = vpop.f32.mrf.mxu0
  %v183 = vadd.f32 0.0, %v182
  %184 = vmatmul.bf16.gmra.mxu0 %v84
  %v185 = vpop.f32.mrf.mxu0
  %v186 = vadd.f32 0.0, %v185
  %v187 = vpop.f32.mrf.mxu0
  %v188 = vadd.f32 0.0, %v187
  %189 = vdwg.mxu0
  %v190 = vpack.c.bf16 %v151, %v151
  %v191 = vpack.c.bf16 %v153, %v153
  %v192 = vpack.c.bf16 %v156, %v156
  %v193 = vpack.c.bf16 %v158, %v158
  %v194 = vpack.c.bf16 %v161, %v161
  %v195 = vpack.c.bf16 %v163, %v163
  %v196 = vpack.c.bf16 %v166, %v166
  %v197 = vpack.c.bf16 %v168, %v168
  %v198 = vpack.c.bf16 %v171, %v171
  %v199 = vpack.c.bf16 %v173, %v173
  %v200 = vpack.c.bf16 %v176, %v176
  %v201 = vpack.c.bf16 %v178, %v178
  %v202 = vpack.c.bf16 %v181, %v181
  %v203 = vpack.c.bf16 %v183, %v183
  %v204 = vpack.c.bf16 %v186, %v186
  %v205 = vpack.c.bf16 %v188, %v188
  %206 = vst [vmem:[%s2] sm:$0xf] %v190
  %207 = vst [vmem:[%s2 + $0x4] sm:$0xf] %v191
  %208 = vst [vmem:[%s2 + $0x8] sm:$0xf] %v192
  %209 = vst [vmem:[%s2 + $0xc] sm:$0xf] %v193
  %210 = vst [vmem:[%s2 + $0x10] sm:$0xf] %v194
  %211 = vst [vmem:[%s2 + $0x14] sm:$0xf] %v195
  %212 = vst [vmem:[%s2 + $0x18] sm:$0xf] %v196
  %213 = vst [vmem:[%s2 + $0x1c] sm:$0xf] %v197
  %214 = vst [vmem:[%s2 + $0x20] sm:$0xf] %v198
  %215 = vst [vmem:[%s2 + $0x24] sm:$0xf] %v199
  %216 = vst [vmem:[%s2 + $0x28] sm:$0xf] %v200
  %217 = vst [vmem:[%s2 + $0x2c] sm:$0xf] %v201
  %218 = vst [vmem:[%s2 + $0x30] sm:$0xf] %v202
  %219 = vst [vmem:[%s2 + $0x34] sm:$0xf] %v203
  %220 = vst [vmem:[%s2 + $0x38] sm:$0xf] %v204
  %221 = vst [vmem:[%s2 + $0x3c] sm:$0xf] %v205
  %v222 = vadd.f32 %v151, %v153
  %v223 = vadd.f32 %v222, %v156
  %v224 = vadd.f32 %v223, %v158
  %v225 = vadd.f32 %v224, %v161
  %v226 = vadd.f32 %v225, %v163
  %v227 = vadd.f32 %v226, %v166
  %v228 = vadd.f32 %v227, %v168
  %v229 = vadd.f32 %v228, %v171
  %v230 = vadd.f32 %v229, %v173
  %v231 = vadd.f32 %v230, %v176
  %v232 = vadd.f32 %v231, %v178
  %v233 = vadd.f32 %v232, %v181
  %v234 = vadd.f32 %v233, %v183
  %v235 = vadd.f32 %v234, %v186
  %v236 = vadd.f32 %v235, %v188
  %v237 = vrot.slane %v236, 4
  %v238 = vadd.f32 %v236, %v237
  %v239 = vrot.slane %v238, 2
  %v240 = vadd.f32 %v238, %v239
  %v241 = vrot.slane %v240, 1
  %v242 = vadd.f32 %v240, %v241
  %v243 = vmul.f32 %v151, %v151
  %v244 = vmul.f32 %v153, %v153
  %v245 = vmul.f32 %v156, %v156
  %v246 = vmul.f32 %v158, %v158
  %v247 = vmul.f32 %v161, %v161
  %v248 = vmul.f32 %v163, %v163
  %v249 = vmul.f32 %v166, %v166
  %v250 = vmul.f32 %v168, %v168
  %v251 = vmul.f32 %v171, %v171
  %v252 = vmul.f32 %v173, %v173
  %v253 = vmul.f32 %v176, %v176
  %v254 = vmul.f32 %v178, %v178
  %v255 = vmul.f32 %v181, %v181
  %v256 = vmul.f32 %v183, %v183
  %v257 = vmul.f32 %v186, %v186
  %v258 = vmul.f32 %v188, %v188
  %v259 = vadd.f32 %v243, %v244
  %v260 = vadd.f32 %v259, %v245
  %v261 = vadd.f32 %v260, %v246
  %v262 = vadd.f32 %v261, %v247
  %v263 = vadd.f32 %v262, %v248
  %v264 = vadd.f32 %v263, %v249
  %v265 = vadd.f32 %v264, %v250
  %v266 = vadd.f32 %v265, %v251
  %v267 = vadd.f32 %v266, %v252
  %v268 = vadd.f32 %v267, %v253
  %v269 = vadd.f32 %v268, %v254
  %v270 = vadd.f32 %v269, %v255
  %v271 = vadd.f32 %v270, %v256
  %v272 = vadd.f32 %v271, %v257
  %v273 = vadd.f32 %v272, %v258
  %v274 = vrot.slane %v273, 4
  %v275 = vadd.f32 %v273, %v274
  %v276 = vrot.slane %v275, 2
  %v277 = vadd.f32 %v275, %v276
  %v278 = vrot.slane %v277, 1
  %v279 = vadd.f32 %v277, %v278
  %vm280 = vcmask 1040384
  %v281 = vsel %vm280, %v242, %v279
  %282 = vst [vmem:[%s3] sm:$0x3] %v281
  // Predicated region
  $region10: #{cspx_forward.22} parent=0 // pred_check
    _
  $region11: #{cspx_forward.22} parent=0 // pred_check_branch
    %284 = sbr.rel (0) target = $region13
  $region12: #{cspx_forward.22} parent=0 // pred_region
    _
  $region13: #{cspx_forward.22} parent=0 // pred_fallthru
    _
  // Predicated region
  $region14: #{cspx_forward.22} parent=0 // pred_check
    _
  $region15: #{cspx_forward.22} parent=0 // pred_check_branch
    %286 = sbr.rel (0) target = $region17
  $region16: #{cspx_forward.22} parent=0 // pred_region
    _
  $region17: #{cspx_forward.22} parent=0 // pred_fallthru
    _
  // Predicated region
  $region18: #{cspx_forward.22} parent=0 // pred_check
    _
  $region19: #{cspx_forward.22} parent=0 // pred_check_branch
    %288 = sbr.rel (0) target = $region21
  $region20: #{cspx_forward.22} parent=0 // pred_region
    _
  $region21: #{cspx_forward.22} parent=0 // pred_fallthru
    _
  // Predicated region
  $region22: #{cspx_forward.22} parent=0 // pred_check
    _
  $region23: #{cspx_forward.22} parent=0 // pred_check_branch
    %290 = sbr.rel (0) target = $region25
  $region24: #{cspx_forward.22} parent=0 // pred_region
    _
  $region25: #{cspx_forward.22} parent=0 // pred_fallthru
    _

// kernel: cspx_forward.27
$region0: #{cspx_forward.27}
  #allocation0 [shape = 'u32[]', space=smem, size = 0x4, offset = 0x4, fixed_abs, tag = 'smem constant byte address 0x4 - core index']
  #allocation1 [shape = 'u32[72,128]{1,0:T(1,128)}', space=vmem, size = 0x9000, scoped, tag = 'internal scratch']
  %s0 = inlined_call_operand.vmem [shape: bf16[128,128], index: 0, kind: input, shape index: {}]
  %s1 = inlined_call_operand.vmem [shape: f32[1,128], index: 1, kind: input, shape index: {}]
  %s2 = inlined_call_operand.vmem [shape: f32[1,128], index: 2, kind: input, shape index: {}]
  %s3 = inlined_call_operand.vmem [shape: bf16[128,128], index: 3, kind: input, shape index: {}]
  %s4 = inlined_call_operand.vmem [shape: bf16[128,128], index: 4, kind: output, shape index: {}]
  %s5 = sld [smem:[#allocation0]]
  $region26: #{cspx_forward.27} parent=0
    _
  %s7 = ssub.s32 1, %s5
  %s8 = scalar_select 0, %s7, %s5
  // Predicated region
  $region2: #{cspx_forward.27} parent=0 // pred_check
    _
  $region3: #{cspx_forward.27} parent=0 // pred_check_branch
    %10 = sbr.rel (0) target = $region5
  $region4: #{cspx_forward.27} parent=0 // pred_region
    _
  $region5: #{cspx_forward.27} parent=0 // pred_fallthru
    _
  // Predicated region
  $region6: #{cspx_forward.27} parent=0 // pred_check
    _
  $region7: #{cspx_forward.27} parent=0 // pred_check_branch
    %12 = sbr.rel (0) target = $region9
  $region8: #{cspx_forward.27} parent=0 // pred_region
    _
  $region9: #{cspx_forward.27} parent=0 // pred_fallthru
    _
  // Predicated region
  $region10: #{cspx_forward.27} parent=0 // pred_check
    _
  $region11: #{cspx_forward.27} parent=0 // pred_check_branch
    %14 = sbr.rel (0) target = $region13
  $region12: #{cspx_forward.27} parent=0 // pred_region
    _
  $region13: #{cspx_forward.27} parent=0 // pred_fallthru
    _
  // Predicated region
  $region14: #{cspx_forward.27} parent=0 // pred_check
    _
  $region15: #{cspx_forward.27} parent=0 // pred_check_branch
    %16 = sbr.rel (0) target = $region17
  $region16: #{cspx_forward.27} parent=0 // pred_region
    _
  $region17: #{cspx_forward.27} parent=0 // pred_fallthru
    _
  %v17 = vld [vmem:[%s0] sm:$0xf]
  %v18 = vld [vmem:[%s0 + $0x4] sm:$0xf]
  %v19 = vld [vmem:[%s0 + $0x8] sm:$0xf]
  %v20 = vld [vmem:[%s0 + $0xc] sm:$0xf]
  %v21 = vld [vmem:[%s0 + $0x10] sm:$0xf]
  %v22 = vld [vmem:[%s0 + $0x14] sm:$0xf]
  %v23 = vld [vmem:[%s0 + $0x18] sm:$0xf]
  %v24 = vld [vmem:[%s0 + $0x1c] sm:$0xf]
  %v25 = vld [vmem:[%s0 + $0x20] sm:$0xf]
  %v26 = vld [vmem:[%s0 + $0x24] sm:$0xf]
  %v27 = vld [vmem:[%s0 + $0x28] sm:$0xf]
  %v28 = vld [vmem:[%s0 + $0x2c] sm:$0xf]
  %v29 = vld [vmem:[%s0 + $0x30] sm:$0xf]
  %v30 = vld [vmem:[%s0 + $0x34] sm:$0xf]
  %v31 = vld [vmem:[%s0 + $0x38] sm:$0xf]
  %v32 = vld [vmem:[%s0 + $0x3c] sm:$0xf]
  %v33 = vunpack.c.l.bf16 %v17
  %v34 = vunpack.c.l.bf16 %v18
  %v35 = vunpack.c.l.bf16 %v19
  %v36 = vunpack.c.l.bf16 %v20
  %v37 = vunpack.c.l.bf16 %v21
  %v38 = vunpack.c.l.bf16 %v22
  %v39 = vunpack.c.l.bf16 %v23
  %v40 = vunpack.c.l.bf16 %v24
  %v41 = vunpack.c.l.bf16 %v25
  %v42 = vunpack.c.l.bf16 %v26
  %v43 = vunpack.c.l.bf16 %v27
  %v44 = vunpack.c.l.bf16 %v28
  %v45 = vunpack.c.l.bf16 %v29
  %v46 = vunpack.c.l.bf16 %v30
  %v47 = vunpack.c.l.bf16 %v31
  %v48 = vunpack.c.l.bf16 %v32
  %v49 = vld [vmem:[%s1] sm:$0x1]
  %v51 = vperm.slane %v49, 0
  %v53 = vmul.f32 %v33, %v51
  %v54 = vmul.f32 %v34, %v51
  %v55 = vmul.f32 %v35, %v51
  %v56 = vmul.f32 %v36, %v51
  %v57 = vmul.f32 %v37, %v51
  %v58 = vmul.f32 %v38, %v51
  %v59 = vmul.f32 %v39, %v51
  %v60 = vmul.f32 %v40, %v51
  %v61 = vmul.f32 %v41, %v51
  %v62 = vmul.f32 %v42, %v51
  %v63 = vmul.f32 %v43, %v51
  %v64 = vmul.f32 %v44, %v51
  %v65 = vmul.f32 %v45, %v51
  %v66 = vmul.f32 %v46, %v51
  %v67 = vmul.f32 %v47, %v51
  %v68 = vmul.f32 %v48, %v51
  %v69 = vld [vmem:[%s2] sm:$0x1]
  %v71 = vperm.slane %v69, 0
  %v73 = vadd.f32 %v53, %v71
  %v74 = vadd.f32 %v54, %v71
  %v75 = vadd.f32 %v55, %v71
  %v76 = vadd.f32 %v56, %v71
  %v77 = vadd.f32 %v57, %v71
  %v78 = vadd.f32 %v58, %v71
  %v79 = vadd.f32 %v59, %v71
  %v80 = vadd.f32 %v60, %v71
  %v81 = vadd.f32 %v61, %v71
  %v82 = vadd.f32 %v62, %v71
  %v83 = vadd.f32 %v63, %v71
  %v84 = vadd.f32 %v64, %v71
  %v85 = vadd.f32 %v65, %v71
  %v86 = vadd.f32 %v66, %v71
  %v87 = vadd.f32 %v67, %v71
  %v88 = vadd.f32 %v68, %v71
  %v89 = vmin.f32 %v73, 20.0
  %v90 = vmin.f32 %v74, 20.0
  %v91 = vmin.f32 %v75, 20.0
  %v92 = vmin.f32 %v76, 20.0
  %v93 = vmin.f32 %v77, 20.0
  %v94 = vmin.f32 %v78, 20.0
  %v95 = vmin.f32 %v79, 20.0
  %v96 = vmin.f32 %v80, 20.0
  %v97 = vmin.f32 %v81, 20.0
  %v98 = vmin.f32 %v82, 20.0
  %v99 = vmin.f32 %v83, 20.0
  %v100 = vmin.f32 %v84, 20.0
  %v101 = vmin.f32 %v85, 20.0
  %v102 = vmin.f32 %v86, 20.0
  %v103 = vmin.f32 %v87, 20.0
  %v104 = vmin.f32 %v88, 20.0
  %v105 = vmul.f32 %v89, 1.442695
  %v106 = vpow.pop %v105
  %v107 = vmul.f32 %v90, 1.442695
  %v108 = vpow.pop %v107
  %v109 = vmul.f32 %v91, 1.442695
  %v110 = vpow.pop %v109
  %v111 = vmul.f32 %v92, 1.442695
  %v112 = vpow.pop %v111
  %v113 = vmul.f32 %v93, 1.442695
  %v114 = vpow.pop %v113
  %v115 = vmul.f32 %v94, 1.442695
  %v116 = vpow.pop %v115
  %v117 = vmul.f32 %v95, 1.442695
  %v118 = vpow.pop %v117
  %v119 = vmul.f32 %v96, 1.442695
  %v120 = vpow.pop %v119
  %v121 = vmul.f32 %v97, 1.442695
  %v122 = vpow.pop %v121
  %v123 = vmul.f32 %v98, 1.442695
  %v124 = vpow.pop %v123
  %v125 = vmul.f32 %v99, 1.442695
  %v126 = vpow.pop %v125
  %v127 = vmul.f32 %v100, 1.442695
  %v128 = vpow.pop %v127
  %v129 = vmul.f32 %v101, 1.442695
  %v130 = vpow.pop %v129
  %v131 = vmul.f32 %v102, 1.442695
  %v132 = vpow.pop %v131
  %v133 = vmul.f32 %v103, 1.442695
  %v134 = vpow.pop %v133
  %v135 = vmul.f32 %v104, 1.442695
  %v136 = vpow.pop %v135
  %v137 = vadd.f32 %v106, 1.0
  %v138 = vadd.f32 %v108, 1.0
  %v139 = vadd.f32 %v110, 1.0
  %v140 = vadd.f32 %v112, 1.0
  %v141 = vadd.f32 %v114, 1.0
  %v142 = vadd.f32 %v116, 1.0
  %v143 = vadd.f32 %v118, 1.0
  %v144 = vadd.f32 %v120, 1.0
  %v145 = vadd.f32 %v122, 1.0
  %v146 = vadd.f32 %v124, 1.0
  %v147 = vadd.f32 %v126, 1.0
  %v148 = vadd.f32 %v128, 1.0
  %v149 = vadd.f32 %v130, 1.0
  %v150 = vadd.f32 %v132, 1.0
  %v151 = vadd.f32 %v134, 1.0
  %v152 = vadd.f32 %v136, 1.0
  %v153 = vmul.f32 %v137, %v137
  %v154 = vmul.f32 %v138, %v138
  %v155 = vmul.f32 %v139, %v139
  %v156 = vmul.f32 %v140, %v140
  %v157 = vmul.f32 %v141, %v141
  %v158 = vmul.f32 %v142, %v142
  %v159 = vmul.f32 %v143, %v143
  %v160 = vmul.f32 %v144, %v144
  %v161 = vmul.f32 %v145, %v145
  %v162 = vmul.f32 %v146, %v146
  %v163 = vmul.f32 %v147, %v147
  %v164 = vmul.f32 %v148, %v148
  %v165 = vmul.f32 %v149, %v149
  %v166 = vmul.f32 %v150, %v150
  %v167 = vmul.f32 %v151, %v151
  %v168 = vmul.f32 %v152, %v152
  %v169 = vadd.f32 %v153, 1.0
  %v170 = vadd.f32 %v154, 1.0
  %v171 = vadd.f32 %v155, 1.0
  %v172 = vadd.f32 %v156, 1.0
  %v173 = vadd.f32 %v157, 1.0
  %v174 = vadd.f32 %v158, 1.0
  %v175 = vadd.f32 %v159, 1.0
  %v176 = vadd.f32 %v160, 1.0
  %v177 = vadd.f32 %v161, 1.0
  %v178 = vadd.f32 %v162, 1.0
  %v179 = vadd.f32 %v163, 1.0
  %v180 = vadd.f32 %v164, 1.0
  %v181 = vadd.f32 %v165, 1.0
  %v182 = vadd.f32 %v166, 1.0
  %v183 = vadd.f32 %v167, 1.0
  %v184 = vadd.f32 %v168, 1.0
  %v185 = vrcp.pop %v169
  %v186 = vrcp.pop %v170
  %v187 = vrcp.pop %v171
  %v188 = vrcp.pop %v172
  %v189 = vrcp.pop %v173
  %v190 = vrcp.pop %v174
  %v191 = vrcp.pop %v175
  %v192 = vrcp.pop %v176
  %v193 = vrcp.pop %v177
  %v194 = vrcp.pop %v178
  %v195 = vrcp.pop %v179
  %v196 = vrcp.pop %v180
  %v197 = vrcp.pop %v181
  %v198 = vrcp.pop %v182
  %v199 = vrcp.pop %v183
  %v200 = vrcp.pop %v184
  %v201 = vmul.f32 %v185, 2.0
  %v202 = vmul.f32 %v186, 2.0
  %v203 = vmul.f32 %v187, 2.0
  %v204 = vmul.f32 %v188, 2.0
  %v205 = vmul.f32 %v189, 2.0
  %v206 = vmul.f32 %v190, 2.0
  %v207 = vmul.f32 %v191, 2.0
  %v208 = vmul.f32 %v192, 2.0
  %v209 = vmul.f32 %v193, 2.0
  %v210 = vmul.f32 %v194, 2.0
  %v211 = vmul.f32 %v195, 2.0
  %v212 = vmul.f32 %v196, 2.0
  %v213 = vmul.f32 %v197, 2.0
  %v214 = vmul.f32 %v198, 2.0
  %v215 = vmul.f32 %v199, 2.0
  %v216 = vmul.f32 %v200, 2.0
  %v217 = vsub.f32 1.0, %v201
  %v218 = vsub.f32 1.0, %v202
  %v219 = vsub.f32 1.0, %v203
  %v220 = vsub.f32 1.0, %v204
  %v221 = vsub.f32 1.0, %v205
  %v222 = vsub.f32 1.0, %v206
  %v223 = vsub.f32 1.0, %v207
  %v224 = vsub.f32 1.0, %v208
  %v225 = vsub.f32 1.0, %v209
  %v226 = vsub.f32 1.0, %v210
  %v227 = vsub.f32 1.0, %v211
  %v228 = vsub.f32 1.0, %v212
  %v229 = vsub.f32 1.0, %v213
  %v230 = vsub.f32 1.0, %v214
  %v231 = vsub.f32 1.0, %v215
  %v232 = vsub.f32 1.0, %v216
  %v233 = vmul.f32 %v73, %v217
  %v234 = vmul.f32 %v74, %v218
  %v235 = vmul.f32 %v75, %v219
  %v236 = vmul.f32 %v76, %v220
  %v237 = vmul.f32 %v77, %v221
  %v238 = vmul.f32 %v78, %v222
  %v239 = vmul.f32 %v79, %v223
  %v240 = vmul.f32 %v80, %v224
  %v241 = vmul.f32 %v81, %v225
  %v242 = vmul.f32 %v82, %v226
  %v243 = vmul.f32 %v83, %v227
  %v244 = vmul.f32 %v84, %v228
  %v245 = vmul.f32 %v85, %v229
  %v246 = vmul.f32 %v86, %v230
  %v247 = vmul.f32 %v87, %v231
  %v248 = vmul.f32 %v88, %v232
  %v249 = vld [vmem:[%s3] sm:$0xf]
  %v250 = vld [vmem:[%s3 + $0x4] sm:$0xf]
  %v251 = vld [vmem:[%s3 + $0x8] sm:$0xf]
  %v252 = vld [vmem:[%s3 + $0xc] sm:$0xf]
  %v253 = vld [vmem:[%s3 + $0x10] sm:$0xf]
  %v254 = vld [vmem:[%s3 + $0x14] sm:$0xf]
  %v255 = vld [vmem:[%s3 + $0x18] sm:$0xf]
  %v256 = vld [vmem:[%s3 + $0x1c] sm:$0xf]
  %v257 = vld [vmem:[%s3 + $0x20] sm:$0xf]
  %v258 = vld [vmem:[%s3 + $0x24] sm:$0xf]
  %v259 = vld [vmem:[%s3 + $0x28] sm:$0xf]
  %v260 = vld [vmem:[%s3 + $0x2c] sm:$0xf]
  %v261 = vld [vmem:[%s3 + $0x30] sm:$0xf]
  %v262 = vld [vmem:[%s3 + $0x34] sm:$0xf]
  %v263 = vld [vmem:[%s3 + $0x38] sm:$0xf]
  %v264 = vld [vmem:[%s3 + $0x3c] sm:$0xf]
  %v265 = vunpack.c.l.bf16 %v249
  %v266 = vunpack.c.l.bf16 %v250
  %v267 = vunpack.c.l.bf16 %v251
  %v268 = vunpack.c.l.bf16 %v252
  %v269 = vunpack.c.l.bf16 %v253
  %v270 = vunpack.c.l.bf16 %v254
  %v271 = vunpack.c.l.bf16 %v255
  %v272 = vunpack.c.l.bf16 %v256
  %v273 = vunpack.c.l.bf16 %v257
  %v274 = vunpack.c.l.bf16 %v258
  %v275 = vunpack.c.l.bf16 %v259
  %v276 = vunpack.c.l.bf16 %v260
  %v277 = vunpack.c.l.bf16 %v261
  %v278 = vunpack.c.l.bf16 %v262
  %v279 = vunpack.c.l.bf16 %v263
  %v280 = vunpack.c.l.bf16 %v264
  %v281 = vadd.f32 %v233, %v265
  %v282 = vadd.f32 %v234, %v266
  %v283 = vadd.f32 %v235, %v267
  %v284 = vadd.f32 %v236, %v268
  %v285 = vadd.f32 %v237, %v269
  %v286 = vadd.f32 %v238, %v270
  %v287 = vadd.f32 %v239, %v271
  %v288 = vadd.f32 %v240, %v272
  %v289 = vadd.f32 %v241, %v273
  %v290 = vadd.f32 %v242, %v274
  %v291 = vadd.f32 %v243, %v275
  %v292 = vadd.f32 %v244, %v276
  %v293 = vadd.f32 %v245, %v277
  %v294 = vadd.f32 %v246, %v278
  %v295 = vadd.f32 %v247, %v279
  %v296 = vadd.f32 %v248, %v280
  %v297 = vpack.c.bf16 %v281, %v281
  %v298 = vpack.c.bf16 %v282, %v282
  %v299 = vpack.c.bf16 %v283, %v283
  %v300 = vpack.c.bf16 %v284, %v284
  %v301 = vpack.c.bf16 %v285, %v285
  %v302 = vpack.c.bf16 %v286, %v286
  %v303 = vpack.c.bf16 %v287, %v287
  %v304 = vpack.c.bf16 %v288, %v288
  %v305 = vpack.c.bf16 %v289, %v289
  %v306 = vpack.c.bf16 %v290, %v290
  %v307 = vpack.c.bf16 %v291, %v291
  %v308 = vpack.c.bf16 %v292, %v292
  %v309 = vpack.c.bf16 %v293, %v293
  %v310 = vpack.c.bf16 %v294, %v294
  %v311 = vpack.c.bf16 %v295, %v295
  %v312 = vpack.c.bf16 %v296, %v296
  %313 = vst [vmem:[%s4] sm:$0xf] %v297
  %314 = vst [vmem:[%s4 + $0x4] sm:$0xf] %v298
  %315 = vst [vmem:[%s4 + $0x8] sm:$0xf] %v299
  %316 = vst [vmem:[%s4 + $0xc] sm:$0xf] %v300
  %317 = vst [vmem:[%s4 + $0x10] sm:$0xf] %v301
  %318 = vst [vmem:[%s4 + $0x14] sm:$0xf] %v302
  %319 = vst [vmem:[%s4 + $0x18] sm:$0xf] %v303
  %320 = vst [vmem:[%s4 + $0x1c] sm:$0xf] %v304
  %321 = vst [vmem:[%s4 + $0x20] sm:$0xf] %v305
  %322 = vst [vmem:[%s4 + $0x24] sm:$0xf] %v306
  %323 = vst [vmem:[%s4 + $0x28] sm:$0xf] %v307
  %324 = vst [vmem:[%s4 + $0x2c] sm:$0xf] %v308
  %325 = vst [vmem:[%s4 + $0x30] sm:$0xf] %v309
  %326 = vst [vmem:[%s4 + $0x34] sm:$0xf] %v310
  %327 = vst [vmem:[%s4 + $0x38] sm:$0xf] %v311
  %328 = vst [vmem:[%s4 + $0x3c] sm:$0xf] %v312
  // Predicated region
  $region18: #{cspx_forward.27} parent=0 // pred_check
    _
  $region19: #{cspx_forward.27} parent=0 // pred_check_branch
    %330 = sbr.rel (0) target = $region21
  $region20: #{cspx_forward.27} parent=0 // pred_region
    _
  $region21: #{cspx_forward.27} parent=0 // pred_fallthru
    _
  // Predicated region
  $region22: #{cspx_forward.27} parent=0 // pred_check
    _
  $region23: #{cspx_forward.27} parent=0 // pred_check_branch
    %332 = sbr.rel (0) target = $region25
  $region24: #{cspx_forward.27} parent=0 // pred_region
    _
  $region25: #{cspx_forward.27} parent=0 // pred_fallthru
    _

// kernel: cspx_forward.26
$region0: #{cspx_forward.26}
  #allocation0 [shape = 'u32[]', space=smem, size = 0x4, offset = 0x4, fixed_abs, tag = 'smem constant byte address 0x4 - core index']
  #allocation1 [shape = 'u32[72,128]{1,0:T(1,128)}', space=vmem, size = 0x9000, scoped, tag = 'internal scratch']
  %s0 = inlined_call_operand.vmem [shape: bf16[2,10,10,128], index: 0, kind: input, shape index: {}]
  %s1 = inlined_call_operand.vmem [shape: bf16[9,128,128], index: 1, kind: input, shape index: {}]
  %s2 = inlined_call_operand.vmem [shape: bf16[2,8,8,128], index: 2, kind: output, shape index: {0}]
  %s3 = inlined_call_operand.vmem [shape: f32[2,2,128], index: 3, kind: output, shape index: {1}]
  %4 = xla_tuple %s2, %s3
  %s5 = sld [smem:[#allocation0]]
  $region49: #{cspx_forward.26} parent=0
    _
  %s7 = ssub.s32 1, %s5
  %s8 = scalar_select 0, %s7, %s5
  loop: start=0, step=1, limit=4
  $region2: #{cspx_forward.26} parent=0 // loop_pre_header
    _
  $region3: #{cspx_forward.26} parent=0 // loop_header
    %s10 = sphi 0, %s14
    %p11 = scmp.ge.s32.totalorder %s10, 4
    %s20 = sphi 0, %s22
    %s23 = sphi 0, %s20
    %s24 = sphi 0, %s23
    %s40 = sphi 0, %s24
    %s44 = sphi 0, %s44
    %s46 = sphi 0, %s44
    %s47 = sphi 0, %s46
    %s61 = sphi 0, %s47
    %s67 = sphi 0, %s69
    %s70 = sphi 0, %s67
    %s71 = sphi 0, %s70
    %s87 = sphi 0, %s71
    %s93 = sphi 0, %s95
    %s96 = sphi 0, %s93
    %s97 = sphi 0, %s96
    %s113 = sphi 0, %s97
  $region4: #{cspx_forward.26} parent=0 // loop_header_branch
    %13 = sbr.rel (%p11) target = $region8
  $region5: #{cspx_forward.26} parent=0 // loop_body
    %s15 = ssub.s32 %s10, 1
    %s16 = ssub.s32 %s10, 2
    %s17 = sadd.s32 %s10, 1
    %s18 = ssub.s32 %s10, %s17
    %p19 = scmp.eq.s32.totalorder %s18, 0
    %s21 = sadd.s32 %s20, 1
    %s22 = scalar_select %p19, %s20, %s21
    %p25 = pneg %p19
    %p26 = scmp.eq.s32.totalorder %s10, 1
    %p27 = por %p25, %p26
    %p28 = scmp.ne.s32.totalorder %s20, %s23
    %p29 = scmp.eq.s32.totalorder %s10, 0
    %p30 = por %p28, %p29
    %p31 = scmp.ne.s32.totalorder %s20, %s23
    %p32 = scmp.eq.s32.totalorder %s15, 1
    %p33 = por %p31, %p32
    %p34 = scmp.ne.s32.totalorder %s23, %s24
    %p35 = scmp.eq.s32.totalorder %s15, 0
    %p36 = por %p34, %p35
    %p37 = scmp.ne.s32.totalorder %s23, %s24
    %p38 = scmp.eq.s32.totalorder %s16, 1
    %p39 = por %p37, %p38
    %p41 = scmp.ne.s32.totalorder %s24, %s40
    %p42 = scmp.eq.s32.totalorder %s16, 0
    %p43 = por %p41, %p42
    %s45 = sadd.s32 %s44, 1
    %p48 = scmp.eq.s32.totalorder %s10, 1
    %p49 = scmp.ne.s32.totalorder %s44, %s46
    %p50 = scmp.eq.s32.totalorder %s10, 0
    %p51 = por %p49, %p50
    %p52 = scmp.ne.s32.totalorder %s44, %s46
    %p53 = scmp.eq.s32.totalorder %s15, 1
    %p54 = por %p52, %p53
    %p55 = scmp.ne.s32.totalorder %s46, %s47
    %p56 = scmp.eq.s32.totalorder %s15, 0
    %p57 = por %p55, %p56
    %p58 = scmp.ne.s32.totalorder %s46, %s47
    %p59 = scmp.eq.s32.totalorder %s16, 1
    %p60 = por %p58, %p59
    %p62 = scmp.ne.s32.totalorder %s47, %s61
    %p63 = scmp.eq.s32.totalorder %s16, 0
    %p64 = por %p62, %p63
    %s65 = ssub.s32 %s10, %s17
    %p66 = scmp.eq.s32.totalorder %s65, 0
    %s68 = sadd.s32 %s67, 1
    %s69 = scalar_select %p66, %s67, %s68
    %p72 = pneg %p66
    %p73 = scmp.eq.s32.totalorder %s10, 1
    %p74 = por %p72, %p73
    %p75 = scmp.ne.s32.totalorder %s67, %s70
    %p76 = scmp.eq.s32.totalorder %s10, 0
    %p77 = por %p75, %p76
    %p78 = scmp.ne.s32.totalorder %s67, %s70
    %p79 = scmp.eq.s32.totalorder %s15, 1
    %p80 = por %p78, %p79
    %p81 = scmp.ne.s32.totalorder %s70, %s71
    %p82 = scmp.eq.s32.totalorder %s15, 0
    %p83 = por %p81, %p82
    %p84 = scmp.ne.s32.totalorder %s70, %s71
    %p85 = scmp.eq.s32.totalorder %s16, 1
    %p86 = por %p84, %p85
    %p88 = scmp.ne.s32.totalorder %s71, %s87
    %p89 = scmp.eq.s32.totalorder %s16, 0
    %p90 = por %p88, %p89
    %s91 = ssub.s32 %s10, %s17
    %p92 = scmp.eq.s32.totalorder %s91, 0
    %s94 = sadd.s32 %s93, 1
    %s95 = scalar_select %p92, %s93, %s94
    %p98 = pneg %p92
    %p99 = scmp.eq.s32.totalorder %s10, 1
    %p100 = por %p98, %p99
    %p101 = scmp.ne.s32.totalorder %s93, %s96
    %p102 = scmp.eq.s32.totalorder %s10, 0
    %p103 = por %p101, %p102
    %p104 = scmp.ne.s32.totalorder %s93, %s96
    %p105 = scmp.eq.s32.totalorder %s15, 1
    %p106 = por %p104, %p105
    %p107 = scmp.ne.s32.totalorder %s96, %s97
    %p108 = scmp.eq.s32.totalorder %s15, 0
    %p109 = por %p107, %p108
    %p110 = scmp.ne.s32.totalorder %s96, %s97
    %p111 = scmp.eq.s32.totalorder %s16, 1
    %p112 = por %p110, %p111
    %p114 = scmp.ne.s32.totalorder %s97, %s113
    %p115 = scmp.eq.s32.totalorder %s16, 0
    %p116 = por %p114, %p115
    %p117 = scmp.le.s32.totalorder 1, %s10
    %p118 = scmp.lt.s32.totalorder %s10, 3
    %p119 = pnand %p117, %p118
    %p120 = pneg %p119
    // Predicated region
    $region9: #{cspx_forward.26} parent=5 // pred_check
      _
    $region10: #{cspx_forward.26} parent=5 // pred_check_branch
      %122 = sbr.rel (%p119) target = $region12
    $region11: #{cspx_forward.26} parent=5 // pred_region
      %s123 = ssub.s32 %s10, 1
      // Predicated region
      $region13: #{cspx_forward.26} parent=11 // pred_check
        %p124 = pneg %p57
      $region14: #{cspx_forward.26} parent=11 // pred_check_branch
        %126 = sbr.rel (%p124) target = $region16
      $region15: #{cspx_forward.26} parent=11 // pred_region
        _
      $region16: #{cspx_forward.26} parent=11 // pred_fallthru
        _
    $region12: #{cspx_forward.26} parent=5 // pred_fallthru
      _
    %p127 = scmp.lt.s32.totalorder %s10, 2
    // Predicated region
    $region17: #{cspx_forward.26} parent=5 // pred_check
      %p128 = pneg %p127
    $region18: #{cspx_forward.26} parent=5 // pred_check_branch
      %130 = sbr.rel (%p128) target = $region20
    $region19: #{cspx_forward.26} parent=5 // pred_region
      // Predicated region
      $region21: #{cspx_forward.26} parent=19 // pred_check
        %p131 = pneg %p30
      $region22: #{cspx_forward.26} parent=19 // pred_check_branch
        %133 = sbr.rel (%p131) target = $region24
      $region23: #{cspx_forward.26} parent=19 // pred_region
        %p134 = scmp.lt.s32.totalorder %s10, 1
        %s135 = scalar_select %p134, %s10, 1
        %s136 = smul.addr %s135, 20
        %s137 = smul.addr %s136, 4
        %s138 = scalar_lea.vmem %s0, %s137
      $region24: #{cspx_forward.26} parent=19 // pred_fallthru
        _
    $region20: #{cspx_forward.26} parent=5 // pred_fallthru
      _
    %p139 = scmp.le.s32.totalorder 1, %s10
    %p140 = scmp.lt.s32.totalorder %s10, 3
    %p141 = pnand %p139, %p140
    %p142 = pneg %p141
    // Predicated region
    $region25: #{cspx_forward.26} parent=5 // pred_check
      _
    $region26: #{cspx_forward.26} parent=5 // pred_check_branch
      %144 = sbr.rel (%p141) target = $region28
    $region27: #{cspx_forward.26} parent=5 // pred_region
      %s145 = ssub.s32 %s10, 1
      %p146 = scmp.lt.s32.totalorder %s15, 1
      %s147 = scalar_select %p146, %s15, 1
      %s148 = smul.addr %s147, 20
      %s149 = smul.addr %s148, 4
      %s150 = scalar_lea.vmem %s0, %s149
      %p151 = pneg %p36
      %p152 = pneg %p33
      %p153 = pneg %p57
      %p154 = pneg %p54
      %p155 = pneg %p83
      %p156 = pneg %p80
      %p157 = scmp.lt.s32.totalorder %s15, 1
      %s158 = scalar_select %p157, %s15, 1
      %s159 = smul.addr %s158, 8
      %s160 = smul.addr %s159, 4
      %s161 = scalar_lea.vmem %s2, %s160
      %p162 = pneg %p109
      %p163 = pneg %p106
      %p164 = scmp.lt.s32.totalorder %s15, 1
      %s165 = scalar_select %p164, %s15, 1
      %s166 = smul.addr %s165, 2
      %s167 = scalar_lea.vmem %s3, %s166
      %p168 = scmp.lt.s32.totalorder %s15, 1
      %s169 = scalar_select %p168, %s15, 1
      %s170 = smul.addr %s169, 20
      %s171 = smul.addr %s170, 4
      %s172 = scalar_lea.vmem %s0, %s171
      %p173 = scmp.lt.s32.totalorder %s15, 1
      %s174 = scalar_select %p173, %s15, 1
      %s175 = smul.addr %s174, 8
      %s176 = smul.addr %s175, 4
      %s177 = scalar_lea.vmem %s2, %s176
      %p178 = scmp.lt.s32.totalorder %s15, 1
      %s179 = scalar_select %p178, %s15, 1
      %s180 = smul.addr %s179, 2
      %s181 = scalar_lea.vmem %s3, %s180
      %v182 = vld [vmem:[%s172] sm:$0xf]
      %v183 = vld [vmem:[%s172 + $0x8] sm:$0xf]
      %v184 = vld [vmem:[%s172 + $0x10] sm:$0xf]
      %v185 = vld [vmem:[%s172 + $0x18] sm:$0xf]
      %v186 = vld [vmem:[%s172 + $0x20] sm:$0xf]
      %v187 = vld [vmem:[%s172 + $0x28] sm:$0xf]
      %v188 = vld [vmem:[%s172 + $0x30] sm:$0xf]
      %v189 = vld [vmem:[%s172 + $0x38] sm:$0xf]
      %v190 = vld [vmem:[%s1] sm:$0xf]
      %v191 = vld [vmem:[%s1 + $0x4] sm:$0xf]
      %v192 = vld [vmem:[%s1 + $0x8] sm:$0xf]
      %v193 = vld [vmem:[%s1 + $0xc] sm:$0xf]
      %v194 = vld [vmem:[%s1 + $0x10] sm:$0xf]
      %v195 = vld [vmem:[%s1 + $0x14] sm:$0xf]
      %v196 = vld [vmem:[%s1 + $0x18] sm:$0xf]
      %v197 = vld [vmem:[%s1 + $0x1c] sm:$0xf]
      %v198 = vld [vmem:[%s1 + $0x20] sm:$0xf]
      %v199 = vld [vmem:[%s1 + $0x24] sm:$0xf]
      %v200 = vld [vmem:[%s1 + $0x28] sm:$0xf]
      %v201 = vld [vmem:[%s1 + $0x2c] sm:$0xf]
      %v202 = vld [vmem:[%s1 + $0x30] sm:$0xf]
      %v203 = vld [vmem:[%s1 + $0x34] sm:$0xf]
      %v204 = vld [vmem:[%s1 + $0x38] sm:$0xf]
      %v205 = vld [vmem:[%s1 + $0x3c] sm:$0xf]
      %v206 = vld [vmem:[%s172 + $0x4] sm:$0x1]
      %v207 = vld [vmem:[%s172 + $0xc] sm:$0x1]
      %v208 = vld [vmem:[%s172 + $0x14] sm:$0x1]
      %v209 = vld [vmem:[%s172 + $0x1c] sm:$0x1]
      %v210 = vld [vmem:[%s172 + $0x24] sm:$0x1]
      %v211 = vld [vmem:[%s172 + $0x2c] sm:$0x1]
      %v212 = vld [vmem:[%s172 + $0x34] sm:$0x1]
      %v213 = vld [vmem:[%s172 + $0x3c] sm:$0x1]
      %vm214 = vsmask.f32 3328
      %vm215 = vsmask.f32 7440
      %vm216 = vmor %vm214, %vm215
      %v218 = vshrl.u32 %v182, 16
      %v220 = vrot.slane %v218, 4
      %v221 = vshll.u32 %v182, 16
      %v223 = vrot.slane %v221, 5
      %v224 = vor.u32 %v220, %v223
      %v225 = vrot.slane %v224, 4
      %v227 = vshll.u32 %v206, 16
      %v229 = vrot.slane %v227, 5
      %v230 = vsel %vm216, %v225, %v229
      %v232 = vshrl.u32 %v183, 16
      %v234 = vrot.slane %v232, 4
      %v235 = vshll.u32 %v183, 16
      %v237 = vrot.slane %v235, 5
      %v238 = vor.u32 %v234, %v237
      %v239 = vrot.slane %v238, 4
      %v241 = vshll.u32 %v207, 16
      %v243 = vrot.slane %v241, 5
      %v244 = vsel %vm216, %v239, %v243
      %v246 = vshrl.u32 %v184, 16
      %v248 = vrot.slane %v246, 4
      %v249 = vshll.u32 %v184, 16
      %v251 = vrot.slane %v249, 5
      %v252 = vor.u32 %v248, %v251
      %v253 = vrot.slane %v252, 4
      %v255 = vshll.u32 %v208, 16
      %v257 = vrot.slane %v255, 5
      %v258 = vsel %vm216, %v253, %v257
      %v260 = vshrl.u32 %v185, 16
      %v262 = vrot.slane %v260, 4
      %v263 = vshll.u32 %v185, 16
      %v265 = vrot.slane %v263, 5
      %v266 = vor.u32 %v262, %v265
      %v267 = vrot.slane %v266, 4
      %v269 = vshll.u32 %v209, 16
      %v271 = vrot.slane %v269, 5
      %v272 = vsel %vm216, %v267, %v271
      %v274 = vshrl.u32 %v186, 16
      %v276 = vrot.slane %v274, 4
      %v277 = vshll.u32 %v186, 16
      %v279 = vrot.slane %v277, 5
      %v280 = vor.u32 %v276, %v279
      %v281 = vrot.slane %v280, 4
      %v283 = vshll.u32 %v210, 16
      %v285 = vrot.slane %v283, 5
      %v286 = vsel %vm216, %v281, %v285
      %v288 = vshrl.u32 %v187, 16
      %v290 = vrot.slane %v288, 4
      %v291 = vshll.u32 %v187, 16
      %v293 = vrot.slane %v291, 5
      %v294 = vor.u32 %v290, %v293
      %v295 = vrot.slane %v294, 4
      %v297 = vshll.u32 %v211, 16
      %v299 = vrot.slane %v297, 5
      %v300 = vsel %vm216, %v295, %v299
      %v302 = vshrl.u32 %v188, 16
      %v304 = vrot.slane %v302, 4
      %v305 = vshll.u32 %v188, 16
      %v307 = vrot.slane %v305, 5
      %v308 = vor.u32 %v304, %v307
      %v309 = vrot.slane %v308, 4
      %v311 = vshll.u32 %v212, 16
      %v313 = vrot.slane %v311, 5
      %v314 = vsel %vm216, %v309, %v313
      %v316 = vshrl.u32 %v189, 16
      %v318 = vrot.slane %v316, 4
      %v319 = vshll.u32 %v189, 16
      %v321 = vrot.slane %v319, 5
      %v322 = vor.u32 %v318, %v321
      %v323 = vrot.slane %v322, 4
      %v325 = vshll.u32 %v213, 16
      %v327 = vrot.slane %v325, 5
      %v328 = vsel %vm216, %v323, %v327
      %s329 = scalar_lea.vmem %s1, 64
      %v330 = vld [vmem:[%s329] sm:$0xf]
      %v331 = vld [vmem:[%s329 + $0x4] sm:$0xf]
      %v332 = vld [vmem:[%s329 + $0x8] sm:$0xf]
      %v333 = vld [vmem:[%s329 + $0xc] sm:$0xf]
      %v334 = vld [vmem:[%s329 + $0x10] sm:$0xf]
      %v335 = vld [vmem:[%s329 + $0x14] sm:$0xf]
      %v336 = vld [vmem:[%s329 + $0x18] sm:$0xf]
      %v337 = vld [vmem:[%s329 + $0x1c] sm:$0xf]
      %v338 = vld [vmem:[%s329 + $0x20] sm:$0xf]
      %v339 = vld [vmem:[%s329 + $0x24] sm:$0xf]
      %v340 = vld [vmem:[%s329 + $0x28] sm:$0xf]
      %v341 = vld [vmem:[%s329 + $0x2c] sm:$0xf]
      %v342 = vld [vmem:[%s329 + $0x30] sm:$0xf]
      %v343 = vld [vmem:[%s329 + $0x34] sm:$0xf]
      %v344 = vld [vmem:[%s329 + $0x38] sm:$0xf]
      %v345 = vld [vmem:[%s329 + $0x3c] sm:$0xf]
      %v346 = vunpack.c.l.b16 %v230
      %v347 = vunpack.c.l.b16 %v244
      %v348 = vunpack.c.l.b16 %v258
      %v349 = vunpack.c.l.b16 %v272
      %v350 = vunpack.c.l.b16 %v286
      %v351 = vunpack.c.l.b16 %v300
      %v352 = vunpack.c.l.b16 %v314
      %v353 = vunpack.c.l.b16 %v328
      %v354 = vpack.c.b16 %v347, %v346
      %v355 = vpack.c.b16 %v349, %v348
      %v356 = vpack.c.b16 %v351, %v350
      %v357 = vpack.c.b16 %v353, %v352
      %v378 = vunpack.c.l.b16 %v330
      %v379 = vunpack.c.l.b16 %v331
      %v380 = vunpack.c.l.b16 %v332
      %v381 = vunpack.c.l.b16 %v333
      %v382 = vunpack.c.l.b16 %v334
      %v383 = vunpack.c.l.b16 %v335
      %v384 = vunpack.c.l.b16 %v336
      %v385 = vunpack.c.l.b16 %v337
      %v386 = vunpack.c.l.b16 %v338
      %v387 = vunpack.c.l.b16 %v339
      %v388 = vunpack.c.l.b16 %v340
      %v389 = vunpack.c.l.b16 %v341
      %v390 = vunpack.c.l.b16 %v342
      %v391 = vunpack.c.l.b16 %v343
      %v392 = vunpack.c.l.b16 %v344
      %v393 = vunpack.c.l.b16 %v345
      %v394 = vpack.c.b16 %v379, %v378
      %v395 = vpack.c.b16 %v381, %v380
      %v396 = vpack.c.b16 %v383, %v382
      %v397 = vpack.c.b16 %v385, %v384
      %v398 = vpack.c.b16 %v387, %v386
      %v399 = vpack.c.b16 %v389, %v388
      %v400 = vpack.c.b16 %v391, %v390
      %v401 = vpack.c.b16 %v393, %v392
      %410 = vmatpush.bf16.msra.mxu0 %v401
      %411 = vmatpush.bf16.msra.mxu0 %v400
      %412 = vmatpush.bf16.msra.mxu0 %v399
      %413 = vmatpush.bf16.msra.mxu0 %v398
      %414 = vmatpush.bf16.msra.mxu0 %v397
      %415 = vmatpush.bf16.msra.mxu0 %v396
      %416 = vmatpush.bf16.msra.mxu0 %v395
      %417 = vmatpush.bf16.msra.mxu0 %v394
      %418 = vmatmul.bf16.gmra.mxu0 %v354
      %v419 = vpop.f32.mrf.mxu0
      %v420 = vadd.f32 0.0, %v419
      %v421 = vpop.f32.mrf.mxu0
      %v422 = vadd.f32 0.0, %v421
      %423 = vmatmul.bf16.gmra.mxu0 %v355
      %v424 = vpop.f32.mrf.mxu0
      %v425 = vadd.f32 0.0, %v424
      %v426 = vpop.f32.mrf.mxu0
      %v427 = vadd.f32 0.0, %v426
      %428 = vmatmul.bf16.gmra.mxu0 %v356
      %v429 = vpop.f32.mrf.mxu0
      %v430 = vadd.f32 0.0, %v429
      %v431 = vpop.f32.mrf.mxu0
      %v432 = vadd.f32 0.0, %v431
      %433 = vmatmul.bf16.gmra.mxu0 %v357
      %v434 = vpop.f32.mrf.mxu0
      %v435 = vadd.f32 0.0, %v434
      %v436 = vpop.f32.mrf.mxu0
      %v437 = vadd.f32 0.0, %v436
      %438 = vdwg.mxu0
      %v447 = vunpack.c.l.b16 %v182
      %v448 = vunpack.c.l.b16 %v183
      %v449 = vunpack.c.l.b16 %v184
      %v450 = vunpack.c.l.b16 %v185
      %v451 = vunpack.c.l.b16 %v186
      %v452 = vunpack.c.l.b16 %v187
      %v453 = vunpack.c.l.b16 %v188
      %v454 = vunpack.c.l.b16 %v189
      %v455 = vpack.c.b16 %v448, %v447
      %v456 = vpack.c.b16 %v450, %v449
      %v457 = vpack.c.b16 %v452, %v451
      %v458 = vpack.c.b16 %v454, %v453
      %v479 = vunpack.c.l.b16 %v190
      %v480 = vunpack.c.l.b16 %v191
      %v481 = vunpack.c.l.b16 %v192
      %v482 = vunpack.c.l.b16 %v193
      %v483 = vunpack.c.l.b16 %v194
      %v484 = vunpack.c.l.b16 %v195
      %v485 = vunpack.c.l.b16 %v196
      %v486 = vunpack.c.l.b16 %v197
      %v487 = vunpack.c.l.b16 %v198
      %v488 = vunpack.c.l.b16 %v199
      %v489 = vunpack.c.l.b16 %v200
      %v490 = vunpack.c.l.b16 %v201
      %v491 = vunpack.c.l.b16 %v202
      %v492 = vunpack.c.l.b16 %v203
      %v493 = vunpack.c.l.b16 %v204
      %v494 = vunpack.c.l.b16 %v205
      %v495 = vpack.c.b16 %v480, %v479
      %v496 = vpack.c.b16 %v482, %v481
      %v497 = vpack.c.b16 %v484, %v483
      %v498 = vpack.c.b16 %v486, %v485
      %v499 = vpack.c.b16 %v488, %v487
      %v500 = vpack.c.b16 %v490, %v489
      %v501 = vpack.c.b16 %v492, %v491
      %v502 = vpack.c.b16 %v494, %v493
      %511 = vmatpush.bf16.msra.mxu0 %v502
      %512 = vmatpush.bf16.msra.mxu0 %v501
      %513 = vmatpush.bf16.msra.mxu0 %v500
      %514 = vmatpush.bf16.msra.mxu0 %v499
      %515 = vmatpush.bf16.msra.mxu0 %v498
      %516 = vmatpush.bf16.msra.mxu0 %v497
      %517 = vmatpush.bf16.msra.mxu0 %v496
      %518 = vmatpush.bf16.msra.mxu0 %v495
      %519 = vmatmul.bf16.gmra.mxu0 %v455
      %v520 = vpop.f32.mrf.mxu0
      %v521 = vadd.f32 %v420, %v520
      %v522 = vpop.f32.mrf.mxu0
      %v523 = vadd.f32 %v422, %v522
      %524 = vmatmul.bf16.gmra.mxu0 %v456
      %v525 = vpop.f32.mrf.mxu0
      %v526 = vadd.f32 %v425, %v525
      %v527 = vpop.f32.mrf.mxu0
      %v528 = vadd.f32 %v427, %v527
      %529 = vmatmul.bf16.gmra.mxu0 %v457
      %v530 = vpop.f32.mrf.mxu0
      %v531 = vadd.f32 %v430, %v530
      %v532 = vpop.f32.mrf.mxu0
      %v533 = vadd.f32 %v432, %v532
      %534 = vmatmul.bf16.gmra.mxu0 %v458
      %v535 = vpop.f32.mrf.mxu0
      %v536 = vadd.f32 %v435, %v535
      %v537 = vpop.f32.mrf.mxu0
      %v538 = vadd.f32 %v437, %v537
      %539 = vdwg.mxu0
      %v540 = vld [vmem:[%s172] sm:$0xe]
      %v541 = vld [vmem:[%s172 + $0x8] sm:$0xe]
      %v542 = vld [vmem:[%s172 + $0x10] sm:$0xe]
      %v543 = vld [vmem:[%s172 + $0x18] sm:$0xe]
      %v544 = vld [vmem:[%s172 + $0x20] sm:$0xe]
      %v545 = vld [vmem:[%s172 + $0x28] sm:$0xe]
      %v546 = vld [vmem:[%s172 + $0x30] sm:$0xe]
      %v547 = vld [vmem:[%s172 + $0x38] sm:$0xe]
      %vm564 = vcmask 1042432
      %vm565 = vcmask 1046532
      %vm566 = vmor %vm564, %vm565
      %v567 = vrot.slane %v540, 5
      %v568 = vrot.slane %v567, 4
      %v569 = vrot.slane %v206, 5
      %v570 = vsel %vm566, %v568, %v569
      %v571 = vrot.slane %v541, 5
      %v572 = vrot.slane %v571, 4
      %v573 = vrot.slane %v207, 5
      %v574 = vsel %vm566, %v572, %v573
      %v575 = vrot.slane %v542, 5
      %v576 = vrot.slane %v575, 4
      %v577 = vrot.slane %v208, 5
      %v578 = vsel %vm566, %v576, %v577
      %v579 = vrot.slane %v543, 5
      %v580 = vrot.slane %v579, 4
      %v581 = vrot.slane %v209, 5
      %v582 = vsel %vm566, %v580, %v581
      %v583 = vrot.slane %v544, 5
      %v584 = vrot.slane %v583, 4
      %v585 = vrot.slane %v210, 5
      %v586 = vsel %vm566, %v584, %v585
      %v587 = vrot.slane %v545, 5
      %v588 = vrot.slane %v587, 4
      %v589 = vrot.slane %v211, 5
      %v590 = vsel %vm566, %v588, %v589
      %v591 = vrot.slane %v546, 5
      %v592 = vrot.slane %v591, 4
      %v593 = vrot.slane %v212, 5
      %v594 = vsel %vm566, %v592, %v593
      %v595 = vrot.slane %v547, 5
      %v596 = vrot.slane %v595, 4
      %v597 = vrot.slane %v213, 5
      %v598 = vsel %vm566, %v596, %v597
      %s599 = scalar_lea.vmem %s1, 128
      %v600 = vld [vmem:[%s599] sm:$0xf]
      %v601 = vld [vmem:[%s599 + $0x4] sm:$0xf]
      %v602 = vld [vmem:[%s599 + $0x8] sm:$0xf]
      %v603 = vld [vmem:[%s599 + $0xc] sm:$0xf]
      %v604 = vld [vmem:[%s599 + $0x10] sm:$0xf]
      %v605 = vld [vmem:[%s599 + $0x14] sm:$0xf]
      %v606 = vld [vmem:[%s599 + $0x18] sm:$0xf]
      %v607 = vld [vmem:[%s599 + $0x1c] sm:$0xf]
      %v608 = vld [vmem:[%s599 + $0x20] sm:$0xf]
      %v609 = vld [vmem:[%s599 + $0x24] sm:$0xf]
      %v610 = vld [vmem:[%s599 + $0x28] sm:$0xf]
      %v611 = vld [vmem:[%s599 + $0x2c] sm:$0xf]
      %v612 = vld [vmem:[%s599 + $0x30] sm:$0xf]
      %v613 = vld [vmem:[%s599 + $0x34] sm:$0xf]
      %v614 = vld [vmem:[%s599 + $0x38] sm:$0xf]
      %v615 = vld [vmem:[%s599 + $0x3c] sm:$0xf]
      %v616 = vunpack.c.l.b16 %v570
      %v617 = vunpack.c.l.b16 %v574
      %v618 = vunpack.c.l.b16 %v578
      %v619 = vunpack.c.l.b16 %v582
      %v620 = vunpack.c.l.b16 %v586
      %v621 = vunpack.c.l.b16 %v590
      %v622 = vunpack.c.l.b16 %v594
      %v623 = vunpack.c.l.b16 %v598
      %v624 = vpack.c.b16 %v617, %v616
      %v625 = vpack.c.b16 %v619, %v618
      %v626 = vpack.c.b16 %v621, %v620
      %v627 = vpack.c.b16 %v623, %v622
      %v648 = vunpack.c.l.b16 %v600
      %v649 = vunpack.c.l.b16 %v601
      %v650 = vunpack.c.l.b16 %v602
      %v651 = vunpack.c.l.b16 %v603
      %v652 = vunpack.c.l.b16 %v604
      %v653 = vunpack.c.l.b16 %v605
      %v654 = vunpack.c.l.b16 %v606
      %v655 = vunpack.c.l.b16 %v607
      %v656 = vunpack.c.l.b16 %v608
      %v657 = vunpack.c.l.b16 %v609
      %v658 = vunpack.c.l.b16 %v610
      %v659 = vunpack.c.l.b16 %v611
      %v660 = vunpack.c.l.b16 %v612
      %v661 = vunpack.c.l.b16 %v613
      %v662 = vunpack.c.l.b16 %v614
      %v663 = vunpack.c.l.b16 %v615
      %v664 = vpack.c.b16 %v649, %v648
      %v665 = vpack.c.b16 %v651, %v650
      %v666 = vpack.c.b16 %v653, %v652
      %v667 = vpack.c.b16 %v655, %v654
      %v668 = vpack.c.b16 %v657, %v656
      %v669 = vpack.c.b16 %v659, %v658
      %v670 = vpack.c.b16 %v661, %v660
      %v671 = vpack.c.b16 %v663, %v662
      %680 = vmatpush.bf16.msra.mxu0 %v671
      %681 = vmatpush.bf16.msra.mxu0 %v670
      %682 = vmatpush.bf16.msra.mxu0 %v669
      %683 = vmatpush.bf16.msra.mxu0 %v668
      %684 = vmatpush.bf16.msra.mxu0 %v667
      %685 = vmatpush.bf16.msra.mxu0 %v666
      %686 = vmatpush.bf16.msra.mxu0 %v665
      %687 = vmatpush.bf16.msra.mxu0 %v664
      %688 = vmatmul.bf16.gmra.mxu0 %v624
      %v689 = vpop.f32.mrf.mxu0
      %v690 = vadd.f32 0.0, %v689
      %v691 = vpop.f32.mrf.mxu0
      %v692 = vadd.f32 0.0, %v691
      %693 = vmatmul.bf16.gmra.mxu0 %v625
      %v694 = vpop.f32.mrf.mxu0
      %v695 = vadd.f32 0.0, %v694
      %v696 = vpop.f32.mrf.mxu0
      %v697 = vadd.f32 0.0, %v696
      %698 = vmatmul.bf16.gmra.mxu0 %v626
      %v699 = vpop.f32.mrf.mxu0
      %v700 = vadd.f32 0.0, %v699
      %v701 = vpop.f32.mrf.mxu0
      %v702 = vadd.f32 0.0, %v701
      %703 = vmatmul.bf16.gmra.mxu0 %v627
      %v704 = vpop.f32.mrf.mxu0
      %v705 = vadd.f32 0.0, %v704
      %v706 = vpop.f32.mrf.mxu0
      %v707 = vadd.f32 0.0, %v706
      %708 = vdwg.mxu0
      %v709 = vadd.f32 %v521, %v690
      %v710 = vadd.f32 %v523, %v692
      %v711 = vadd.f32 %v526, %v695
      %v712 = vadd.f32 %v528, %v697
      %v713 = vadd.f32 %v531, %v700
      %v714 = vadd.f32 %v533, %v702
      %v715 = vadd.f32 %v536, %v705
      %v716 = vadd.f32 %v538, %v707
      %s717 = scalar_lea.vmem %s172, 8
      %v718 = vld [vmem:[%s717] sm:$0xf]
      %v719 = vld [vmem:[%s717 + $0x8] sm:$0xf]
      %v720 = vld [vmem:[%s717 + $0x10] sm:$0xf]
      %v721 = vld [vmem:[%s717 + $0x18] sm:$0xf]
      %v722 = vld [vmem:[%s717 + $0x20] sm:$0xf]
      %v723 = vld [vmem:[%s717 + $0x28] sm:$0xf]
      %v724 = vld [vmem:[%s717 + $0x30] sm:$0xf]
      %v725 = vld [vmem:[%s717 + $0x38] sm:$0xf]
      %s726 = scalar_lea.vmem %s1, 192
      %v727 = vld [vmem:[%s726] sm:$0xf]
      %v728 = vld [vmem:[%s726 + $0x4] sm:$0xf]
      %v729 = vld [vmem:[%s726 + $0x8] sm:$0xf]
      %v730 = vld [vmem:[%s726 + $0xc] sm:$0xf]
      %v731 = vld [vmem:[%s726 + $0x10] sm:$0xf]
      %v732 = vld [vmem:[%s726 + $0x14] sm:$0xf]
      %v733 = vld [vmem:[%s726 + $0x18] sm:$0xf]
      %v734 = vld [vmem:[%s726 + $0x1c] sm:$0xf]
      %v735 = vld [vmem:[%s726 + $0x20] sm:$0xf]
      %v736 = vld [vmem:[%s726 + $0x24] sm:$0xf]
      %v737 = vld [vmem:[%s726 + $0x28] sm:$0xf]
      %v738 = vld [vmem:[%s726 + $0x2c] sm:$0xf]
      %v739 = vld [vmem:[%s726 + $0x30] sm:$0xf]
      %v740 = vld [vmem:[%s726 + $0x34] sm:$0xf]
      %v741 = vld [vmem:[%s726 + $0x38] sm:$0xf]
      %v742 = vld [vmem:[%s726 + $0x3c] sm:$0xf]
      %v751 = vunpack.c.l.b16 %v718
      %v752 = vunpack.c.l.b16 %v719
      %v753 = vunpack.c.l.b16 %v720
      %v754 = vunpack.c.l.b16 %v721
      %v755 = vunpack.c.l.b16 %v722
      %v756 = vunpack.c.l.b16 %v723
      %v757 = vunpack.c.l.b16 %v724
      %v758 = vunpack.c.l.b16 %v725
      %v759 = vpack.c.b16 %v752, %v751
      %v760 = vpack.c.b16 %v754, %v753
      %v761 = vpack.c.b16 %v756, %v755
      %v762 = vpack.c.b16 %v758, %v757
      %v783 = vunpack.c.l.b16 %v727
      %v784 = vunpack.c.l.b16 %v728
      %v785 = vunpack.c.l.b16 %v729
      %v786 = vunpack.c.l.b16 %v730
      %v787 = vunpack.c.l.b16 %v731
      %v788 = vunpack.c.l.b16 %v732
      %v789 = vunpack.c.l.b16 %v733
      %v790 = vunpack.c.l.b16 %v734
      %v791 = vunpack.c.l.b16 %v735
      %v792 = vunpack.c.l.b16 %v736
      %v793 = vunpack.c.l.b16 %v737
      %v794 = vunpack.c.l.b16 %v738
      %v795 = vunpack.c.l.b16 %v739
      %v796 = vunpack.c.l.b16 %v740
      %v797 = vunpack.c.l.b16 %v741
      %v798 = vunpack.c.l.b16 %v742
      %v799 = vpack.c.b16 %v784, %v783
      %v800 = vpack.c.b16 %v786, %v785
      %v801 = vpack.c.b16 %v788, %v787
      %v802 = vpack.c.b16 %v790, %v789
      %v803 = vpack.c.b16 %v792, %v791
      %v804 = vpack.c.b16 %v794, %v793
      %v805 = vpack.c.b16 %v796, %v795
      %v806 = vpack.c.b16 %v798, %v797
      %815 = vmatpush.bf16.msra.mxu0 %v806
      %816 = vmatpush.bf16.msra.mxu0 %v805
      %817 = vmatpush.bf16.msra.mxu0 %v804
      %818 = vmatpush.bf16.msra.mxu0 %v803
      %819 = vmatpush.bf16.msra.mxu0 %v802
      %820 = vmatpush.bf16.msra.mxu0 %v801
      %821 = vmatpush.bf16.msra.mxu0 %v800
      %822 = vmatpush.bf16.msra.mxu0 %v799
      %823 = vmatmul.bf16.gmra.mxu0 %v759
      %v824 = vpop.f32.mrf.mxu0
      %v825 = vadd.f32 0.0, %v824
      %v826 = vpop.f32.mrf.mxu0
      %v827 = vadd.f32 0.0, %v826
      %828 = vmatmul.bf16.gmra.mxu0 %v760
      %v829 = vpop.f32.mrf.mxu0
      %v830 = vadd.f32 0.0, %v829
      %v831 = vpop.f32.mrf.mxu0
      %v832 = vadd.f32 0.0, %v831
      %833 = vmatmul.bf16.gmra.mxu0 %v761
      %v834 = vpop.f32.mrf.mxu0
      %v835 = vadd.f32 0.0, %v834
      %v836 = vpop.f32.mrf.mxu0
      %v837 = vadd.f32 0.0, %v836
      %838 = vmatmul.bf16.gmra.mxu0 %v762
      %v839 = vpop.f32.mrf.mxu0
      %v840 = vadd.f32 0.0, %v839
      %v841 = vpop.f32.mrf.mxu0
      %v842 = vadd.f32 0.0, %v841
      %843 = vdwg.mxu0
      %v844 = vadd.f32 %v709, %v825
      %v845 = vadd.f32 %v710, %v827
      %v846 = vadd.f32 %v711, %v830
      %v847 = vadd.f32 %v712, %v832
      %v848 = vadd.f32 %v713, %v835
      %v849 = vadd.f32 %v714, %v837
      %v850 = vadd.f32 %v715, %v840
      %v851 = vadd.f32 %v716, %v842
      %v852 = vld [vmem:[%s717] sm:$0xf]
      %v853 = vld [vmem:[%s717 + $0x4] sm:$0x1]
      %v854 = vld [vmem:[%s717 + $0x8] sm:$0xf]
      %v855 = vld [vmem:[%s717 + $0xc] sm:$0x1]
      %v856 = vld [vmem:[%s717 + $0x10] sm:$0xf]
      %v857 = vld [vmem:[%s717 + $0x14] sm:$0x1]
      %v858 = vld [vmem:[%s717 + $0x18] sm:$0xf]
      %v859 = vld [vmem:[%s717 + $0x1c] sm:$0x1]
      %v860 = vld [vmem:[%s717 + $0x20] sm:$0xf]
      %v861 = vld [vmem:[%s717 + $0x24] sm:$0x1]
      %v862 = vld [vmem:[%s717 + $0x28] sm:$0xf]
      %v863 = vld [vmem:[%s717 + $0x2c] sm:$0x1]
      %v864 = vld [vmem:[%s717 + $0x30] sm:$0xf]
      %v865 = vld [vmem:[%s717 + $0x34] sm:$0x1]
      %v866 = vld [vmem:[%s717 + $0x38] sm:$0xf]
      %v867 = vld [vmem:[%s717 + $0x3c] sm:$0x1]
      %v869 = vshrl.u32 %v852, 16
      %v871 = vrot.slane %v869, 4
      %v872 = vshll.u32 %v852, 16
      %v874 = vrot.slane %v872, 5
      %v875 = vor.u32 %v871, %v874
      %v876 = vrot.slane %v875, 4
      %v878 = vshll.u32 %v853, 16
      %v880 = vrot.slane %v878, 5
      %v881 = vsel %vm216, %v876, %v880
      %v883 = vshrl.u32 %v854, 16
      %v885 = vrot.slane %v883, 4
      %v886 = vshll.u32 %v854, 16
      %v888 = vrot.slane %v886, 5
      %v889 = vor.u32 %v885, %v888
      %v890 = vrot.slane %v889, 4
      %v892 = vshll.u32 %v855, 16
      %v894 = vrot.slane %v892, 5
      %v895 = vsel %vm216, %v890, %v894
      %v897 = vshrl.u32 %v856, 16
      %v899 = vrot.slane %v897, 4
      %v900 = vshll.u32 %v856, 16
      %v902 = vrot.slane %v900, 5
      %v903 = vor.u32 %v899, %v902
      %v904 = vrot.slane %v903, 4
      %v906 = vshll.u32 %v857, 16
      %v908 = vrot.slane %v906, 5
      %v909 = vsel %vm216, %v904, %v908
      %v911 = vshrl.u32 %v858, 16
      %v913 = vrot.slane %v911, 4
      %v914 = vshll.u32 %v858, 16
      %v916 = vrot.slane %v914, 5
      %v917 = vor.u32 %v913, %v916
      %v918 = vrot.slane %v917, 4
      %v920 = vshll.u32 %v859, 16
      %v922 = vrot.slane %v920, 5
      %v923 = vsel %vm216, %v918, %v922
      %v925 = vshrl.u32 %v860, 16
      %v927 = vrot.slane %v925, 4
      %v928 = vshll.u32 %v860, 16
      %v930 = vrot.slane %v928, 5
      %v931 = vor.u32 %v927, %v930
      %v932 = vrot.slane %v931, 4
      %v934 = vshll.u32 %v861, 16
      %v936 = vrot.slane %v934, 5
      %v937 = vsel %vm216, %v932, %v936
      %v939 = vshrl.u32 %v862, 16
      %v941 = vrot.slane %v939, 4
      %v942 = vshll.u32 %v862, 16
      %v944 = vrot.slane %v942, 5
      %v945 = vor.u32 %v941, %v944
      %v946 = vrot.slane %v945, 4
      %v948 = vshll.u32 %v863, 16
      %v950 = vrot.slane %v948, 5
      %v951 = vsel %vm216, %v946, %v950
      %v953 = vshrl.u32 %v864, 16
      %v955 = vrot.slane %v953, 4
      %v956 = vshll.u32 %v864, 16
      %v958 = vrot.slane %v956, 5
      %v959 = vor.u32 %v955, %v958
      %v960 = vrot.slane %v959, 4
      %v962 = vshll.u32 %v865, 16
      %v964 = vrot.slane %v962, 5
      %v965 = vsel %vm216, %v960, %v964
      %v967 = vshrl.u32 %v866, 16
      %v969 = vrot.slane %v967, 4
      %v970 = vshll.u32 %v866, 16
      %v972 = vrot.slane %v970, 5
      %v973 = vor.u32 %v969, %v972
      %v974 = vrot.slane %v973, 4
      %v976 = vshll.u32 %v867, 16
      %v978 = vrot.slane %v976, 5
      %v979 = vsel %vm216, %v974, %v978
      %s980 = scalar_lea.vmem %s1, 256
      %v981 = vld [vmem:[%s980] sm:$0xf]
      %v982 = vld [vmem:[%s980 + $0x4] sm:$0xf]
      %v983 = vld [vmem:[%s980 + $0x8] sm:$0xf]
      %v984 = vld [vmem:[%s980 + $0xc] sm:$0xf]
      %v985 = vld [vmem:[%s980 + $0x10] sm:$0xf]
      %v986 = vld [vmem:[%s980 + $0x14] sm:$0xf]
      %v987 = vld [vmem:[%s980 + $0x18] sm:$0xf]
      %v988 = vld [vmem:[%s980 + $0x1c] sm:$0xf]
      %v989 = vld [vmem:[%s980 + $0x20] sm:$0xf]
      %v990 = vld [vmem:[%s980 + $0x24] sm:$0xf]
      %v991 = vld [vmem:[%s980 + $0x28] sm:$0xf]
      %v992 = vld [vmem:[%s980 + $0x2c] sm:$0xf]
      %v993 = vld [vmem:[%s980 + $0x30] sm:$0xf]
      %v994 = vld [vmem:[%s980 + $0x34] sm:$0xf]
      %v995 = vld [vmem:[%s980 + $0x38] sm:$0xf]
      %v996 = vld [vmem:[%s980 + $0x3c] sm:$0xf]
      %v997 = vunpack.c.l.b16 %v881
      %v998 = vunpack.c.l.b16 %v895
      %v999 = vunpack.c.l.b16 %v909
      %v1000 = vunpack.c.l.b16 %v923
      %v1001 = vunpack.c.l.b16 %v937
      %v1002 = vunpack.c.l.b16 %v951
      %v1003 = vunpack.c.l.b16 %v965
      %v1004 = vunpack.c.l.b16 %v979
      %v1005 = vpack.c.b16 %v998, %v997
      %v1006 = vpack.c.b16 %v1000, %v999
      %v1007 = vpack.c.b16 %v1002, %v1001
      %v1008 = vpack.c.b16 %v1004, %v1003
      %v1029 = vunpack.c.l.b16 %v981
      %v1030 = vunpack.c.l.b16 %v982
      %v1031 = vunpack.c.l.b16 %v983
      %v1032 = vunpack.c.l.b16 %v984
      %v1033 = vunpack.c.l.b16 %v985
      %v1034 = vunpack.c.l.b16 %v986
      %v1035 = vunpack.c.l.b16 %v987
      %v1036 = vunpack.c.l.b16 %v988
      %v1037 = vunpack.c.l.b16 %v989
      %v1038 = vunpack.c.l.b16 %v990
      %v1039 = vunpack.c.l.b16 %v991
      %v1040 = vunpack.c.l.b16 %v992
      %v1041 = vunpack.c.l.b16 %v993
      %v1042 = vunpack.c.l.b16 %v994
      %v1043 = vunpack.c.l.b16 %v995
      %v1044 = vunpack.c.l.b16 %v996
      %v1045 = vpack.c.b16 %v1030, %v1029
      %v1046 = vpack.c.b16 %v1032, %v1031
      %v1047 = vpack.c.b16 %v1034, %v1033
      %v1048 = vpack.c.b16 %v1036, %v1035
      %v1049 = vpack.c.b16 %v1038, %v1037
      %v1050 = vpack.c.b16 %v1040, %v1039
      %v1051 = vpack.c.b16 %v1042, %v1041
      %v1052 = vpack.c.b16 %v1044, %v1043
      %1061 = vmatpush.bf16.msra.mxu0 %v1052
      %1062 = vmatpush.bf16.msra.mxu0 %v1051
      %1063 = vmatpush.bf16.msra.mxu0 %v1050
      %1064 = vmatpush.bf16.msra.mxu0 %v1049
      %1065 = vmatpush.bf16.msra.mxu0 %v1048
      %1066 = vmatpush.bf16.msra.mxu0 %v1047
      %1067 = vmatpush.bf16.msra.mxu0 %v1046
      %1068 = vmatpush.bf16.msra.mxu0 %v1045
      %1069 = vmatmul.bf16.gmra.mxu0 %v1005
      %v1070 = vpop.f32.mrf.mxu0
      %v1071 = vadd.f32 0.0, %v1070
      %v1072 = vpop.f32.mrf.mxu0
      %v1073 = vadd.f32 0.0, %v1072
      %1074 = vmatmul.bf16.gmra.mxu0 %v1006
      %v1075 = vpop.f32.mrf.mxu0
      %v1076 = vadd.f32 0.0, %v1075
      %v1077 = vpop.f32.mrf.mxu0
      %v1078 = vadd.f32 0.0, %v1077
      %1079 = vmatmul.bf16.gmra.mxu0 %v1007
      %v1080 = vpop.f32.mrf.mxu0
      %v1081 = vadd.f32 0.0, %v1080
      %v1082 = vpop.f32.mrf.mxu0
      %v1083 = vadd.f32 0.0, %v1082
      %1084 = vmatmul.bf16.gmra.mxu0 %v1008
      %v1085 = vpop.f32.mrf.mxu0
      %v1086 = vadd.f32 0.0, %v1085
      %v1087 = vpop.f32.mrf.mxu0
      %v1088 = vadd.f32 0.0, %v1087
      %1089 = vdwg.mxu0
      %v1090 = vadd.f32 %v844, %v1071
      %v1091 = vadd.f32 %v845, %v1073
      %v1092 = vadd.f32 %v846, %v1076
      %v1093 = vadd.f32 %v847, %v1078
      %v1094 = vadd.f32 %v848, %v1081
      %v1095 = vadd.f32 %v849, %v1083
      %v1096 = vadd.f32 %v850, %v1086
      %v1097 = vadd.f32 %v851, %v1088
      %v1098 = vld [vmem:[%s717] sm:$0xe]
      %v1099 = vld [vmem:[%s717 + $0x8] sm:$0xe]
      %v1100 = vld [vmem:[%s717 + $0x10] sm:$0xe]
      %v1101 = vld [vmem:[%s717 + $0x18] sm:$0xe]
      %v1102 = vld [vmem:[%s717 + $0x20] sm:$0xe]
      %v1103 = vld [vmem:[%s717 + $0x28] sm:$0xe]
      %v1104 = vld [vmem:[%s717 + $0x30] sm:$0xe]
      %v1105 = vld [vmem:[%s717 + $0x38] sm:$0xe]
      %v1122 = vrot.slane %v1098, 5
      %v1123 = vrot.slane %v1122, 4
      %v1124 = vrot.slane %v853, 5
      %v1125 = vsel %vm566, %v1123, %v1124
      %v1126 = vrot.slane %v1099, 5
      %v1127 = vrot.slane %v1126, 4
      %v1128 = vrot.slane %v855, 5
      %v1129 = vsel %vm566, %v1127, %v1128
      %v1130 = vrot.slane %v1100, 5
      %v1131 = vrot.slane %v1130, 4
      %v1132 = vrot.slane %v857, 5
      %v1133 = vsel %vm566, %v1131, %v1132
      %v1134 = vrot.slane %v1101, 5
      %v1135 = vrot.slane %v1134, 4
      %v1136 = vrot.slane %v859, 5
      %v1137 = vsel %vm566, %v1135, %v1136
      %v1138 = vrot.slane %v1102, 5
      %v1139 = vrot.slane %v1138, 4
      %v1140 = vrot.slane %v861, 5
      %v1141 = vsel %vm566, %v1139, %v1140
      %v1142 = vrot.slane %v1103, 5
      %v1143 = vrot.slane %v1142, 4
      %v1144 = vrot.slane %v863, 5
      %v1145 = vsel %vm566, %v1143, %v1144
      %v1146 = vrot.slane %v1104, 5
      %v1147 = vrot.slane %v1146, 4
      %v1148 = vrot.slane %v865, 5
      %v1149 = vsel %vm566, %v1147, %v1148
      %v1150 = vrot.slane %v1105, 5
      %v1151 = vrot.slane %v1150, 4
      %v1152 = vrot.slane %v867, 5
      %v1153 = vsel %vm566, %v1151, %v1152
      %s1154 = scalar_lea.vmem %s1, 320
      %v1155 = vld [vmem:[%s1154] sm:$0xf]
      %v1156 = vld [vmem:[%s1154 + $0x4] sm:$0xf]
      %v1157 = vld [vmem:[%s1154 + $0x8] sm:$0xf]
      %v1158 = vld [vmem:[%s1154 + $0xc] sm:$0xf]
      %v1159 = vld [vmem:[%s1154 + $0x10] sm:$0xf]
      %v1160 = vld [vmem:[%s1154 + $0x14] sm:$0xf]
      %v1161 = vld [vmem:[%s1154 + $0x18] sm:$0xf]
      %v1162 = vld [vmem:[%s1154 + $0x1c] sm:$0xf]
      %v1163 = vld [vmem:[%s1154 + $0x20] sm:$0xf]
      %v1164 = vld [vmem:[%s1154 + $0x24] sm:$0xf]
      %v1165 = vld [vmem:[%s1154 + $0x28] sm:$0xf]
      %v1166 = vld [vmem:[%s1154 + $0x2c] sm:$0xf]
      %v1167 = vld [vmem:[%s1154 + $0x30] sm:$0xf]
      %v1168 = vld [vmem:[%s1154 + $0x34] sm:$0xf]
      %v1169 = vld [vmem:[%s1154 + $0x38] sm:$0xf]
      %v1170 = vld [vmem:[%s1154 + $0x3c] sm:$0xf]
      %v1171 = vunpack.c.l.b16 %v1125
      %v1172 = vunpack.c.l.b16 %v1129
      %v1173 = vunpack.c.l.b16 %v1133
      %v1174 = vunpack.c.l.b16 %v1137
      %v1175 = vunpack.c.l.b16 %v1141
      %v1176 = vunpack.c.l.b16 %v1145
      %v1177 = vunpack.c.l.b16 %v1149
      %v1178 = vunpack.c.l.b16 %v1153
      %v1179 = vpack.c.b16 %v1172, %v1171
      %v1180 = vpack.c.b16 %v1174, %v1173
      %v1181 = vpack.c.b16 %v1176, %v1175
      %v1182 = vpack.c.b16 %v1178, %v1177
      %v1203 = vunpack.c.l.b16 %v1155
      %v1204 = vunpack.c.l.b16 %v1156
      %v1205 = vunpack.c.l.b16 %v1157
      %v1206 = vunpack.c.l.b16 %v1158
      %v1207 = vunpack.c.l.b16 %v1159
      %v1208 = vunpack.c.l.b16 %v1160
      %v1209 = vunpack.c.l.b16 %v1161
      %v1210 = vunpack.c.l.b16 %v1162
      %v1211 = vunpack.c.l.b16 %v1163
      %v1212 = vunpack.c.l.b16 %v1164
      %v1213 = vunpack.c.l.b16 %v1165
      %v1214 = vunpack.c.l.b16 %v1166
      %v1215 = vunpack.c.l.b16 %v1167
      %v1216 = vunpack.c.l.b16 %v1168
      %v1217 = vunpack.c.l.b16 %v1169
      %v1218 = vunpack.c.l.b16 %v1170
      %v1219 = vpack.c.b16 %v1204, %v1203
      %v1220 = vpack.c.b16 %v1206, %v1205
      %v1221 = vpack.c.b16 %v1208, %v1207
      %v1222 = vpack.c.b16 %v1210, %v1209
      %v1223 = vpack.c.b16 %v1212, %v1211
      %v1224 = vpack.c.b16 %v1214, %v1213
      %v1225 = vpack.c.b16 %v1216, %v1215
      %v1226 = vpack.c.b16 %v1218, %v1217
      %1235 = vmatpush.bf16.msra.mxu0 %v1226
      %1236 = vmatpush.bf16.msra.mxu0 %v1225
      %1237 = vmatpush.bf16.msra.mxu0 %v1224
      %1238 = vmatpush.bf16.msra.mxu0 %v1223
      %1239 = vmatpush.bf16.msra.mxu0 %v1222
      %1240 = vmatpush.bf16.msra.mxu0 %v1221
      %1241 = vmatpush.bf16.msra.mxu0 %v1220
      %1242 = vmatpush.bf16.msra.mxu0 %v1219
      %1243 = vmatmul.bf16.gmra.mxu0 %v1179
      %v1244 = vpop.f32.mrf.mxu0
      %v1245 = vadd.f32 0.0, %v1244
      %v1246 = vpop.f32.mrf.mxu0
      %v1247 = vadd.f32 0.0, %v1246
      %1248 = vmatmul.bf16.gmra.mxu0 %v1180
      %v1249 = vpop.f32.mrf.mxu0
      %v1250 = vadd.f32 0.0, %v1249
      %v1251 = vpop.f32.mrf.mxu0
      %v1252 = vadd.f32 0.0, %v1251
      %1253 = vmatmul.bf16.gmra.mxu0 %v1181
      %v1254 = vpop.f32.mrf.mxu0
      %v1255 = vadd.f32 0.0, %v1254
      %v1256 = vpop.f32.mrf.mxu0
      %v1257 = vadd.f32 0.0, %v1256
      %1258 = vmatmul.bf16.gmra.mxu0 %v1182
      %v1259 = vpop.f32.mrf.mxu0
      %v1260 = vadd.f32 0.0, %v1259
      %v1261 = vpop.f32.mrf.mxu0
      %v1262 = vadd.f32 0.0, %v1261
      %1263 = vdwg.mxu0
      %v1264 = vadd.f32 %v1090, %v1245
      %v1265 = vadd.f32 %v1091, %v1247
      %v1266 = vadd.f32 %v1092, %v1250
      %v1267 = vadd.f32 %v1093, %v1252
      %v1268 = vadd.f32 %v1094, %v1255
      %v1269 = vadd.f32 %v1095, %v1257
      %v1270 = vadd.f32 %v1096, %v1260
      %v1271 = vadd.f32 %v1097, %v1262
      %s1272 = scalar_lea.vmem %s172, 16
      %v1273 = vld [vmem:[%s1272] sm:$0xf]
      %v1274 = vld [vmem:[%s1272 + $0x8] sm:$0xf]
      %v1275 = vld [vmem:[%s1272 + $0x10] sm:$0xf]
      %v1276 = vld [vmem:[%s1272 + $0x18] sm:$0xf]
      %v1277 = vld [vmem:[%s1272 + $0x20] sm:$0xf]
      %v1278 = vld [vmem:[%s1272 + $0x28] sm:$0xf]
      %v1279 = vld [vmem:[%s1272 + $0x30] sm:$0xf]
      %v1280 = vld [vmem:[%s1272 + $0x38] sm:$0xf]
      %s1281 = scalar_lea.vmem %s1, 384
      %v1282 = vld [vmem:[%s1281] sm:$0xf]
      %v1283 = vld [vmem:[%s1281 + $0x4] sm:$0xf]
      %v1284 = vld [vmem:[%s1281 + $0x8] sm:$0xf]
      %v1285 = vld [vmem:[%s1281 + $0xc] sm:$0xf]
      %v1286 = vld [vmem:[%s1281 + $0x10] sm:$0xf]
      %v1287 = vld [vmem:[%s1281 + $0x14] sm:$0xf]
      %v1288 = vld [vmem:[%s1281 + $0x18] sm:$0xf]
      %v1289 = vld [vmem:[%s1281 + $0x1c] sm:$0xf]
      %v1290 = vld [vmem:[%s1281 + $0x20] sm:$0xf]
      %v1291 = vld [vmem:[%s1281 + $0x24] sm:$0xf]
      %v1292 = vld [vmem:[%s1281 + $0x28] sm:$0xf]
      %v1293 = vld [vmem:[%s1281 + $0x2c] sm:$0xf]
      %v1294 = vld [vmem:[%s1281 + $0x30] sm:$0xf]
      %v1295 = vld [vmem:[%s1281 + $0x34] sm:$0xf]
      %v1296 = vld [vmem:[%s1281 + $0x38] sm:$0xf]
      %v1297 = vld [vmem:[%s1281 + $0x3c] sm:$0xf]
      %v1306 = vunpack.c.l.b16 %v1273
      %v1307 = vunpack.c.l.b16 %v1274
      %v1308 = vunpack.c.l.b16 %v1275
      %v1309 = vunpack.c.l.b16 %v1276
      %v1310 = vunpack.c.l.b16 %v1277
      %v1311 = vunpack.c.l.b16 %v1278
      %v1312 = vunpack.c.l.b16 %v1279
      %v1313 = vunpack.c.l.b16 %v1280
      %v1314 = vpack.c.b16 %v1307, %v1306
      %v1315 = vpack.c.b16 %v1309, %v1308
      %v1316 = vpack.c.b16 %v1311, %v1310
      %v1317 = vpack.c.b16 %v1313, %v1312
      %v1338 = vunpack.c.l.b16 %v1282
      %v1339 = vunpack.c.l.b16 %v1283
      %v1340 = vunpack.c.l.b16 %v1284
      %v1341 = vunpack.c.l.b16 %v1285
      %v1342 = vunpack.c.l.b16 %v1286
      %v1343 = vunpack.c.l.b16 %v1287
      %v1344 = vunpack.c.l.b16 %v1288
      %v1345 = vunpack.c.l.b16 %v1289
      %v1346 = vunpack.c.l.b16 %v1290
      %v1347 = vunpack.c.l.b16 %v1291
      %v1348 = vunpack.c.l.b16 %v1292
      %v1349 = vunpack.c.l.b16 %v1293
      %v1350 = vunpack.c.l.b16 %v1294
      %v1351 = vunpack.c.l.b16 %v1295
      %v1352 = vunpack.c.l.b16 %v1296
      %v1353 = vunpack.c.l.b16 %v1297
      %v1354 = vpack.c.b16 %v1339, %v1338
      %v1355 = vpack.c.b16 %v1341, %v1340
      %v1356 = vpack.c.b16 %v1343, %v1342
      %v1357 = vpack.c.b16 %v1345, %v1344
      %v1358 = vpack.c.b16 %v1347, %v1346
      %v1359 = vpack.c.b16 %v1349, %v1348
      %v1360 = vpack.c.b16 %v1351, %v1350
      %v1361 = vpack.c.b16 %v1353, %v1352
      %1370 = vmatpush.bf16.msra.mxu0 %v1361
      %1371 = vmatpush.bf16.msra.mxu0 %v1360
      %1372 = vmatpush.bf16.msra.mxu0 %v1359
      %1373 = vmatpush.bf16.msra.mxu0 %v1358
      %1374 = vmatpush.bf16.msra.mxu0 %v1357
      %1375 = vmatpush.bf16.msra.mxu0 %v1356
      %1376 = vmatpush.bf16.msra.mxu0 %v1355
      %1377 = vmatpush.bf16.msra.mxu0 %v1354
      %1378 = vmatmul.bf16.gmra.mxu0 %v1314
      %v1379 = vpop.f32.mrf.mxu0
      %v1380 = vadd.f32 0.0, %v1379
      %v1381 = vpop.f32.mrf.mxu0
      %v1382 = vadd.f32 0.0, %v1381
      %1383 = vmatmul.bf16.gmra.mxu0 %v1315
      %v1384 = vpop.f32.mrf.mxu0
      %v1385 = vadd.f32 0.0, %v1384
      %v1386 = vpop.f32.mrf.mxu0
      %v1387 = vadd.f32 0.0, %v1386
      %1388 = vmatmul.bf16.gmra.mxu0 %v1316
      %v1389 = vpop.f32.mrf.mxu0
      %v1390 = vadd.f32 0.0, %v1389
      %v1391 = vpop.f32.mrf.mxu0
      %v1392 = vadd.f32 0.0, %v1391
      %1393 = vmatmul.bf16.gmra.mxu0 %v1317
      %v1394 = vpop.f32.mrf.mxu0
      %v1395 = vadd.f32 0.0, %v1394
      %v1396 = vpop.f32.mrf.mxu0
      %v1397 = vadd.f32 0.0, %v1396
      %1398 = vdwg.mxu0
      %v1399 = vadd.f32 %v1264, %v1380
      %v1400 = vadd.f32 %v1265, %v1382
      %v1401 = vadd.f32 %v1266, %v1385
      %v1402 = vadd.f32 %v1267, %v1387
      %v1403 = vadd.f32 %v1268, %v1390
      %v1404 = vadd.f32 %v1269, %v1392
      %v1405 = vadd.f32 %v1270, %v1395
      %v1406 = vadd.f32 %v1271, %v1397
      %v1407 = vld [vmem:[%s1272] sm:$0xf]
      %v1408 = vld [vmem:[%s1272 + $0x4] sm:$0x1]
      %v1409 = vld [vmem:[%s1272 + $0x8] sm:$0xf]
      %v1410 = vld [vmem:[%s1272 + $0xc] sm:$0x1]
      %v1411 = vld [vmem:[%s1272 + $0x10] sm:$0xf]
      %v1412 = vld [vmem:[%s1272 + $0x14] sm:$0x1]
      %v1413 = vld [vmem:[%s1272 + $0x18] sm:$0xf]
      %v1414 = vld [vmem:[%s1272 + $0x1c] sm:$0x1]
      %v1415 = vld [vmem:[%s1272 + $0x20] sm:$0xf]
      %v1416 = vld [vmem:[%s1272 + $0x24] sm:$0x1]
      %v1417 = vld [vmem:[%s1272 + $0x28] sm:$0xf]
      %v1418 = vld [vmem:[%s1272 + $0x2c] sm:$0x1]
      %v1419 = vld [vmem:[%s1272 + $0x30] sm:$0xf]
      %v1420 = vld [vmem:[%s1272 + $0x34] sm:$0x1]
      %v1421 = vld [vmem:[%s1272 + $0x38] sm:$0xf]
      %v1422 = vld [vmem:[%s1272 + $0x3c] sm:$0x1]
      %v1424 = vshrl.u32 %v1407, 16
      %v1426 = vrot.slane %v1424, 4
      %v1427 = vshll.u32 %v1407, 16
      %v1429 = vrot.slane %v1427, 5
      %v1430 = vor.u32 %v1426, %v1429
      %v1431 = vrot.slane %v1430, 4
      %v1433 = vshll.u32 %v1408, 16
      %v1435 = vrot.slane %v1433, 5
      %v1436 = vsel %vm216, %v1431, %v1435
      %v1438 = vshrl.u32 %v1409, 16
      %v1440 = vrot.slane %v1438, 4
      %v1441 = vshll.u32 %v1409, 16
      %v1443 = vrot.slane %v1441, 5
      %v1444 = vor.u32 %v1440, %v1443
      %v1445 = vrot.slane %v1444, 4
      %v1447 = vshll.u32 %v1410, 16
      %v1449 = vrot.slane %v1447, 5
      %v1450 = vsel %vm216, %v1445, %v1449
      %v1452 = vshrl.u32 %v1411, 16
      %v1454 = vrot.slane %v1452, 4
      %v1455 = vshll.u32 %v1411, 16
      %v1457 = vrot.slane %v1455, 5
      %v1458 = vor.u32 %v1454, %v1457
      %v1459 = vrot.slane %v1458, 4
      %v1461 = vshll.u32 %v1412, 16
      %v1463 = vrot.slane %v1461, 5
      %v1464 = vsel %vm216, %v1459, %v1463
      %v1466 = vshrl.u32 %v1413, 16
      %v1468 = vrot.slane %v1466, 4
      %v1469 = vshll.u32 %v1413, 16
      %v1471 = vrot.slane %v1469, 5
      %v1472 = vor.u32 %v1468, %v1471
      %v1473 = vrot.slane %v1472, 4
      %v1475 = vshll.u32 %v1414, 16
      %v1477 = vrot.slane %v1475, 5
      %v1478 = vsel %vm216, %v1473, %v1477
      %v1480 = vshrl.u32 %v1415, 16
      %v1482 = vrot.slane %v1480, 4
      %v1483 = vshll.u32 %v1415, 16
      %v1485 = vrot.slane %v1483, 5
      %v1486 = vor.u32 %v1482, %v1485
      %v1487 = vrot.slane %v1486, 4
      %v1489 = vshll.u32 %v1416, 16
      %v1491 = vrot.slane %v1489, 5
      %v1492 = vsel %vm216, %v1487, %v1491
      %v1494 = vshrl.u32 %v1417, 16
      %v1496 = vrot.slane %v1494, 4
      %v1497 = vshll.u32 %v1417, 16
      %v1499 = vrot.slane %v1497, 5
      %v1500 = vor.u32 %v1496, %v1499
      %v1501 = vrot.slane %v1500, 4
      %v1503 = vshll.u32 %v1418, 16
      %v1505 = vrot.slane %v1503, 5
      %v1506 = vsel %vm216, %v1501, %v1505
      %v1508 = vshrl.u32 %v1419, 16
      %v1510 = vrot.slane %v1508, 4
      %v1511 = vshll.u32 %v1419, 16
      %v1513 = vrot.slane %v1511, 5
      %v1514 = vor.u32 %v1510, %v1513
      %v1515 = vrot.slane %v1514, 4
      %v1517 = vshll.u32 %v1420, 16
      %v1519 = vrot.slane %v1517, 5
      %v1520 = vsel %vm216, %v1515, %v1519
      %v1522 = vshrl.u32 %v1421, 16
      %v1524 = vrot.slane %v1522, 4
      %v1525 = vshll.u32 %v1421, 16
      %v1527 = vrot.slane %v1525, 5
      %v1528 = vor.u32 %v1524, %v1527
      %v1529 = vrot.slane %v1528, 4
      %v1531 = vshll.u32 %v1422, 16
      %v1533 = vrot.slane %v1531, 5
      %v1534 = vsel %vm216, %v1529, %v1533
      %s1535 = scalar_lea.vmem %s1, 448
      %v1536 = vld [vmem:[%s1535] sm:$0xf]
      %v1537 = vld [vmem:[%s1535 + $0x4] sm:$0xf]
      %v1538 = vld [vmem:[%s1535 + $0x8] sm:$0xf]
      %v1539 = vld [vmem:[%s1535 + $0xc] sm:$0xf]
      %v1540 = vld [vmem:[%s1535 + $0x10] sm:$0xf]
      %v1541 = vld [vmem:[%s1535 + $0x14] sm:$0xf]
      %v1542 = vld [vmem:[%s1535 + $0x18] sm:$0xf]
      %v1543 = vld [vmem:[%s1535 + $0x1c] sm:$0xf]
      %v1544 = vld [vmem:[%s1535 + $0x20] sm:$0xf]
      %v1545 = vld [vmem:[%s1535 + $0x24] sm:$0xf]
      %v1546 = vld [vmem:[%s1535 + $0x28] sm:$0xf]
      %v1547 = vld [vmem:[%s1535 + $0x2c] sm:$0xf]
      %v1548 = vld [vmem:[%s1535 + $0x30] sm:$0xf]
      %v1549 = vld [vmem:[%s1535 + $0x34] sm:$0xf]
      %v1550 = vld [vmem:[%s1535 + $0x38] sm:$0xf]
      %v1551 = vld [vmem:[%s1535 + $0x3c] sm:$0xf]
      %v1552 = vunpack.c.l.b16 %v1436
      %v1553 = vunpack.c.l.b16 %v1450
      %v1554 = vunpack.c.l.b16 %v1464
      %v1555 = vunpack.c.l.b16 %v1478
      %v1556 = vunpack.c.l.b16 %v1492
      %v1557 = vunpack.c.l.b16 %v1506
      %v1558 = vunpack.c.l.b16 %v1520
      %v1559 = vunpack.c.l.b16 %v1534
      %v1560 = vpack.c.b16 %v1553, %v1552
      %v1561 = vpack.c.b16 %v1555, %v1554
      %v1562 = vpack.c.b16 %v1557, %v1556
      %v1563 = vpack.c.b16 %v1559, %v1558
      %v1584 = vunpack.c.l.b16 %v1536
      %v1585 = vunpack.c.l.b16 %v1537
      %v1586 = vunpack.c.l.b16 %v1538
      %v1587 = vunpack.c.l.b16 %v1539
      %v1588 = vunpack.c.l.b16 %v1540
      %v1589 = vunpack.c.l.b16 %v1541
      %v1590 = vunpack.c.l.b16 %v1542
      %v1591 = vunpack.c.l.b16 %v1543
      %v1592 = vunpack.c.l.b16 %v1544
      %v1593 = vunpack.c.l.b16 %v1545
      %v1594 = vunpack.c.l.b16 %v1546
      %v1595 = vunpack.c.l.b16 %v1547
      %v1596 = vunpack.c.l.b16 %v1548
      %v1597 = vunpack.c.l.b16 %v1549
      %v1598 = vunpack.c.l.b16 %v1550
      %v1599 = vunpack.c.l.b16 %v1551
      %v1600 = vpack.c.b16 %v1585, %v1584
      %v1601 = vpack.c.b16 %v1587, %v1586
      %v1602 = vpack.c.b16 %v1589, %v1588
      %v1603 = vpack.c.b16 %v1591, %v1590
      %v1604 = vpack.c.b16 %v1593, %v1592
      %v1605 = vpack.c.b16 %v1595, %v1594
      %v1606 = vpack.c.b16 %v1597, %v1596
      %v1607 = vpack.c.b16 %v1599, %v1598
      %1616 = vmatpush.bf16.msra.mxu0 %v1607
      %1617 = vmatpush.bf16.msra.mxu0 %v1606
      %1618 = vmatpush.bf16.msra.mxu0 %v1605
      %1619 = vmatpush.bf16.msra.mxu0 %v1604
      %1620 = vmatpush.bf16.msra.mxu0 %v1603
      %1621 = vmatpush.bf16.msra.mxu0 %v1602
      %1622 = vmatpush.bf16.msra.mxu0 %v1601
      %1623 = vmatpush.bf16.msra.mxu0 %v1600
      %1624 = vmatmul.bf16.gmra.mxu0 %v1560
      %v1625 = vpop.f32.mrf.mxu0
      %v1626 = vadd.f32 0.0, %v1625
      %v1627 = vpop.f32.mrf.mxu0
      %v1628 = vadd.f32 0.0, %v1627
      %1629 = vmatmul.bf16.gmra.mxu0 %v1561
      %v1630 = vpop.f32.mrf.mxu0
      %v1631 = vadd.f32 0.0, %v1630
      %v1632 = vpop.f32.mrf.mxu0
      %v1633 = vadd.f32 0.0, %v1632
      %1634 = vmatmul.bf16.gmra.mxu0 %v1562
      %v1635 = vpop.f32.mrf.mxu0
      %v1636 = vadd.f32 0.0, %v1635
      %v1637 = vpop.f32.mrf.mxu0
      %v1638 = vadd.f32 0.0, %v1637
      %1639 = vmatmul.bf16.gmra.mxu0 %v1563
      %v1640 = vpop.f32.mrf.mxu0
      %v1641 = vadd.f32 0.0, %v1640
      %v1642 = vpop.f32.mrf.mxu0
      %v1643 = vadd.f32 0.0, %v1642
      %1644 = vdwg.mxu0
      %v1645 = vadd.f32 %v1399, %v1626
      %v1646 = vadd.f32 %v1400, %v1628
      %v1647 = vadd.f32 %v1401, %v1631
      %v1648 = vadd.f32 %v1402, %v1633
      %v1649 = vadd.f32 %v1403, %v1636
      %v1650 = vadd.f32 %v1404, %v1638
      %v1651 = vadd.f32 %v1405, %v1641
      %v1652 = vadd.f32 %v1406, %v1643
      %v1653 = vld [vmem:[%s1272] sm:$0xe]
      %v1654 = vld [vmem:[%s1272 + $0x8] sm:$0xe]
      %v1655 = vld [vmem:[%s1272 + $0x10] sm:$0xe]
      %v1656 = vld [vmem:[%s1272 + $0x18] sm:$0xe]
      %v1657 = vld [vmem:[%s1272 + $0x20] sm:$0xe]
      %v1658 = vld [vmem:[%s1272 + $0x28] sm:$0xe]
      %v1659 = vld [vmem:[%s1272 + $0x30] sm:$0xe]
      %v1660 = vld [vmem:[%s1272 + $0x38] sm:$0xe]
      %v1677 = vrot.slane %v1653, 5
      %v1678 = vrot.slane %v1677, 4
      %v1679 = vrot.slane %v1408, 5
      %v1680 = vsel %vm566, %v1678, %v1679
      %v1681 = vrot.slane %v1654, 5
      %v1682 = vrot.slane %v1681, 4
      %v1683 = vrot.slane %v1410, 5
      %v1684 = vsel %vm566, %v1682, %v1683
      %v1685 = vrot.slane %v1655, 5
      %v1686 = vrot.slane %v1685, 4
      %v1687 = vrot.slane %v1412, 5
      %v1688 = vsel %vm566, %v1686, %v1687
      %v1689 = vrot.slane %v1656, 5
      %v1690 = vrot.slane %v1689, 4
      %v1691 = vrot.slane %v1414, 5
      %v1692 = vsel %vm566, %v1690, %v1691
      %v1693 = vrot.slane %v1657, 5
      %v1694 = vrot.slane %v1693, 4
      %v1695 = vrot.slane %v1416, 5
      %v1696 = vsel %vm566, %v1694, %v1695
      %v1697 = vrot.slane %v1658, 5
      %v1698 = vrot.slane %v1697, 4
      %v1699 = vrot.slane %v1418, 5
      %v1700 = vsel %vm566, %v1698, %v1699
      %v1701 = vrot.slane %v1659, 5
      %v1702 = vrot.slane %v1701, 4
      %v1703 = vrot.slane %v1420, 5
      %v1704 = vsel %vm566, %v1702, %v1703
      %v1705 = vrot.slane %v1660, 5
      %v1706 = vrot.slane %v1705, 4
      %v1707 = vrot.slane %v1422, 5
      %v1708 = vsel %vm566, %v1706, %v1707
      %s1709 = scalar_lea.vmem %s1, 512
      %v1710 = vld [vmem:[%s1709] sm:$0xf]
      %v1711 = vld [vmem:[%s1709 + $0x4] sm:$0xf]
      %v1712 = vld [vmem:[%s1709 + $0x8] sm:$0xf]
      %v1713 = vld [vmem:[%s1709 + $0xc] sm:$0xf]
      %v1714 = vld [vmem:[%s1709 + $0x10] sm:$0xf]
      %v1715 = vld [vmem:[%s1709 + $0x14] sm:$0xf]
      %v1716 = vld [vmem:[%s1709 + $0x18] sm:$0xf]
      %v1717 = vld [vmem:[%s1709 + $0x1c] sm:$0xf]
      %v1718 = vld [vmem:[%s1709 + $0x20] sm:$0xf]
      %v1719 = vld [vmem:[%s1709 + $0x24] sm:$0xf]
      %v1720 = vld [vmem:[%s1709 + $0x28] sm:$0xf]
      %v1721 = vld [vmem:[%s1709 + $0x2c] sm:$0xf]
      %v1722 = vld [vmem:[%s1709 + $0x30] sm:$0xf]
      %v1723 = vld [vmem:[%s1709 + $0x34] sm:$0xf]
      %v1724 = vld [vmem:[%s1709 + $0x38] sm:$0xf]
      %v1725 = vld [vmem:[%s1709 + $0x3c] sm:$0xf]
      %v1726 = vunpack.c.l.b16 %v1680
      %v1727 = vunpack.c.l.b16 %v1684
      %v1728 = vunpack.c.l.b16 %v1688
      %v1729 = vunpack.c.l.b16 %v1692
      %v1730 = vunpack.c.l.b16 %v1696
      %v1731 = vunpack.c.l.b16 %v1700
      %v1732 = vunpack.c.l.b16 %v1704
      %v1733 = vunpack.c.l.b16 %v1708
      %v1734 = vpack.c.b16 %v1727, %v1726
      %v1735 = vpack.c.b16 %v1729, %v1728
      %v1736 = vpack.c.b16 %v1731, %v1730
      %v1737 = vpack.c.b16 %v1733, %v1732
      %v1758 = vunpack.c.l.b16 %v1710
      %v1759 = vunpack.c.l.b16 %v1711
      %v1760 = vunpack.c.l.b16 %v1712
      %v1761 = vunpack.c.l.b16 %v1713
      %v1762 = vunpack.c.l.b16 %v1714
      %v1763 = vunpack.c.l.b16 %v1715
      %v1764 = vunpack.c.l.b16 %v1716
      %v1765 = vunpack.c.l.b16 %v1717
      %v1766 = vunpack.c.l.b16 %v1718
      %v1767 = vunpack.c.l.b16 %v1719
      %v1768 = vunpack.c.l.b16 %v1720
      %v1769 = vunpack.c.l.b16 %v1721
      %v1770 = vunpack.c.l.b16 %v1722
      %v1771 = vunpack.c.l.b16 %v1723
      %v1772 = vunpack.c.l.b16 %v1724
      %v1773 = vunpack.c.l.b16 %v1725
      %v1774 = vpack.c.b16 %v1759, %v1758
      %v1775 = vpack.c.b16 %v1761, %v1760
      %v1776 = vpack.c.b16 %v1763, %v1762
      %v1777 = vpack.c.b16 %v1765, %v1764
      %v1778 = vpack.c.b16 %v1767, %v1766
      %v1779 = vpack.c.b16 %v1769, %v1768
      %v1780 = vpack.c.b16 %v1771, %v1770
      %v1781 = vpack.c.b16 %v1773, %v1772
      %1790 = vmatpush.bf16.msra.mxu0 %v1781
      %1791 = vmatpush.bf16.msra.mxu0 %v1780
      %1792 = vmatpush.bf16.msra.mxu0 %v1779
      %1793 = vmatpush.bf16.msra.mxu0 %v1778
      %1794 = vmatpush.bf16.msra.mxu0 %v1777
      %1795 = vmatpush.bf16.msra.mxu0 %v1776
      %1796 = vmatpush.bf16.msra.mxu0 %v1775
      %1797 = vmatpush.bf16.msra.mxu0 %v1774
      %1798 = vmatmul.bf16.gmra.mxu0 %v1734
      %v1799 = vpop.f32.mrf.mxu0
      %v1800 = vadd.f32 0.0, %v1799
      %v1801 = vpop.f32.mrf.mxu0
      %v1802 = vadd.f32 0.0, %v1801
      %1803 = vmatmul.bf16.gmra.mxu0 %v1735
      %v1804 = vpop.f32.mrf.mxu0
      %v1805 = vadd.f32 0.0, %v1804
      %v1806 = vpop.f32.mrf.mxu0
      %v1807 = vadd.f32 0.0, %v1806
      %1808 = vmatmul.bf16.gmra.mxu0 %v1736
      %v1809 = vpop.f32.mrf.mxu0
      %v1810 = vadd.f32 0.0, %v1809
      %v1811 = vpop.f32.mrf.mxu0
      %v1812 = vadd.f32 0.0, %v1811
      %1813 = vmatmul.bf16.gmra.mxu0 %v1737
      %v1814 = vpop.f32.mrf.mxu0
      %v1815 = vadd.f32 0.0, %v1814
      %v1816 = vpop.f32.mrf.mxu0
      %v1817 = vadd.f32 0.0, %v1816
      %1818 = vdwg.mxu0
      %v1819 = vadd.f32 %v1645, %v1800
      %v1820 = vadd.f32 %v1646, %v1802
      %v1821 = vadd.f32 %v1647, %v1805
      %v1822 = vadd.f32 %v1648, %v1807
      %v1823 = vadd.f32 %v1649, %v1810
      %v1824 = vadd.f32 %v1650, %v1812
      %v1825 = vadd.f32 %v1651, %v1815
      %v1826 = vadd.f32 %v1652, %v1817
      %v1827 = vpack.c.bf16 %v1819, %v1819
      %v1828 = vpack.c.bf16 %v1820, %v1820
      %v1829 = vpack.c.bf16 %v1821, %v1821
      %v1830 = vpack.c.bf16 %v1822, %v1822
      %v1831 = vpack.c.bf16 %v1823, %v1823
      %v1832 = vpack.c.bf16 %v1824, %v1824
      %v1833 = vpack.c.bf16 %v1825, %v1825
      %v1834 = vpack.c.bf16 %v1826, %v1826
      %1835 = vst [vmem:[%s177] sm:$0xf] %v1827
      %1836 = vst [vmem:[%s177 + $0x4] sm:$0xf] %v1828
      %1837 = vst [vmem:[%s177 + $0x8] sm:$0xf] %v1829
      %1838 = vst [vmem:[%s177 + $0xc] sm:$0xf] %v1830
      %1839 = vst [vmem:[%s177 + $0x10] sm:$0xf] %v1831
      %1840 = vst [vmem:[%s177 + $0x14] sm:$0xf] %v1832
      %1841 = vst [vmem:[%s177 + $0x18] sm:$0xf] %v1833
      %1842 = vst [vmem:[%s177 + $0x1c] sm:$0xf] %v1834
      %v1843 = vadd.f32 %v1819, %v1820
      %v1844 = vadd.f32 %v1843, %v1821
      %v1845 = vadd.f32 %v1844, %v1822
      %v1846 = vadd.f32 %v1845, %v1823
      %v1847 = vadd.f32 %v1846, %v1824
      %v1848 = vadd.f32 %v1847, %v1825
      %v1849 = vadd.f32 %v1848, %v1826
      %v1850 = vrot.slane %v1849, 4
      %v1851 = vadd.f32 %v1849, %v1850
      %v1852 = vrot.slane %v1851, 2
      %v1853 = vadd.f32 %v1851, %v1852
      %v1854 = vrot.slane %v1853, 1
      %v1855 = vadd.f32 %v1853, %v1854
      %v1856 = vmul.f32 %v1819, %v1819
      %v1857 = vmul.f32 %v1820, %v1820
      %v1858 = vmul.f32 %v1821, %v1821
      %v1859 = vmul.f32 %v1822, %v1822
      %v1860 = vmul.f32 %v1823, %v1823
      %v1861 = vmul.f32 %v1824, %v1824
      %v1862 = vmul.f32 %v1825, %v1825
      %v1863 = vmul.f32 %v1826, %v1826
      %v1864 = vadd.f32 %v1856, %v1857
      %v1865 = vadd.f32 %v1864, %v1858
      %v1866 = vadd.f32 %v1865, %v1859
      %v1867 = vadd.f32 %v1866, %v1860
      %v1868 = vadd.f32 %v1867, %v1861
      %v1869 = vadd.f32 %v1868, %v1862
      %v1870 = vadd.f32 %v1869, %v1863
      %v1871 = vrot.slane %v1870, 4
      %v1872 = vadd.f32 %v1870, %v1871
      %v1873 = vrot.slane %v1872, 2
      %v1874 = vadd.f32 %v1872, %v1873
      %v1875 = vrot.slane %v1874, 1
      %v1876 = vadd.f32 %v1874, %v1875
      %vm1877 = vcmask 1040384
      %v1878 = vsel %vm1877, %v1855, %v1876
      %1879 = vst [vmem:[%s181] sm:$0x3] %v1878
      %p1880 = scmp.lt.s32.totalorder %s15, 1
      %s1881 = scalar_select %p1880, %s15, 1
      %s1882 = smul.addr %s1881, 8
      %s1883 = smul.addr %s1882, 4
      %s1884 = scalar_lea.vmem %s2, %s1883
      %p1885 = scmp.lt.s32.totalorder %s15, 1
      %s1886 = scalar_select %p1885, %s15, 1
      %s1887 = smul.addr %s1886, 2
      %s1888 = scalar_lea.vmem %s3, %s1887
      // Predicated region
      $region29: #{cspx_forward.26} parent=27 // pred_check
        %p1889 = pneg %p80
      $region30: #{cspx_forward.26} parent=27 // pred_check_branch
        %1891 = sbr.rel (%p1889) target = $region32
      $region31: #{cspx_forward.26} parent=27 // pred_region
        _
      $region32: #{cspx_forward.26} parent=27 // pred_fallthru
        _
      // Predicated region
      $region33: #{cspx_forward.26} parent=27 // pred_check
        %p1892 = pneg %p106
      $region34: #{cspx_forward.26} parent=27 // pred_check_branch
        %1894 = sbr.rel (%p1892) target = $region36
      $region35: #{cspx_forward.26} parent=27 // pred_region
        _
      $region36: #{cspx_forward.26} parent=27 // pred_fallthru
        _
    $region28: #{cspx_forward.26} parent=5 // pred_fallthru
      _
    %p1895 = scmp.le.s32.totalorder 2, %s10
    // Predicated region
    $region37: #{cspx_forward.26} parent=5 // pred_check
      %p1896 = pneg %p1895
    $region38: #{cspx_forward.26} parent=5 // pred_check_branch
      %1898 = sbr.rel (%p1896) target = $region40
    $region39: #{cspx_forward.26} parent=5 // pred_region
      %s1899 = ssub.s32 %s10, 2
      // Predicated region
      $region41: #{cspx_forward.26} parent=39 // pred_check
        %p1900 = pneg %p86
      $region42: #{cspx_forward.26} parent=39 // pred_check_branch
        %1902 = sbr.rel (%p1900) target = $region44
      $region43: #{cspx_forward.26} parent=39 // pred_region
        %p1903 = scmp.lt.s32.totalorder %s16, 1
        %s1904 = scalar_select %p1903, %s16, 1
        %s1905 = smul.addr %s1904, 8
        %s1906 = smul.addr %s1905, 4
        %s1907 = scalar_lea.vmem %s2, %s1906
      $region44: #{cspx_forward.26} parent=39 // pred_fallthru
        _
      // Predicated region
      $region45: #{cspx_forward.26} parent=39 // pred_check
        %p1908 = pneg %p112
      $region46: #{cspx_forward.26} parent=39 // pred_check_branch
        %1910 = sbr.rel (%p1908) target = $region48
      $region47: #{cspx_forward.26} parent=39 // pred_region
        %p1911 = scmp.lt.s32.totalorder %s16, 1
        %s1912 = scalar_select %p1911, %s16, 1
        %s1913 = smul.addr %s1912, 2
        %s1914 = scalar_lea.vmem %s3, %s1913
      $region48: #{cspx_forward.26} parent=39 // pred_fallthru
        _
    $region40: #{cspx_forward.26} parent=5 // pred_fallthru
      _
  $region6: #{cspx_forward.26} parent=0 // loop_footer
    %s14 = sadd.s32 1, %s10
  $region7: #{cspx_forward.26} parent=0 // loop_footer_branch
    %9 = sbr.rel target = $region3
  $region8: #{cspx_forward.26} parent=0 // loop_exit
    _

</llo_original>
